<compile_context>
chip_gen: v7x
topology: tpu7x:2x2x1
jax: 0.10.0
libtpu: 0.0.40
codegen_flags: <defaults>
</compile_context>

<pallas_src>
import functools

import jax
import jax.numpy as jnp
import numpy as np
from jax.experimental import pallas as pl
from jax.experimental.pallas import tpu as pltpu


# ---------------------------------------------------------------------------
# Phase 1: sequential GRU recurrence (time-chunked, hidden state in VMEM scratch)
# ---------------------------------------------------------------------------
def _gru_recurrence_kernel(emb_ref, wih_ref, whh_ref, bgi_ref, bhhn_ref, h0_ref,
                           h_out_ref, h_scr, gi_scr, *, tc, bsz, dh):
    @pl.when(pl.program_id(0) == 0)
    def _():
        h_scr[...] = jnp.broadcast_to(h0_ref[...], h_scr.shape)

    # Hoisted, time-parallel input projection for the whole chunk: one big MXU matmul
    # (tc*B, E) @ (E, 3*DH) instead of tc tiny (B, E) matmuls inside the serial chain.
    # b_ih (+ b_hh for the r,z gates) is folded in once per chunk.
    gi_scr[...] = (jnp.dot(emb_ref[...], wih_ref[...],
                           preferred_element_type=jnp.float32) + bgi_ref[...])

    whh = whh_ref[...]          # (DH, 3*DH) bf16, loop-invariant
    bhhn = bhhn_ref[...]        # (1, DH)    f32, loop-invariant (b_hh for the n gate)

    def step(i, h_prev):
        off = pl.multiple_of(i * bsz, bsz)
        gi = gi_scr[pl.ds(off, bsz), :]                              # (B, 3*DH) f32
        gh = jnp.dot(h_prev.astype(jnp.bfloat16), whh,
                     preferred_element_type=jnp.float32)             # (B, 3*DH) f32
        # PyTorch nn.GRUCell semantics, gate order r, z, n.
        rz = jax.nn.sigmoid(gi[:, :2 * dh] + gh[:, :2 * dh])
        r = rz[:, :dh]
        z = rz[:, dh:]
        n = jnp.tanh(gi[:, 2 * dh:] + r * (gh[:, 2 * dh:] + bhhn))
        h_new = (1.0 - z) * n + z * h_prev                           # f32
        h_out_ref[pl.ds(off, bsz), :] = h_new.astype(h_out_ref.dtype)  # bf16 writeback
        return h_new

    h_scr[...] = jax.lax.fori_loop(0, tc, step, h_scr[...], unroll=True)


# ---------------------------------------------------------------------------
# Phase 2: V-tiled vocab projection + online-logsumexp masked cross-entropy
# ---------------------------------------------------------------------------
def _proj_ce_kernel(h_ref, tgt_ref, valid_ref, wout_ref, bout_ref,
                    w_ref, stats_ref, m_scr, l_scr, tl_scr, *, tv):
    v_idx = pl.program_id(1)

    @pl.when(v_idx == 0)
    def _():
        m_scr[...] = jnp.full_like(m_scr, -jnp.inf)
        l_scr[...] = jnp.zeros_like(l_scr)
        tl_scr[...] = jnp.zeros_like(tl_scr)

    # (tc*B, DH) bf16 @ (DH, tv) bf16 -> f32 logits tile.
    logits = (jnp.dot(h_ref[...], wout_ref[...],
                      preferred_element_type=jnp.float32) + bout_ref[...])
    w_ref[...] = logits.astype(w_ref.dtype)                          # gen.w tile (bf16)

    # Online (flash-style) logsumexp across V tiles.
    m_prev = m_scr[...]
    m_new = jnp.maximum(m_prev, jnp.max(logits, axis=-1, keepdims=True))
    alpha = jnp.exp(m_prev - m_new)
    l_scr[...] = alpha * l_scr[...] + jnp.sum(jnp.exp(logits - m_new),
                                              axis=-1, keepdims=True)
    m_scr[...] = m_new

    # Target-logit gather for targets that fall in this V tile (no dense one-hot).
    col = jax.lax.broadcasted_iota(jnp.int32, (1, tv), 1) + v_idx * tv
    tl_scr[...] += jnp.sum(jnp.where(col == tgt_ref[...], logits, 0.0),
                           axis=-1, keepdims=True)

    @pl.when(v_idx == pl.num_programs(1) - 1)
    def _():
        valid = valid_ref[...]                                       # (tc*B, 1) f32
        lse = m_scr[...] + jnp.log(l_scr[...])
        # where-guard (not valid*x) so garbage pad rows can never inject NaN via 0*NaN.
        contrib = jnp.where(valid > 0.0, lse - tl_scr[...], 0.0)
        lane = jax.lax.broadcasted_iota(jnp.int32, (1, 128), 1)
        # One lane-dense (1,128) block: partial CE sum in lane 0, valid count in lane 1.
        stats_ref[...] = jnp.where(lane == 0, jnp.sum(contrib),
                                   jnp.where(lane == 1, jnp.sum(valid), 0.0))


def gen_network_forward(embedding, sent, sent_length, params, unk_id, *, tc=16, tv=None):
    """Pallas implementation of GenNetwork.forward (teacherForcing + masked CE loss)."""
    S, B, E = embedding.shape
    T = S - 1
    DH = params['w_hh'].shape[0]
    V = params['w_out'].shape[1]
    assert DH % 128 == 0, "gate slices assume DH is lane-aligned (multiple of 128)"

    if tv is None:
        tv = 128 if V % 128 == 0 else V
    assert V % tv == 0
    nv = V // tv

    nblk = pl.cdiv(T, tc)
    T_pad = nblk * tc
    pad = T_pad - T

    emb = embedding[:T].astype(jnp.bfloat16)                         # (T, B, E)
    targets = sent[1:].astype(jnp.int32)                             # (T, B)
    if pad:
        emb = jnp.pad(emb, ((0, pad), (0, 0), (0, 0)))
        targets = jnp.pad(targets, ((0, pad), (0, 0)))
    # Valid mask built directly at T_pad: tail rows are automatically invalid because
    # sent_length - 1 <= T.
    valid = ((jnp.arange(T_pad)[:, None] < (sent_length[None, :] - 1))
             & (targets != unk_id)).astype(jnp.float32)              # (T_pad, B)

    # Flatten time/batch to lane-dense 2-D so the kernels never reshape.
    emb2 = emb.reshape(T_pad * B, E)                                 # bf16
    targets2 = targets.reshape(T_pad * B, 1)                         # int32
    valid2 = valid.reshape(T_pad * B, 1)                             # f32

    # Weight prep: bf16 MXU operands, f32 biases; fold b_ih + b_hh(r,z) into one bias row.
    w_ih = params['w_ih'].astype(jnp.bfloat16)
    w_hh = params['w_hh'].astype(jnp.bfloat16)
    b_gi = (params['b_ih'] + jnp.concatenate(
        [params['b_hh'][:, :2 * DH], jnp.zeros((1, DH), params['b_hh'].dtype)], axis=1)
            ).astype(jnp.float32)                                    # (1, 3*DH)
    b_hh_n = params['b_hh'][:, 2 * DH:].astype(jnp.float32)          # (1, DH)
    w_out = params['w_out'].astype(jnp.bfloat16)
    b_out = params['b_out'].astype(jnp.float32)
    h0 = params['h0'].astype(jnp.float32)

    vmem_budget = 64 * 1024 * 1024   # safe on v5e/v6e (128 MiB) and v7x (64 MiB)

    # ---- Phase 1: sequential recurrence (hidden state carried in VMEM scratch) ----
    h_all = pl.pallas_call(
        functools.partial(_gru_recurrence_kernel, tc=tc, bsz=B, dh=DH),
        grid_spec=pltpu.PrefetchScalarGridSpec(
            num_scalar_prefetch=0,
            grid=(nblk,),
            in_specs=[
                pl.BlockSpec((tc * B, E), lambda t: (t, 0)),         # embedding chunk (bf16)
                pl.BlockSpec((E, 3 * DH), lambda t: (0, 0)),         # W_ih (bf16)
                pl.BlockSpec((DH, 3 * DH), lambda t: (0, 0)),        # W_hh (bf16)
                pl.BlockSpec((1, 3 * DH), lambda t: (0, 0)),         # folded input bias
                pl.BlockSpec((1, DH), lambda t: (0, 0)),             # b_hh (n gate)
                pl.BlockSpec((1, DH), lambda t: (0, 0)),             # learned h0
            ],
            out_specs=pl.BlockSpec((tc * B, DH), lambda t: (t, 0)),
            scratch_shapes=[
                pltpu.VMEM((B, DH), jnp.float32),                    # carried hidden state
                pltpu.VMEM((tc * B, 3 * DH), jnp.float32),           # hoisted input gates
            ],
        ),
        out_shape=jax.ShapeDtypeStruct((T_pad * B, DH), jnp.bfloat16),
        compiler_params=pltpu.CompilerParams(
            dimension_semantics=("arbitrary",),
            vmem_limit_bytes=vmem_budget),
    )(emb2, w_ih, w_hh, b_gi, b_hh_n, h0)

    # ---- Phase 2: V-tiled projection + online masked-CE partial sums ----
    w_flat, stats = pl.pallas_call(
        functools.partial(_proj_ce_kernel, tv=tv),
        grid_spec=pltpu.PrefetchScalarGridSpec(
            num_scalar_prefetch=0,
            grid=(nblk, nv),
            in_specs=[
                pl.BlockSpec((tc * B, DH), lambda t, v: (t, 0)),     # hidden states (bf16)
                pl.BlockSpec((tc * B, 1), lambda t, v: (t, 0)),      # int32 targets
                pl.BlockSpec((tc * B, 1), lambda t, v: (t, 0)),      # valid mask
                pl.BlockSpec((DH, tv), lambda t, v: (0, v)),         # W_out tile (bf16)
                pl.BlockSpec((1, tv), lambda t, v: (0, v)),          # b_out tile
            ],
            out_specs=[
                pl.BlockSpec((tc * B, tv), lambda t, v: (t, v)),     # gen.w tile (bf16)
                pl.BlockSpec((1, 128), lambda t, v: (t, 0)),         # [psum, pcnt, 0...]
            ],
            scratch_shapes=[
                pltpu.VMEM((tc * B, 1), jnp.float32),                # running max
                pltpu.VMEM((tc * B, 1), jnp.float32),                # running sum-exp
                pltpu.VMEM((tc * B, 1), jnp.float32),                # target-logit accum
            ],
        ),
        out_shape=(
            jax.ShapeDtypeStruct((T_pad * B, V), jnp.bfloat16),
            jax.ShapeDtypeStruct((nblk, 128), jnp.float32),
        ),
        compiler_params=pltpu.CompilerParams(
            dimension_semantics=("parallel", "arbitrary"),
            vmem_limit_bytes=vmem_budget),
    )(h_all, targets2, valid2, w_out, b_out)

    w = w_flat.reshape(T_pad, B, V)[:T]                              # gen.w, bf16
    total = jnp.sum(stats[:, 0])
    cnt = jnp.sum(stats[:, 1])
    loss = total / jnp.maximum(cnt, 1.0)     # guard against all-masked batch
    ppl = jnp.exp(loss)
    return w, loss, ppl


def reference_forward(embedding, sent, sent_length, params, unk_id):
    """Pure-JAX f32 reference of the same forward pass (for correctness check)."""
    S, B, E = embedding.shape
    T = S - 1
    DH = params['w_hh'].shape[0]

    h0 = jnp.broadcast_to(params['h0'], (B, DH))

    def step(h, x):
        gi = x @ params['w_ih'] + params['b_ih']
        gh = h @ params['w_hh'] + params['b_hh']
        gi_r, gi_z, gi_n = jnp.split(gi, 3, axis=-1)
        gh_r, gh_z, gh_n = jnp.split(gh, 3, axis=-1)
        r = jax.nn.sigmoid(gi_r + gh_r)
        z = jax.nn.sigmoid(gi_z + gh_z)
        n = jnp.tanh(gi_n + r * gh_n)
        h_new = (1.0 - z) * n + z * h
        return h_new, h_new

    _, hs = jax.lax.scan(step, h0, embedding[:T])
    w = hs @ params['w_out'] + params['b_out']

    targets = sent[1:]
    valid = (jnp.arange(T)[:, None] < (sent_length[None, :] - 1)) & (targets != unk_id)
    logp = jax.nn.log_softmax(w, axis=-1)
    nll = -jnp.take_along_axis(logp, targets[..., None], axis=-1)[..., 0]
    mask = valid.astype(jnp.float32)
    loss = jnp.sum(nll * mask) / jnp.sum(mask)
    return w, loss, jnp.exp(loss)


def init_params(key, emb_size, dh_size, vocab_size):
    ks = jax.random.split(key, 7)
    scale = 0.1
    return {
        'w_ih': scale * jax.random.normal(ks[0], (emb_size, 3 * dh_size), jnp.float32),
        'w_hh': scale * jax.random.normal(ks[1], (dh_size, 3 * dh_size), jnp.float32),
        'b_ih': scale * jax.random.normal(ks[2], (1, 3 * dh_size), jnp.float32),
        'b_hh': scale * jax.random.normal(ks[3], (1, 3 * dh_size), jnp.float32),
        'w_out': scale * jax.random.normal(ks[4], (dh_size, vocab_size), jnp.float32),
        'b_out': scale * jax.random.normal(ks[5], (1, vocab_size), jnp.float32),
        'h0': scale * jax.random.normal(ks[6], (1, dh_size), jnp.float32),
    }


if __name__ == "__main__":
    # Small but MXU-friendly shapes: tc*B = 128 fills the MXU M dimension, V/tv = 2
    # exercises the V-tiled online logsumexp.
    B = 8          # batch_size
    E = 32         # embedding_size
    DH = 128       # dh_size (lane-aligned gate slices)
    V = 256        # vocab_size (2 vocab tiles of 128)
    S = 33         # seq_len  -> T = 32 teacher-forcing steps (2 time chunks of tc=16)
    UNK_ID = 1

    key = jax.random.PRNGKey(0)
    k_emb, k_sent, k_len, k_par = jax.random.split(key, 4)

    embedding = jax.random.normal(k_emb, (S, B, E), jnp.float32)        # incoming.sent.embedding
    sent = jax.random.randint(k_sent, (S, B), 0, V, jnp.int32)          # incoming.data.sent
    sent_length = jax.random.randint(k_len, (B,), 3, S + 1, jnp.int32)  # incoming.data.sent_length

    params = init_params(k_par, E, DH, V)

    w, loss, ppl = gen_network_forward(embedding, sent, sent_length, params, UNK_ID, tc=16)
    jax.block_until_ready((w, loss, ppl))

    w_ref, loss_ref, ppl_ref = reference_forward(embedding, sent, sent_length, params, UNK_ID)

    # Tolerances account for bf16 MXU operands / bf16 h+logits storage vs the f32 reference.
    w_f32 = np.asarray(w.astype(jnp.float32))
    assert np.allclose(w_f32, np.asarray(w_ref), rtol=5e-2, atol=5e-2), "logits mismatch"
    assert np.allclose(float(loss), float(loss_ref), rtol=2e-2, atol=2e-2), "loss mismatch"
    assert np.allclose(float(ppl), float(ppl_ref), rtol=3e-2, atol=2e-1), "perplexity mismatch"

    print("KERNEL_OK")
</pallas_src>

<mosaic_0001>
module attributes {stable_mosaic.version = 11 : i64} {
  func.func @_gru_recurrence_kernel(%arg0: i32, %arg1: memref<128x32xbf16, #tpu.memory_space<vmem>>, %arg2: memref<32x384xbf16, #tpu.memory_space<vmem>>, %arg3: memref<128x384xbf16, #tpu.memory_space<vmem>>, %arg4: memref<1x384xf32, #tpu.memory_space<vmem>>, %arg5: memref<1x128xf32, #tpu.memory_space<vmem>>, %arg6: memref<1x128xf32, #tpu.memory_space<vmem>>, %arg7: memref<128x128xbf16, #tpu.memory_space<vmem>>, %arg8: memref<8x128xf32, #tpu.memory_space<vmem>>, %arg9: memref<128x384xf32, #tpu.memory_space<vmem>>) attributes {dimension_semantics = [#tpu.dimension_semantics<arbitrary>], iteration_bounds = array<i64: 2>, scalar_prefetch = 0 : i64, scratch_operands = 2 : i64, tpu.core_type = #tpu.core_type<tc>, window_params = [{transform_indices = @transform_0, window_bounds = array<i64: 128, 32>}, {pipeline_mode = #tpu.pipeline_mode<synchronous>, transform_indices = @transform_1, window_bounds = array<i64: 32, 384>}, {pipeline_mode = #tpu.pipeline_mode<synchronous>, transform_indices = @transform_2, window_bounds = array<i64: 128, 384>}, {pipeline_mode = #tpu.pipeline_mode<synchronous>, transform_indices = @transform_3, window_bounds = array<i64: 1, 384>}, {pipeline_mode = #tpu.pipeline_mode<synchronous>, transform_indices = @transform_4, window_bounds = array<i64: 1, 128>}, {pipeline_mode = #tpu.pipeline_mode<synchronous>, transform_indices = @transform_5, window_bounds = array<i64: 1, 128>}, {transform_indices = @transform_6, window_bounds = array<i64: 128, 128>}]} {
    %c0_i32 = arith.constant 0 : i32
    %0 = arith.cmpi eq, %arg0, %c0_i32 : i32
    %1 = arith.extui %0 : i1 to i32
    %c0_i32_0 = arith.constant 0 : i32
    %2 = arith.cmpi ne, %1, %c0_i32_0 : i32
    scf.if %2 {
      %c0_113 = arith.constant 0 : index
      %c0_114 = arith.constant 0 : index
      %510 = vector.load %arg6[%c0_113, %c0_114] : memref<1x128xf32, #tpu.memory_space<vmem>>, vector<1x128xf32>
      %511 = vector.shape_cast %510 : vector<1x128xf32> to vector<1x128xf32>
      %512 = vector.broadcast %511 : vector<1x128xf32> to vector<8x128xf32>
      %c0_115 = arith.constant 0 : index
      %c0_116 = arith.constant 0 : index
      %513 = vector.load %arg8[%c0_115, %c0_116] : memref<8x128xf32, #tpu.memory_space<vmem>>, vector<8x128xf32>
      tpu.vector_store %arg8[%c0_115, %c0_116], %512 {strides = array<i32>} : memref<8x128xf32, #tpu.memory_space<vmem>>, vector<8x128xf32>,
    } else {
    }
    %c0 = arith.constant 0 : index
    %c0_1 = arith.constant 0 : index
    %3 = vector.load %arg1[%c0, %c0_1] : memref<128x32xbf16, #tpu.memory_space<vmem>>, vector<128x32xbf16>
    %c0_2 = arith.constant 0 : index
    %c0_3 = arith.constant 0 : index
    %4 = vector.load %arg2[%c0_2, %c0_3] : memref<32x384xbf16, #tpu.memory_space<vmem>>, vector<32x384xbf16>
    %cst = arith.constant dense<0.000000e+00> : vector<128x384xf32>
    %5 = tpu.matmul %3, %4, %cst {dimension_numbers = #tpu.dot_dimension_numbers<[1], [0], [0], [1], [0, 0, 1, 1], [], []>} : vector<128x32xbf16>, vector<32x384xbf16>, vector<128x384xf32> -> vector<128x384xf32>
    %c0_4 = arith.constant 0 : index
    %c0_5 = arith.constant 0 : index
    %6 = vector.load %arg4[%c0_4, %c0_5] : memref<1x384xf32, #tpu.memory_space<vmem>>, vector<1x384xf32>
    %7 = vector.broadcast %6 : vector<1x384xf32> to vector<128x384xf32>
    %8 = arith.addf %5, %7 : vector<128x384xf32>
    %c0_6 = arith.constant 0 : index
    %c0_7 = arith.constant 0 : index
    %9 = vector.load %arg9[%c0_6, %c0_7] : memref<128x384xf32, #tpu.memory_space<vmem>>, vector<128x384xf32>
    tpu.vector_store %arg9[%c0_6, %c0_7], %8 {strides = array<i32>} : memref<128x384xf32, #tpu.memory_space<vmem>>, vector<128x384xf32>,
    %c0_8 = arith.constant 0 : index
    %c0_9 = arith.constant 0 : index
    %10 = vector.load %arg3[%c0_8, %c0_9] : memref<128x384xbf16, #tpu.memory_space<vmem>>, vector<128x384xbf16>
    %c0_10 = arith.constant 0 : index
    %c0_11 = arith.constant 0 : index
    %11 = vector.load %arg5[%c0_10, %c0_11] : memref<1x128xf32, #tpu.memory_space<vmem>>, vector<1x128xf32>
    %c0_12 = arith.constant 0 : index
    %c0_13 = arith.constant 0 : index
    %12 = vector.load %arg8[%c0_12, %c0_13] : memref<8x128xf32, #tpu.memory_space<vmem>>, vector<8x128xf32>
    %c0_i32_14 = arith.constant 0 : i32
    %c8_i32 = arith.constant 8 : i32
    %13 = arith.muli %c0_i32_14, %c8_i32 : i32
    %14 = tpu.assume_multiple %13, 8 : i32
    %15 = arith.index_cast %14 : i32 to index
    %c0_15 = arith.constant 0 : index
    %16 = vector.load %arg9[%15, %c0_15] : memref<128x384xf32, #tpu.memory_space<vmem>>, vector<8x384xf32>
    %17 = arith.truncf %12 : vector<8x128xf32> to vector<8x128xbf16>
    %cst_16 = arith.constant dense<0.000000e+00> : vector<8x384xf32>
    %18 = tpu.matmul %17, %10, %cst_16 {dimension_numbers = #tpu.dot_dimension_numbers<[1], [0], [0], [1], [0, 0, 1, 1], [], []>} : vector<8x128xbf16>, vector<128x384xbf16>, vector<8x384xf32> -> vector<8x384xf32>
    %19 = vector.extract_strided_slice %16 {offsets = [0, 0], sizes = [8, 256], strides = [1, 1]} : vector<8x384xf32> to vector<8x256xf32>
    %20 = vector.extract_strided_slice %18 {offsets = [0, 0], sizes = [8, 256], strides = [1, 1]} : vector<8x384xf32> to vector<8x256xf32>
    %21 = arith.addf %19, %20 : vector<8x256xf32>
    %22 = arith.negf %21 : vector<8x256xf32>
    %23 = math.exp %22 : vector<8x256xf32>
    %cst_17 = arith.constant 1.000000e+00 : f32
    %24 = vector.broadcast %cst_17 : f32 to vector<8x256xf32>
    %25 = arith.addf %24, %23 : vector<8x256xf32>
    %26 = arith.divf %24, %25 : vector<8x256xf32>
    %27 = vector.extract_strided_slice %26 {offsets = [0, 0], sizes = [8, 128], strides = [1, 1]} : vector<8x256xf32> to vector<8x128xf32>
    %28 = vector.extract_strided_slice %26 {offsets = [0, 128], sizes = [8, 128], strides = [1, 1]} : vector<8x256xf32> to vector<8x128xf32>
    %29 = vector.extract_strided_slice %16 {offsets = [0, 256], sizes = [8, 128], strides = [1, 1]} : vector<8x384xf32> to vector<8x128xf32>
    %30 = vector.extract_strided_slice %18 {offsets = [0, 256], sizes = [8, 128], strides = [1, 1]} : vector<8x384xf32> to vector<8x128xf32>
    %31 = vector.broadcast %11 : vector<1x128xf32> to vector<8x128xf32>
    %32 = arith.addf %30, %31 : vector<8x128xf32>
    %33 = arith.mulf %27, %32 : vector<8x128xf32>
    %34 = arith.addf %29, %33 : vector<8x128xf32>
    %35 = math.tanh %34 : vector<8x128xf32>
    %cst_18 = arith.constant 1.000000e+00 : f32
    %36 = vector.broadcast %cst_18 : f32 to vector<8x128xf32>
    %37 = arith.subf %36, %28 : vector<8x128xf32>
    %38 = arith.mulf %37, %35 : vector<8x128xf32>
    %39 = arith.mulf %28, %12 : vector<8x128xf32>
    %40 = arith.addf %38, %39 : vector<8x128xf32>
    %41 = arith.truncf %40 : vector<8x128xf32> to vector<8x128xbf16>
    %42 = arith.index_cast %14 : i32 to index
    %c0_19 = arith.constant 0 : index
    %43 = vector.load %arg7[%42, %c0_19] : memref<128x128xbf16, #tpu.memory_space<vmem>>, vector<8x128xbf16>
    tpu.vector_store %arg7[%42, %c0_19], %41 {strides = array<i32>} : memref<128x128xbf16, #tpu.memory_space<vmem>>, vector<8x128xbf16>,
    %c1_i32 = arith.constant 1 : i32
    %c8_i32_20 = arith.constant 8 : i32
    %44 = arith.muli %c1_i32, %c8_i32_20 : i32
    %45 = tpu.assume_multiple %44, 8 : i32
    %46 = arith.index_cast %45 : i32 to index
    %c0_21 = arith.constant 0 : index
    %47 = vector.load %arg9[%46, %c0_21] : memref<128x384xf32, #tpu.memory_space<vmem>>, vector<8x384xf32>
    %48 = arith.truncf %40 : vector<8x128xf32> to vector<8x128xbf16>
    %cst_22 = arith.constant dense<0.000000e+00> : vector<8x384xf32>
    %49 = tpu.matmul %48, %10, %cst_22 {dimension_numbers = #tpu.dot_dimension_numbers<[1], [0], [0], [1], [0, 0, 1, 1], [], []>} : vector<8x128xbf16>, vector<128x384xbf16>, vector<8x384xf32> -> vector<8x384xf32>
    %50 = vector.extract_strided_slice %47 {offsets = [0, 0], sizes = [8, 256], strides = [1, 1]} : vector<8x384xf32> to vector<8x256xf32>
    %51 = vector.extract_strided_slice %49 {offsets = [0, 0], sizes = [8, 256], strides = [1, 1]} : vector<8x384xf32> to vector<8x256xf32>
    %52 = arith.addf %50, %51 : vector<8x256xf32>
    %53 = arith.negf %52 : vector<8x256xf32>
    %54 = math.exp %53 : vector<8x256xf32>
    %cst_23 = arith.constant 1.000000e+00 : f32
    %55 = vector.broadcast %cst_23 : f32 to vector<8x256xf32>
    %56 = arith.addf %55, %54 : vector<8x256xf32>
    %57 = arith.divf %55, %56 : vector<8x256xf32>
    %58 = vector.extract_strided_slice %57 {offsets = [0, 0], sizes = [8, 128], strides = [1, 1]} : vector<8x256xf32> to vector<8x128xf32>
    %59 = vector.extract_strided_slice %57 {offsets = [0, 128], sizes = [8, 128], strides = [1, 1]} : vector<8x256xf32> to vector<8x128xf32>
    %60 = vector.extract_strided_slice %47 {offsets = [0, 256], sizes = [8, 128], strides = [1, 1]} : vector<8x384xf32> to vector<8x128xf32>
    %61 = vector.extract_strided_slice %49 {offsets = [0, 256], sizes = [8, 128], strides = [1, 1]} : vector<8x384xf32> to vector<8x128xf32>
    %62 = vector.broadcast %11 : vector<1x128xf32> to vector<8x128xf32>
    %63 = arith.addf %61, %62 : vector<8x128xf32>
    %64 = arith.mulf %58, %63 : vector<8x128xf32>
    %65 = arith.addf %60, %64 : vector<8x128xf32>
    %66 = math.tanh %65 : vector<8x128xf32>
    %cst_24 = arith.constant 1.000000e+00 : f32
    %67 = vector.broadcast %cst_24 : f32 to vector<8x128xf32>
    %68 = arith.subf %67, %59 : vector<8x128xf32>
    %69 = arith.mulf %68, %66 : vector<8x128xf32>
    %70 = arith.mulf %59, %40 : vector<8x128xf32>
    %71 = arith.addf %69, %70 : vector<8x128xf32>
    %72 = arith.truncf %71 : vector<8x128xf32> to vector<8x128xbf16>
    %73 = arith.index_cast %45 : i32 to index
    %c0_25 = arith.constant 0 : index
    %74 = vector.load %arg7[%73, %c0_25] : memref<128x128xbf16, #tpu.memory_space<vmem>>, vector<8x128xbf16>
    tpu.vector_store %arg7[%73, %c0_25], %72 {strides = array<i32>} : memref<128x128xbf16, #tpu.memory_space<vmem>>, vector<8x128xbf16>,
    %c2_i32 = arith.constant 2 : i32
    %c8_i32_26 = arith.constant 8 : i32
    %75 = arith.muli %c2_i32, %c8_i32_26 : i32
    %76 = tpu.assume_multiple %75, 8 : i32
    %77 = arith.index_cast %76 : i32 to index
    %c0_27 = arith.constant 0 : index
    %78 = vector.load %arg9[%77, %c0_27] : memref<128x384xf32, #tpu.memory_space<vmem>>, vector<8x384xf32>
    %79 = arith.truncf %71 : vector<8x128xf32> to vector<8x128xbf16>
    %cst_28 = arith.constant dense<0.000000e+00> : vector<8x384xf32>
    %80 = tpu.matmul %79, %10, %cst_28 {dimension_numbers = #tpu.dot_dimension_numbers<[1], [0], [0], [1], [0, 0, 1, 1], [], []>} : vector<8x128xbf16>, vector<128x384xbf16>, vector<8x384xf32> -> vector<8x384xf32>
    %81 = vector.extract_strided_slice %78 {offsets = [0, 0], sizes = [8, 256], strides = [1, 1]} : vector<8x384xf32> to vector<8x256xf32>
    %82 = vector.extract_strided_slice %80 {offsets = [0, 0], sizes = [8, 256], strides = [1, 1]} : vector<8x384xf32> to vector<8x256xf32>
    %83 = arith.addf %81, %82 : vector<8x256xf32>
    %84 = arith.negf %83 : vector<8x256xf32>
    %85 = math.exp %84 : vector<8x256xf32>
    %cst_29 = arith.constant 1.000000e+00 : f32
    %86 = vector.broadcast %cst_29 : f32 to vector<8x256xf32>
    %87 = arith.addf %86, %85 : vector<8x256xf32>
    %88 = arith.divf %86, %87 : vector<8x256xf32>
    %89 = vector.extract_strided_slice %88 {offsets = [0, 0], sizes = [8, 128], strides = [1, 1]} : vector<8x256xf32> to vector<8x128xf32>
    %90 = vector.extract_strided_slice %88 {offsets = [0, 128], sizes = [8, 128], strides = [1, 1]} : vector<8x256xf32> to vector<8x128xf32>
    %91 = vector.extract_strided_slice %78 {offsets = [0, 256], sizes = [8, 128], strides = [1, 1]} : vector<8x384xf32> to vector<8x128xf32>
    %92 = vector.extract_strided_slice %80 {offsets = [0, 256], sizes = [8, 128], strides = [1, 1]} : vector<8x384xf32> to vector<8x128xf32>
    %93 = vector.broadcast %11 : vector<1x128xf32> to vector<8x128xf32>
    %94 = arith.addf %92, %93 : vector<8x128xf32>
    %95 = arith.mulf %89, %94 : vector<8x128xf32>
    %96 = arith.addf %91, %95 : vector<8x128xf32>
    %97 = math.tanh %96 : vector<8x128xf32>
    %cst_30 = arith.constant 1.000000e+00 : f32
    %98 = vector.broadcast %cst_30 : f32 to vector<8x128xf32>
    %99 = arith.subf %98, %90 : vector<8x128xf32>
    %100 = arith.mulf %99, %97 : vector<8x128xf32>
    %101 = arith.mulf %90, %71 : vector<8x128xf32>
    %102 = arith.addf %100, %101 : vector<8x128xf32>
    %103 = arith.truncf %102 : vector<8x128xf32> to vector<8x128xbf16>
    %104 = arith.index_cast %76 : i32 to index
    %c0_31 = arith.constant 0 : index
    %105 = vector.load %arg7[%104, %c0_31] : memref<128x128xbf16, #tpu.memory_space<vmem>>, vector<8x128xbf16>
    tpu.vector_store %arg7[%104, %c0_31], %103 {strides = array<i32>} : memref<128x128xbf16, #tpu.memory_space<vmem>>, vector<8x128xbf16>,
    %c3_i32 = arith.constant 3 : i32
    %c8_i32_32 = arith.constant 8 : i32
    %106 = arith.muli %c3_i32, %c8_i32_32 : i32
    %107 = tpu.assume_multiple %106, 8 : i32
    %108 = arith.index_cast %107 : i32 to index
    %c0_33 = arith.constant 0 : index
    %109 = vector.load %arg9[%108, %c0_33] : memref<128x384xf32, #tpu.memory_space<vmem>>, vector<8x384xf32>
    %110 = arith.truncf %102 : vector<8x128xf32> to vector<8x128xbf16>
    %cst_34 = arith.constant dense<0.000000e+00> : vector<8x384xf32>
    %111 = tpu.matmul %110, %10, %cst_34 {dimension_numbers = #tpu.dot_dimension_numbers<[1], [0], [0], [1], [0, 0, 1, 1], [], []>} : vector<8x128xbf16>, vector<128x384xbf16>, vector<8x384xf32> -> vector<8x384xf32>
    %112 = vector.extract_strided_slice %109 {offsets = [0, 0], sizes = [8, 256], strides = [1, 1]} : vector<8x384xf32> to vector<8x256xf32>
    %113 = vector.extract_strided_slice %111 {offsets = [0, 0], sizes = [8, 256], strides = [1, 1]} : vector<8x384xf32> to vector<8x256xf32>
    %114 = arith.addf %112, %113 : vector<8x256xf32>
    %115 = arith.negf %114 : vector<8x256xf32>
    %116 = math.exp %115 : vector<8x256xf32>
    %cst_35 = arith.constant 1.000000e+00 : f32
    %117 = vector.broadcast %cst_35 : f32 to vector<8x256xf32>
    %118 = arith.addf %117, %116 : vector<8x256xf32>
    %119 = arith.divf %117, %118 : vector<8x256xf32>
    %120 = vector.extract_strided_slice %119 {offsets = [0, 0], sizes = [8, 128], strides = [1, 1]} : vector<8x256xf32> to vector<8x128xf32>
    %121 = vector.extract_strided_slice %119 {offsets = [0, 128], sizes = [8, 128], strides = [1, 1]} : vector<8x256xf32> to vector<8x128xf32>
    %122 = vector.extract_strided_slice %109 {offsets = [0, 256], sizes = [8, 128], strides = [1, 1]} : vector<8x384xf32> to vector<8x128xf32>
    %123 = vector.extract_strided_slice %111 {offsets = [0, 256], sizes = [8, 128], strides = [1, 1]} : vector<8x384xf32> to vector<8x128xf32>
    %124 = vector.broadcast %11 : vector<1x128xf32> to vector<8x128xf32>
    %125 = arith.addf %123, %124 : vector<8x128xf32>
    %126 = arith.mulf %120, %125 : vector<8x128xf32>
    %127 = arith.addf %122, %126 : vector<8x128xf32>
    %128 = math.tanh %127 : vector<8x128xf32>
    %cst_36 = arith.constant 1.000000e+00 : f32
    %129 = vector.broadcast %cst_36 : f32 to vector<8x128xf32>
    %130 = arith.subf %129, %121 : vector<8x128xf32>
    %131 = arith.mulf %130, %128 : vector<8x128xf32>
    %132 = arith.mulf %121, %102 : vector<8x128xf32>
    %133 = arith.addf %131, %132 : vector<8x128xf32>
    %134 = arith.truncf %133 : vector<8x128xf32> to vector<8x128xbf16>
    %135 = arith.index_cast %107 : i32 to index
    %c0_37 = arith.constant 0 : index
    %136 = vector.load %arg7[%135, %c0_37] : memref<128x128xbf16, #tpu.memory_space<vmem>>, vector<8x128xbf16>
    tpu.vector_store %arg7[%135, %c0_37], %134 {strides = array<i32>} : memref<128x128xbf16, #tpu.memory_space<vmem>>, vector<8x128xbf16>,
    %c4_i32 = arith.constant 4 : i32
    %c8_i32_38 = arith.constant 8 : i32
    %137 = arith.muli %c4_i32, %c8_i32_38 : i32
    %138 = tpu.assume_multiple %137, 8 : i32
    %139 = arith.index_cast %138 : i32 to index
    %c0_39 = arith.constant 0 : index
    %140 = vector.load %arg9[%139, %c0_39] : memref<128x384xf32, #tpu.memory_space<vmem>>, vector<8x384xf32>
    %141 = arith.truncf %133 : vector<8x128xf32> to vector<8x128xbf16>
    %cst_40 = arith.constant dense<0.000000e+00> : vector<8x384xf32>
    %142 = tpu.matmul %141, %10, %cst_40 {dimension_numbers = #tpu.dot_dimension_numbers<[1], [0], [0], [1], [0, 0, 1, 1], [], []>} : vector<8x128xbf16>, vector<128x384xbf16>, vector<8x384xf32> -> vector<8x384xf32>
    %143 = vector.extract_strided_slice %140 {offsets = [0, 0], sizes = [8, 256], strides = [1, 1]} : vector<8x384xf32> to vector<8x256xf32>
    %144 = vector.extract_strided_slice %142 {offsets = [0, 0], sizes = [8, 256], strides = [1, 1]} : vector<8x384xf32> to vector<8x256xf32>
    %145 = arith.addf %143, %144 : vector<8x256xf32>
    %146 = arith.negf %145 : vector<8x256xf32>
    %147 = math.exp %146 : vector<8x256xf32>
    %cst_41 = arith.constant 1.000000e+00 : f32
    %148 = vector.broadcast %cst_41 : f32 to vector<8x256xf32>
    %149 = arith.addf %148, %147 : vector<8x256xf32>
    %150 = arith.divf %148, %149 : vector<8x256xf32>
    %151 = vector.extract_strided_slice %150 {offsets = [0, 0], sizes = [8, 128], strides = [1, 1]} : vector<8x256xf32> to vector<8x128xf32>
    %152 = vector.extract_strided_slice %150 {offsets = [0, 128], sizes = [8, 128], strides = [1, 1]} : vector<8x256xf32> to vector<8x128xf32>
    %153 = vector.extract_strided_slice %140 {offsets = [0, 256], sizes = [8, 128], strides = [1, 1]} : vector<8x384xf32> to vector<8x128xf32>
    %154 = vector.extract_strided_slice %142 {offsets = [0, 256], sizes = [8, 128], strides = [1, 1]} : vector<8x384xf32> to vector<8x128xf32>
    %155 = vector.broadcast %11 : vector<1x128xf32> to vector<8x128xf32>
    %156 = arith.addf %154, %155 : vector<8x128xf32>
    %157 = arith.mulf %151, %156 : vector<8x128xf32>
    %158 = arith.addf %153, %157 : vector<8x128xf32>
    %159 = math.tanh %158 : vector<8x128xf32>
    %cst_42 = arith.constant 1.000000e+00 : f32
    %160 = vector.broadcast %cst_42 : f32 to vector<8x128xf32>
    %161 = arith.subf %160, %152 : vector<8x128xf32>
    %162 = arith.mulf %161, %159 : vector<8x128xf32>
    %163 = arith.mulf %152, %133 : vector<8x128xf32>
    %164 = arith.addf %162, %163 : vector<8x128xf32>
    %165 = arith.truncf %164 : vector<8x128xf32> to vector<8x128xbf16>
    %166 = arith.index_cast %138 : i32 to index
    %c0_43 = arith.constant 0 : index
    %167 = vector.load %arg7[%166, %c0_43] : memref<128x128xbf16, #tpu.memory_space<vmem>>, vector<8x128xbf16>
    tpu.vector_store %arg7[%166, %c0_43], %165 {strides = array<i32>} : memref<128x128xbf16, #tpu.memory_space<vmem>>, vector<8x128xbf16>,
    %c5_i32 = arith.constant 5 : i32
    %c8_i32_44 = arith.constant 8 : i32
    %168 = arith.muli %c5_i32, %c8_i32_44 : i32
    %169 = tpu.assume_multiple %168, 8 : i32
    %170 = arith.index_cast %169 : i32 to index
    %c0_45 = arith.constant 0 : index
    %171 = vector.load %arg9[%170, %c0_45] : memref<128x384xf32, #tpu.memory_space<vmem>>, vector<8x384xf32>
    %172 = arith.truncf %164 : vector<8x128xf32> to vector<8x128xbf16>
    %cst_46 = arith.constant dense<0.000000e+00> : vector<8x384xf32>
    %173 = tpu.matmul %172, %10, %cst_46 {dimension_numbers = #tpu.dot_dimension_numbers<[1], [0], [0], [1], [0, 0, 1, 1], [], []>} : vector<8x128xbf16>, vector<128x384xbf16>, vector<8x384xf32> -> vector<8x384xf32>
    %174 = vector.extract_strided_slice %171 {offsets = [0, 0], sizes = [8, 256], strides = [1, 1]} : vector<8x384xf32> to vector<8x256xf32>
    %175 = vector.extract_strided_slice %173 {offsets = [0, 0], sizes = [8, 256], strides = [1, 1]} : vector<8x384xf32> to vector<8x256xf32>
    %176 = arith.addf %174, %175 : vector<8x256xf32>
    %177 = arith.negf %176 : vector<8x256xf32>
    %178 = math.exp %177 : vector<8x256xf32>
    %cst_47 = arith.constant 1.000000e+00 : f32
    %179 = vector.broadcast %cst_47 : f32 to vector<8x256xf32>
    %180 = arith.addf %179, %178 : vector<8x256xf32>
    %181 = arith.divf %179, %180 : vector<8x256xf32>
    %182 = vector.extract_strided_slice %181 {offsets = [0, 0], sizes = [8, 128], strides = [1, 1]} : vector<8x256xf32> to vector<8x128xf32>
    %183 = vector.extract_strided_slice %181 {offsets = [0, 128], sizes = [8, 128], strides = [1, 1]} : vector<8x256xf32> to vector<8x128xf32>
    %184 = vector.extract_strided_slice %171 {offsets = [0, 256], sizes = [8, 128], strides = [1, 1]} : vector<8x384xf32> to vector<8x128xf32>
    %185 = vector.extract_strided_slice %173 {offsets = [0, 256], sizes = [8, 128], strides = [1, 1]} : vector<8x384xf32> to vector<8x128xf32>
    %186 = vector.broadcast %11 : vector<1x128xf32> to vector<8x128xf32>
    %187 = arith.addf %185, %186 : vector<8x128xf32>
    %188 = arith.mulf %182, %187 : vector<8x128xf32>
    %189 = arith.addf %184, %188 : vector<8x128xf32>
    %190 = math.tanh %189 : vector<8x128xf32>
    %cst_48 = arith.constant 1.000000e+00 : f32
    %191 = vector.broadcast %cst_48 : f32 to vector<8x128xf32>
    %192 = arith.subf %191, %183 : vector<8x128xf32>
    %193 = arith.mulf %192, %190 : vector<8x128xf32>
    %194 = arith.mulf %183, %164 : vector<8x128xf32>
    %195 = arith.addf %193, %194 : vector<8x128xf32>
    %196 = arith.truncf %195 : vector<8x128xf32> to vector<8x128xbf16>
    %197 = arith.index_cast %169 : i32 to index
    %c0_49 = arith.constant 0 : index
    %198 = vector.load %arg7[%197, %c0_49] : memref<128x128xbf16, #tpu.memory_space<vmem>>, vector<8x128xbf16>
    tpu.vector_store %arg7[%197, %c0_49], %196 {strides = array<i32>} : memref<128x128xbf16, #tpu.memory_space<vmem>>, vector<8x128xbf16>,
    %c6_i32 = arith.constant 6 : i32
    %c8_i32_50 = arith.constant 8 : i32
    %199 = arith.muli %c6_i32, %c8_i32_50 : i32
    %200 = tpu.assume_multiple %199, 8 : i32
    %201 = arith.index_cast %200 : i32 to index
    %c0_51 = arith.constant 0 : index
    %202 = vector.load %arg9[%201, %c0_51] : memref<128x384xf32, #tpu.memory_space<vmem>>, vector<8x384xf32>
    %203 = arith.truncf %195 : vector<8x128xf32> to vector<8x128xbf16>
    %cst_52 = arith.constant dense<0.000000e+00> : vector<8x384xf32>
    %204 = tpu.matmul %203, %10, %cst_52 {dimension_numbers = #tpu.dot_dimension_numbers<[1], [0], [0], [1], [0, 0, 1, 1], [], []>} : vector<8x128xbf16>, vector<128x384xbf16>, vector<8x384xf32> -> vector<8x384xf32>
    %205 = vector.extract_strided_slice %202 {offsets = [0, 0], sizes = [8, 256], strides = [1, 1]} : vector<8x384xf32> to vector<8x256xf32>
    %206 = vector.extract_strided_slice %204 {offsets = [0, 0], sizes = [8, 256], strides = [1, 1]} : vector<8x384xf32> to vector<8x256xf32>
    %207 = arith.addf %205, %206 : vector<8x256xf32>
    %208 = arith.negf %207 : vector<8x256xf32>
    %209 = math.exp %208 : vector<8x256xf32>
    %cst_53 = arith.constant 1.000000e+00 : f32
    %210 = vector.broadcast %cst_53 : f32 to vector<8x256xf32>
    %211 = arith.addf %210, %209 : vector<8x256xf32>
    %212 = arith.divf %210, %211 : vector<8x256xf32>
    %213 = vector.extract_strided_slice %212 {offsets = [0, 0], sizes = [8, 128], strides = [1, 1]} : vector<8x256xf32> to vector<8x128xf32>
    %214 = vector.extract_strided_slice %212 {offsets = [0, 128], sizes = [8, 128], strides = [1, 1]} : vector<8x256xf32> to vector<8x128xf32>
    %215 = vector.extract_strided_slice %202 {offsets = [0, 256], sizes = [8, 128], strides = [1, 1]} : vector<8x384xf32> to vector<8x128xf32>
    %216 = vector.extract_strided_slice %204 {offsets = [0, 256], sizes = [8, 128], strides = [1, 1]} : vector<8x384xf32> to vector<8x128xf32>
    %217 = vector.broadcast %11 : vector<1x128xf32> to vector<8x128xf32>
    %218 = arith.addf %216, %217 : vector<8x128xf32>
    %219 = arith.mulf %213, %218 : vector<8x128xf32>
    %220 = arith.addf %215, %219 : vector<8x128xf32>
    %221 = math.tanh %220 : vector<8x128xf32>
    %cst_54 = arith.constant 1.000000e+00 : f32
    %222 = vector.broadcast %cst_54 : f32 to vector<8x128xf32>
    %223 = arith.subf %222, %214 : vector<8x128xf32>
    %224 = arith.mulf %223, %221 : vector<8x128xf32>
    %225 = arith.mulf %214, %195 : vector<8x128xf32>
    %226 = arith.addf %224, %225 : vector<8x128xf32>
    %227 = arith.truncf %226 : vector<8x128xf32> to vector<8x128xbf16>
    %228 = arith.index_cast %200 : i32 to index
    %c0_55 = arith.constant 0 : index
    %229 = vector.load %arg7[%228, %c0_55] : memref<128x128xbf16, #tpu.memory_space<vmem>>, vector<8x128xbf16>
    tpu.vector_store %arg7[%228, %c0_55], %227 {strides = array<i32>} : memref<128x128xbf16, #tpu.memory_space<vmem>>, vector<8x128xbf16>,
    %c7_i32 = arith.constant 7 : i32
    %c8_i32_56 = arith.constant 8 : i32
    %230 = arith.muli %c7_i32, %c8_i32_56 : i32
    %231 = tpu.assume_multiple %230, 8 : i32
    %232 = arith.index_cast %231 : i32 to index
    %c0_57 = arith.constant 0 : index
    %233 = vector.load %arg9[%232, %c0_57] : memref<128x384xf32, #tpu.memory_space<vmem>>, vector<8x384xf32>
    %234 = arith.truncf %226 : vector<8x128xf32> to vector<8x128xbf16>
    %cst_58 = arith.constant dense<0.000000e+00> : vector<8x384xf32>
    %235 = tpu.matmul %234, %10, %cst_58 {dimension_numbers = #tpu.dot_dimension_numbers<[1], [0], [0], [1], [0, 0, 1, 1], [], []>} : vector<8x128xbf16>, vector<128x384xbf16>, vector<8x384xf32> -> vector<8x384xf32>
    %236 = vector.extract_strided_slice %233 {offsets = [0, 0], sizes = [8, 256], strides = [1, 1]} : vector<8x384xf32> to vector<8x256xf32>
    %237 = vector.extract_strided_slice %235 {offsets = [0, 0], sizes = [8, 256], strides = [1, 1]} : vector<8x384xf32> to vector<8x256xf32>
    %238 = arith.addf %236, %237 : vector<8x256xf32>
    %239 = arith.negf %238 : vector<8x256xf32>
    %240 = math.exp %239 : vector<8x256xf32>
    %cst_59 = arith.constant 1.000000e+00 : f32
    %241 = vector.broadcast %cst_59 : f32 to vector<8x256xf32>
    %242 = arith.addf %241, %240 : vector<8x256xf32>
    %243 = arith.divf %241, %242 : vector<8x256xf32>
    %244 = vector.extract_strided_slice %243 {offsets = [0, 0], sizes = [8, 128], strides = [1, 1]} : vector<8x256xf32> to vector<8x128xf32>
    %245 = vector.extract_strided_slice %243 {offsets = [0, 128], sizes = [8, 128], strides = [1, 1]} : vector<8x256xf32> to vector<8x128xf32>
    %246 = vector.extract_strided_slice %233 {offsets = [0, 256], sizes = [8, 128], strides = [1, 1]} : vector<8x384xf32> to vector<8x128xf32>
    %247 = vector.extract_strided_slice %235 {offsets = [0, 256], sizes = [8, 128], strides = [1, 1]} : vector<8x384xf32> to vector<8x128xf32>
    %248 = vector.broadcast %11 : vector<1x128xf32> to vector<8x128xf32>
    %249 = arith.addf %247, %248 : vector<8x128xf32>
    %250 = arith.mulf %244, %249 : vector<8x128xf32>
    %251 = arith.addf %246, %250 : vector<8x128xf32>
    %252 = math.tanh %251 : vector<8x128xf32>
    %cst_60 = arith.constant 1.000000e+00 : f32
    %253 = vector.broadcast %cst_60 : f32 to vector<8x128xf32>
    %254 = arith.subf %253, %245 : vector<8x128xf32>
    %255 = arith.mulf %254, %252 : vector<8x128xf32>
    %256 = arith.mulf %245, %226 : vector<8x128xf32>
    %257 = arith.addf %255, %256 : vector<8x128xf32>
    %258 = arith.truncf %257 : vector<8x128xf32> to vector<8x128xbf16>
    %259 = arith.index_cast %231 : i32 to index
    %c0_61 = arith.constant 0 : index
    %260 = vector.load %arg7[%259, %c0_61] : memref<128x128xbf16, #tpu.memory_space<vmem>>, vector<8x128xbf16>
    tpu.vector_store %arg7[%259, %c0_61], %258 {strides = array<i32>} : memref<128x128xbf16, #tpu.memory_space<vmem>>, vector<8x128xbf16>,
    %c8_i32_62 = arith.constant 8 : i32
    %c8_i32_63 = arith.constant 8 : i32
    %261 = arith.muli %c8_i32_62, %c8_i32_63 : i32
    %262 = tpu.assume_multiple %261, 8 : i32
    %263 = arith.index_cast %262 : i32 to index
    %c0_64 = arith.constant 0 : index
    %264 = vector.load %arg9[%263, %c0_64] : memref<128x384xf32, #tpu.memory_space<vmem>>, vector<8x384xf32>
    %265 = arith.truncf %257 : vector<8x128xf32> to vector<8x128xbf16>
    %cst_65 = arith.constant dense<0.000000e+00> : vector<8x384xf32>
    %266 = tpu.matmul %265, %10, %cst_65 {dimension_numbers = #tpu.dot_dimension_numbers<[1], [0], [0], [1], [0, 0, 1, 1], [], []>} : vector<8x128xbf16>, vector<128x384xbf16>, vector<8x384xf32> -> vector<8x384xf32>
    %267 = vector.extract_strided_slice %264 {offsets = [0, 0], sizes = [8, 256], strides = [1, 1]} : vector<8x384xf32> to vector<8x256xf32>
    %268 = vector.extract_strided_slice %266 {offsets = [0, 0], sizes = [8, 256], strides = [1, 1]} : vector<8x384xf32> to vector<8x256xf32>
    %269 = arith.addf %267, %268 : vector<8x256xf32>
    %270 = arith.negf %269 : vector<8x256xf32>
    %271 = math.exp %270 : vector<8x256xf32>
    %cst_66 = arith.constant 1.000000e+00 : f32
    %272 = vector.broadcast %cst_66 : f32 to vector<8x256xf32>
    %273 = arith.addf %272, %271 : vector<8x256xf32>
    %274 = arith.divf %272, %273 : vector<8x256xf32>
    %275 = vector.extract_strided_slice %274 {offsets = [0, 0], sizes = [8, 128], strides = [1, 1]} : vector<8x256xf32> to vector<8x128xf32>
    %276 = vector.extract_strided_slice %274 {offsets = [0, 128], sizes = [8, 128], strides = [1, 1]} : vector<8x256xf32> to vector<8x128xf32>
    %277 = vector.extract_strided_slice %264 {offsets = [0, 256], sizes = [8, 128], strides = [1, 1]} : vector<8x384xf32> to vector<8x128xf32>
    %278 = vector.extract_strided_slice %266 {offsets = [0, 256], sizes = [8, 128], strides = [1, 1]} : vector<8x384xf32> to vector<8x128xf32>
    %279 = vector.broadcast %11 : vector<1x128xf32> to vector<8x128xf32>
    %280 = arith.addf %278, %279 : vector<8x128xf32>
    %281 = arith.mulf %275, %280 : vector<8x128xf32>
    %282 = arith.addf %277, %281 : vector<8x128xf32>
    %283 = math.tanh %282 : vector<8x128xf32>
    %cst_67 = arith.constant 1.000000e+00 : f32
    %284 = vector.broadcast %cst_67 : f32 to vector<8x128xf32>
    %285 = arith.subf %284, %276 : vector<8x128xf32>
    %286 = arith.mulf %285, %283 : vector<8x128xf32>
    %287 = arith.mulf %276, %257 : vector<8x128xf32>
    %288 = arith.addf %286, %287 : vector<8x128xf32>
    %289 = arith.truncf %288 : vector<8x128xf32> to vector<8x128xbf16>
    %290 = arith.index_cast %262 : i32 to index
    %c0_68 = arith.constant 0 : index
    %291 = vector.load %arg7[%290, %c0_68] : memref<128x128xbf16, #tpu.memory_space<vmem>>, vector<8x128xbf16>
    tpu.vector_store %arg7[%290, %c0_68], %289 {strides = array<i32>} : memref<128x128xbf16, #tpu.memory_space<vmem>>, vector<8x128xbf16>,
    %c9_i32 = arith.constant 9 : i32
    %c8_i32_69 = arith.constant 8 : i32
    %292 = arith.muli %c9_i32, %c8_i32_69 : i32
    %293 = tpu.assume_multiple %292, 8 : i32
    %294 = arith.index_cast %293 : i32 to index
    %c0_70 = arith.constant 0 : index
    %295 = vector.load %arg9[%294, %c0_70] : memref<128x384xf32, #tpu.memory_space<vmem>>, vector<8x384xf32>
    %296 = arith.truncf %288 : vector<8x128xf32> to vector<8x128xbf16>
    %cst_71 = arith.constant dense<0.000000e+00> : vector<8x384xf32>
    %297 = tpu.matmul %296, %10, %cst_71 {dimension_numbers = #tpu.dot_dimension_numbers<[1], [0], [0], [1], [0, 0, 1, 1], [], []>} : vector<8x128xbf16>, vector<128x384xbf16>, vector<8x384xf32> -> vector<8x384xf32>
    %298 = vector.extract_strided_slice %295 {offsets = [0, 0], sizes = [8, 256], strides = [1, 1]} : vector<8x384xf32> to vector<8x256xf32>
    %299 = vector.extract_strided_slice %297 {offsets = [0, 0], sizes = [8, 256], strides = [1, 1]} : vector<8x384xf32> to vector<8x256xf32>
    %300 = arith.addf %298, %299 : vector<8x256xf32>
    %301 = arith.negf %300 : vector<8x256xf32>
    %302 = math.exp %301 : vector<8x256xf32>
    %cst_72 = arith.constant 1.000000e+00 : f32
    %303 = vector.broadcast %cst_72 : f32 to vector<8x256xf32>
    %304 = arith.addf %303, %302 : vector<8x256xf32>
    %305 = arith.divf %303, %304 : vector<8x256xf32>
    %306 = vector.extract_strided_slice %305 {offsets = [0, 0], sizes = [8, 128], strides = [1, 1]} : vector<8x256xf32> to vector<8x128xf32>
    %307 = vector.extract_strided_slice %305 {offsets = [0, 128], sizes = [8, 128], strides = [1, 1]} : vector<8x256xf32> to vector<8x128xf32>
    %308 = vector.extract_strided_slice %295 {offsets = [0, 256], sizes = [8, 128], strides = [1, 1]} : vector<8x384xf32> to vector<8x128xf32>
    %309 = vector.extract_strided_slice %297 {offsets = [0, 256], sizes = [8, 128], strides = [1, 1]} : vector<8x384xf32> to vector<8x128xf32>
    %310 = vector.broadcast %11 : vector<1x128xf32> to vector<8x128xf32>
    %311 = arith.addf %309, %310 : vector<8x128xf32>
    %312 = arith.mulf %306, %311 : vector<8x128xf32>
    %313 = arith.addf %308, %312 : vector<8x128xf32>
    %314 = math.tanh %313 : vector<8x128xf32>
    %cst_73 = arith.constant 1.000000e+00 : f32
    %315 = vector.broadcast %cst_73 : f32 to vector<8x128xf32>
    %316 = arith.subf %315, %307 : vector<8x128xf32>
    %317 = arith.mulf %316, %314 : vector<8x128xf32>
    %318 = arith.mulf %307, %288 : vector<8x128xf32>
    %319 = arith.addf %317, %318 : vector<8x128xf32>
    %320 = arith.truncf %319 : vector<8x128xf32> to vector<8x128xbf16>
    %321 = arith.index_cast %293 : i32 to index
    %c0_74 = arith.constant 0 : index
    %322 = vector.load %arg7[%321, %c0_74] : memref<128x128xbf16, #tpu.memory_space<vmem>>, vector<8x128xbf16>
    tpu.vector_store %arg7[%321, %c0_74], %320 {strides = array<i32>} : memref<128x128xbf16, #tpu.memory_space<vmem>>, vector<8x128xbf16>,
    %c10_i32 = arith.constant 10 : i32
    %c8_i32_75 = arith.constant 8 : i32
    %323 = arith.muli %c10_i32, %c8_i32_75 : i32
    %324 = tpu.assume_multiple %323, 8 : i32
    %325 = arith.index_cast %324 : i32 to index
    %c0_76 = arith.constant 0 : index
    %326 = vector.load %arg9[%325, %c0_76] : memref<128x384xf32, #tpu.memory_space<vmem>>, vector<8x384xf32>
    %327 = arith.truncf %319 : vector<8x128xf32> to vector<8x128xbf16>
    %cst_77 = arith.constant dense<0.000000e+00> : vector<8x384xf32>
    %328 = tpu.matmul %327, %10, %cst_77 {dimension_numbers = #tpu.dot_dimension_numbers<[1], [0], [0], [1], [0, 0, 1, 1], [], []>} : vector<8x128xbf16>, vector<128x384xbf16>, vector<8x384xf32> -> vector<8x384xf32>
    %329 = vector.extract_strided_slice %326 {offsets = [0, 0], sizes = [8, 256], strides = [1, 1]} : vector<8x384xf32> to vector<8x256xf32>
    %330 = vector.extract_strided_slice %328 {offsets = [0, 0], sizes = [8, 256], strides = [1, 1]} : vector<8x384xf32> to vector<8x256xf32>
    %331 = arith.addf %329, %330 : vector<8x256xf32>
    %332 = arith.negf %331 : vector<8x256xf32>
    %333 = math.exp %332 : vector<8x256xf32>
    %cst_78 = arith.constant 1.000000e+00 : f32
    %334 = vector.broadcast %cst_78 : f32 to vector<8x256xf32>
    %335 = arith.addf %334, %333 : vector<8x256xf32>
    %336 = arith.divf %334, %335 : vector<8x256xf32>
    %337 = vector.extract_strided_slice %336 {offsets = [0, 0], sizes = [8, 128], strides = [1, 1]} : vector<8x256xf32> to vector<8x128xf32>
    %338 = vector.extract_strided_slice %336 {offsets = [0, 128], sizes = [8, 128], strides = [1, 1]} : vector<8x256xf32> to vector<8x128xf32>
    %339 = vector.extract_strided_slice %326 {offsets = [0, 256], sizes = [8, 128], strides = [1, 1]} : vector<8x384xf32> to vector<8x128xf32>
    %340 = vector.extract_strided_slice %328 {offsets = [0, 256], sizes = [8, 128], strides = [1, 1]} : vector<8x384xf32> to vector<8x128xf32>
    %341 = vector.broadcast %11 : vector<1x128xf32> to vector<8x128xf32>
    %342 = arith.addf %340, %341 : vector<8x128xf32>
    %343 = arith.mulf %337, %342 : vector<8x128xf32>
    %344 = arith.addf %339, %343 : vector<8x128xf32>
    %345 = math.tanh %344 : vector<8x128xf32>
    %cst_79 = arith.constant 1.000000e+00 : f32
    %346 = vector.broadcast %cst_79 : f32 to vector<8x128xf32>
    %347 = arith.subf %346, %338 : vector<8x128xf32>
    %348 = arith.mulf %347, %345 : vector<8x128xf32>
    %349 = arith.mulf %338, %319 : vector<8x128xf32>
    %350 = arith.addf %348, %349 : vector<8x128xf32>
    %351 = arith.truncf %350 : vector<8x128xf32> to vector<8x128xbf16>
    %352 = arith.index_cast %324 : i32 to index
    %c0_80 = arith.constant 0 : index
    %353 = vector.load %arg7[%352, %c0_80] : memref<128x128xbf16, #tpu.memory_space<vmem>>, vector<8x128xbf16>
    tpu.vector_store %arg7[%352, %c0_80], %351 {strides = array<i32>} : memref<128x128xbf16, #tpu.memory_space<vmem>>, vector<8x128xbf16>,
    %c11_i32 = arith.constant 11 : i32
    %c8_i32_81 = arith.constant 8 : i32
    %354 = arith.muli %c11_i32, %c8_i32_81 : i32
    %355 = tpu.assume_multiple %354, 8 : i32
    %356 = arith.index_cast %355 : i32 to index
    %c0_82 = arith.constant 0 : index
    %357 = vector.load %arg9[%356, %c0_82] : memref<128x384xf32, #tpu.memory_space<vmem>>, vector<8x384xf32>
    %358 = arith.truncf %350 : vector<8x128xf32> to vector<8x128xbf16>
    %cst_83 = arith.constant dense<0.000000e+00> : vector<8x384xf32>
    %359 = tpu.matmul %358, %10, %cst_83 {dimension_numbers = #tpu.dot_dimension_numbers<[1], [0], [0], [1], [0, 0, 1, 1], [], []>} : vector<8x128xbf16>, vector<128x384xbf16>, vector<8x384xf32> -> vector<8x384xf32>
    %360 = vector.extract_strided_slice %357 {offsets = [0, 0], sizes = [8, 256], strides = [1, 1]} : vector<8x384xf32> to vector<8x256xf32>
    %361 = vector.extract_strided_slice %359 {offsets = [0, 0], sizes = [8, 256], strides = [1, 1]} : vector<8x384xf32> to vector<8x256xf32>
    %362 = arith.addf %360, %361 : vector<8x256xf32>
    %363 = arith.negf %362 : vector<8x256xf32>
    %364 = math.exp %363 : vector<8x256xf32>
    %cst_84 = arith.constant 1.000000e+00 : f32
    %365 = vector.broadcast %cst_84 : f32 to vector<8x256xf32>
    %366 = arith.addf %365, %364 : vector<8x256xf32>
    %367 = arith.divf %365, %366 : vector<8x256xf32>
    %368 = vector.extract_strided_slice %367 {offsets = [0, 0], sizes = [8, 128], strides = [1, 1]} : vector<8x256xf32> to vector<8x128xf32>
    %369 = vector.extract_strided_slice %367 {offsets = [0, 128], sizes = [8, 128], strides = [1, 1]} : vector<8x256xf32> to vector<8x128xf32>
    %370 = vector.extract_strided_slice %357 {offsets = [0, 256], sizes = [8, 128], strides = [1, 1]} : vector<8x384xf32> to vector<8x128xf32>
    %371 = vector.extract_strided_slice %359 {offsets = [0, 256], sizes = [8, 128], strides = [1, 1]} : vector<8x384xf32> to vector<8x128xf32>
    %372 = vector.broadcast %11 : vector<1x128xf32> to vector<8x128xf32>
    %373 = arith.addf %371, %372 : vector<8x128xf32>
    %374 = arith.mulf %368, %373 : vector<8x128xf32>
    %375 = arith.addf %370, %374 : vector<8x128xf32>
    %376 = math.tanh %375 : vector<8x128xf32>
    %cst_85 = arith.constant 1.000000e+00 : f32
    %377 = vector.broadcast %cst_85 : f32 to vector<8x128xf32>
    %378 = arith.subf %377, %369 : vector<8x128xf32>
    %379 = arith.mulf %378, %376 : vector<8x128xf32>
    %380 = arith.mulf %369, %350 : vector<8x128xf32>
    %381 = arith.addf %379, %380 : vector<8x128xf32>
    %382 = arith.truncf %381 : vector<8x128xf32> to vector<8x128xbf16>
    %383 = arith.index_cast %355 : i32 to index
    %c0_86 = arith.constant 0 : index
    %384 = vector.load %arg7[%383, %c0_86] : memref<128x128xbf16, #tpu.memory_space<vmem>>, vector<8x128xbf16>
    tpu.vector_store %arg7[%383, %c0_86], %382 {strides = array<i32>} : memref<128x128xbf16, #tpu.memory_space<vmem>>, vector<8x128xbf16>,
    %c12_i32 = arith.constant 12 : i32
    %c8_i32_87 = arith.constant 8 : i32
    %385 = arith.muli %c12_i32, %c8_i32_87 : i32
    %386 = tpu.assume_multiple %385, 8 : i32
    %387 = arith.index_cast %386 : i32 to index
    %c0_88 = arith.constant 0 : index
    %388 = vector.load %arg9[%387, %c0_88] : memref<128x384xf32, #tpu.memory_space<vmem>>, vector<8x384xf32>
    %389 = arith.truncf %381 : vector<8x128xf32> to vector<8x128xbf16>
    %cst_89 = arith.constant dense<0.000000e+00> : vector<8x384xf32>
    %390 = tpu.matmul %389, %10, %cst_89 {dimension_numbers = #tpu.dot_dimension_numbers<[1], [0], [0], [1], [0, 0, 1, 1], [], []>} : vector<8x128xbf16>, vector<128x384xbf16>, vector<8x384xf32> -> vector<8x384xf32>
    %391 = vector.extract_strided_slice %388 {offsets = [0, 0], sizes = [8, 256], strides = [1, 1]} : vector<8x384xf32> to vector<8x256xf32>
    %392 = vector.extract_strided_slice %390 {offsets = [0, 0], sizes = [8, 256], strides = [1, 1]} : vector<8x384xf32> to vector<8x256xf32>
    %393 = arith.addf %391, %392 : vector<8x256xf32>
    %394 = arith.negf %393 : vector<8x256xf32>
    %395 = math.exp %394 : vector<8x256xf32>
    %cst_90 = arith.constant 1.000000e+00 : f32
    %396 = vector.broadcast %cst_90 : f32 to vector<8x256xf32>
    %397 = arith.addf %396, %395 : vector<8x256xf32>
    %398 = arith.divf %396, %397 : vector<8x256xf32>
    %399 = vector.extract_strided_slice %398 {offsets = [0, 0], sizes = [8, 128], strides = [1, 1]} : vector<8x256xf32> to vector<8x128xf32>
    %400 = vector.extract_strided_slice %398 {offsets = [0, 128], sizes = [8, 128], strides = [1, 1]} : vector<8x256xf32> to vector<8x128xf32>
    %401 = vector.extract_strided_slice %388 {offsets = [0, 256], sizes = [8, 128], strides = [1, 1]} : vector<8x384xf32> to vector<8x128xf32>
    %402 = vector.extract_strided_slice %390 {offsets = [0, 256], sizes = [8, 128], strides = [1, 1]} : vector<8x384xf32> to vector<8x128xf32>
    %403 = vector.broadcast %11 : vector<1x128xf32> to vector<8x128xf32>
    %404 = arith.addf %402, %403 : vector<8x128xf32>
    %405 = arith.mulf %399, %404 : vector<8x128xf32>
    %406 = arith.addf %401, %405 : vector<8x128xf32>
    %407 = math.tanh %406 : vector<8x128xf32>
    %cst_91 = arith.constant 1.000000e+00 : f32
    %408 = vector.broadcast %cst_91 : f32 to vector<8x128xf32>
    %409 = arith.subf %408, %400 : vector<8x128xf32>
    %410 = arith.mulf %409, %407 : vector<8x128xf32>
    %411 = arith.mulf %400, %381 : vector<8x128xf32>
    %412 = arith.addf %410, %411 : vector<8x128xf32>
    %413 = arith.truncf %412 : vector<8x128xf32> to vector<8x128xbf16>
    %414 = arith.index_cast %386 : i32 to index
    %c0_92 = arith.constant 0 : index
    %415 = vector.load %arg7[%414, %c0_92] : memref<128x128xbf16, #tpu.memory_space<vmem>>, vector<8x128xbf16>
    tpu.vector_store %arg7[%414, %c0_92], %413 {strides = array<i32>} : memref<128x128xbf16, #tpu.memory_space<vmem>>, vector<8x128xbf16>,
    %c13_i32 = arith.constant 13 : i32
    %c8_i32_93 = arith.constant 8 : i32
    %416 = arith.muli %c13_i32, %c8_i32_93 : i32
    %417 = tpu.assume_multiple %416, 8 : i32
    %418 = arith.index_cast %417 : i32 to index
    %c0_94 = arith.constant 0 : index
    %419 = vector.load %arg9[%418, %c0_94] : memref<128x384xf32, #tpu.memory_space<vmem>>, vector<8x384xf32>
    %420 = arith.truncf %412 : vector<8x128xf32> to vector<8x128xbf16>
    %cst_95 = arith.constant dense<0.000000e+00> : vector<8x384xf32>
    %421 = tpu.matmul %420, %10, %cst_95 {dimension_numbers = #tpu.dot_dimension_numbers<[1], [0], [0], [1], [0, 0, 1, 1], [], []>} : vector<8x128xbf16>, vector<128x384xbf16>, vector<8x384xf32> -> vector<8x384xf32>
    %422 = vector.extract_strided_slice %419 {offsets = [0, 0], sizes = [8, 256], strides = [1, 1]} : vector<8x384xf32> to vector<8x256xf32>
    %423 = vector.extract_strided_slice %421 {offsets = [0, 0], sizes = [8, 256], strides = [1, 1]} : vector<8x384xf32> to vector<8x256xf32>
    %424 = arith.addf %422, %423 : vector<8x256xf32>
    %425 = arith.negf %424 : vector<8x256xf32>
    %426 = math.exp %425 : vector<8x256xf32>
    %cst_96 = arith.constant 1.000000e+00 : f32
    %427 = vector.broadcast %cst_96 : f32 to vector<8x256xf32>
    %428 = arith.addf %427, %426 : vector<8x256xf32>
    %429 = arith.divf %427, %428 : vector<8x256xf32>
    %430 = vector.extract_strided_slice %429 {offsets = [0, 0], sizes = [8, 128], strides = [1, 1]} : vector<8x256xf32> to vector<8x128xf32>
    %431 = vector.extract_strided_slice %429 {offsets = [0, 128], sizes = [8, 128], strides = [1, 1]} : vector<8x256xf32> to vector<8x128xf32>
    %432 = vector.extract_strided_slice %419 {offsets = [0, 256], sizes = [8, 128], strides = [1, 1]} : vector<8x384xf32> to vector<8x128xf32>
    %433 = vector.extract_strided_slice %421 {offsets = [0, 256], sizes = [8, 128], strides = [1, 1]} : vector<8x384xf32> to vector<8x128xf32>
    %434 = vector.broadcast %11 : vector<1x128xf32> to vector<8x128xf32>
    %435 = arith.addf %433, %434 : vector<8x128xf32>
    %436 = arith.mulf %430, %435 : vector<8x128xf32>
    %437 = arith.addf %432, %436 : vector<8x128xf32>
    %438 = math.tanh %437 : vector<8x128xf32>
    %cst_97 = arith.constant 1.000000e+00 : f32
    %439 = vector.broadcast %cst_97 : f32 to vector<8x128xf32>
    %440 = arith.subf %439, %431 : vector<8x128xf32>
    %441 = arith.mulf %440, %438 : vector<8x128xf32>
    %442 = arith.mulf %431, %412 : vector<8x128xf32>
    %443 = arith.addf %441, %442 : vector<8x128xf32>
    %444 = arith.truncf %443 : vector<8x128xf32> to vector<8x128xbf16>
    %445 = arith.index_cast %417 : i32 to index
    %c0_98 = arith.constant 0 : index
    %446 = vector.load %arg7[%445, %c0_98] : memref<128x128xbf16, #tpu.memory_space<vmem>>, vector<8x128xbf16>
    tpu.vector_store %arg7[%445, %c0_98], %444 {strides = array<i32>} : memref<128x128xbf16, #tpu.memory_space<vmem>>, vector<8x128xbf16>,
    %c14_i32 = arith.constant 14 : i32
    %c8_i32_99 = arith.constant 8 : i32
    %447 = arith.muli %c14_i32, %c8_i32_99 : i32
    %448 = tpu.assume_multiple %447, 8 : i32
    %449 = arith.index_cast %448 : i32 to index
    %c0_100 = arith.constant 0 : index
    %450 = vector.load %arg9[%449, %c0_100] : memref<128x384xf32, #tpu.memory_space<vmem>>, vector<8x384xf32>
    %451 = arith.truncf %443 : vector<8x128xf32> to vector<8x128xbf16>
    %cst_101 = arith.constant dense<0.000000e+00> : vector<8x384xf32>
    %452 = tpu.matmul %451, %10, %cst_101 {dimension_numbers = #tpu.dot_dimension_numbers<[1], [0], [0], [1], [0, 0, 1, 1], [], []>} : vector<8x128xbf16>, vector<128x384xbf16>, vector<8x384xf32> -> vector<8x384xf32>
    %453 = vector.extract_strided_slice %450 {offsets = [0, 0], sizes = [8, 256], strides = [1, 1]} : vector<8x384xf32> to vector<8x256xf32>
    %454 = vector.extract_strided_slice %452 {offsets = [0, 0], sizes = [8, 256], strides = [1, 1]} : vector<8x384xf32> to vector<8x256xf32>
    %455 = arith.addf %453, %454 : vector<8x256xf32>
    %456 = arith.negf %455 : vector<8x256xf32>
    %457 = math.exp %456 : vector<8x256xf32>
    %cst_102 = arith.constant 1.000000e+00 : f32
    %458 = vector.broadcast %cst_102 : f32 to vector<8x256xf32>
    %459 = arith.addf %458, %457 : vector<8x256xf32>
    %460 = arith.divf %458, %459 : vector<8x256xf32>
    %461 = vector.extract_strided_slice %460 {offsets = [0, 0], sizes = [8, 128], strides = [1, 1]} : vector<8x256xf32> to vector<8x128xf32>
    %462 = vector.extract_strided_slice %460 {offsets = [0, 128], sizes = [8, 128], strides = [1, 1]} : vector<8x256xf32> to vector<8x128xf32>
    %463 = vector.extract_strided_slice %450 {offsets = [0, 256], sizes = [8, 128], strides = [1, 1]} : vector<8x384xf32> to vector<8x128xf32>
    %464 = vector.extract_strided_slice %452 {offsets = [0, 256], sizes = [8, 128], strides = [1, 1]} : vector<8x384xf32> to vector<8x128xf32>
    %465 = vector.broadcast %11 : vector<1x128xf32> to vector<8x128xf32>
    %466 = arith.addf %464, %465 : vector<8x128xf32>
    %467 = arith.mulf %461, %466 : vector<8x128xf32>
    %468 = arith.addf %463, %467 : vector<8x128xf32>
    %469 = math.tanh %468 : vector<8x128xf32>
    %cst_103 = arith.constant 1.000000e+00 : f32
    %470 = vector.broadcast %cst_103 : f32 to vector<8x128xf32>
    %471 = arith.subf %470, %462 : vector<8x128xf32>
    %472 = arith.mulf %471, %469 : vector<8x128xf32>
    %473 = arith.mulf %462, %443 : vector<8x128xf32>
    %474 = arith.addf %472, %473 : vector<8x128xf32>
    %475 = arith.truncf %474 : vector<8x128xf32> to vector<8x128xbf16>
    %476 = arith.index_cast %448 : i32 to index
    %c0_104 = arith.constant 0 : index
    %477 = vector.load %arg7[%476, %c0_104] : memref<128x128xbf16, #tpu.memory_space<vmem>>, vector<8x128xbf16>
    tpu.vector_store %arg7[%476, %c0_104], %475 {strides = array<i32>} : memref<128x128xbf16, #tpu.memory_space<vmem>>, vector<8x128xbf16>,
    %c15_i32 = arith.constant 15 : i32
    %c8_i32_105 = arith.constant 8 : i32
    %478 = arith.muli %c15_i32, %c8_i32_105 : i32
    %479 = tpu.assume_multiple %478, 8 : i32
    %480 = arith.index_cast %479 : i32 to index
    %c0_106 = arith.constant 0 : index
    %481 = vector.load %arg9[%480, %c0_106] : memref<128x384xf32, #tpu.memory_space<vmem>>, vector<8x384xf32>
    %482 = arith.truncf %474 : vector<8x128xf32> to vector<8x128xbf16>
    %cst_107 = arith.constant dense<0.000000e+00> : vector<8x384xf32>
    %483 = tpu.matmul %482, %10, %cst_107 {dimension_numbers = #tpu.dot_dimension_numbers<[1], [0], [0], [1], [0, 0, 1, 1], [], []>} : vector<8x128xbf16>, vector<128x384xbf16>, vector<8x384xf32> -> vector<8x384xf32>
    %484 = vector.extract_strided_slice %481 {offsets = [0, 0], sizes = [8, 256], strides = [1, 1]} : vector<8x384xf32> to vector<8x256xf32>
    %485 = vector.extract_strided_slice %483 {offsets = [0, 0], sizes = [8, 256], strides = [1, 1]} : vector<8x384xf32> to vector<8x256xf32>
    %486 = arith.addf %484, %485 : vector<8x256xf32>
    %487 = arith.negf %486 : vector<8x256xf32>
    %488 = math.exp %487 : vector<8x256xf32>
    %cst_108 = arith.constant 1.000000e+00 : f32
    %489 = vector.broadcast %cst_108 : f32 to vector<8x256xf32>
    %490 = arith.addf %489, %488 : vector<8x256xf32>
    %491 = arith.divf %489, %490 : vector<8x256xf32>
    %492 = vector.extract_strided_slice %491 {offsets = [0, 0], sizes = [8, 128], strides = [1, 1]} : vector<8x256xf32> to vector<8x128xf32>
    %493 = vector.extract_strided_slice %491 {offsets = [0, 128], sizes = [8, 128], strides = [1, 1]} : vector<8x256xf32> to vector<8x128xf32>
    %494 = vector.extract_strided_slice %481 {offsets = [0, 256], sizes = [8, 128], strides = [1, 1]} : vector<8x384xf32> to vector<8x128xf32>
    %495 = vector.extract_strided_slice %483 {offsets = [0, 256], sizes = [8, 128], strides = [1, 1]} : vector<8x384xf32> to vector<8x128xf32>
    %496 = vector.broadcast %11 : vector<1x128xf32> to vector<8x128xf32>
    %497 = arith.addf %495, %496 : vector<8x128xf32>
    %498 = arith.mulf %492, %497 : vector<8x128xf32>
    %499 = arith.addf %494, %498 : vector<8x128xf32>
    %500 = math.tanh %499 : vector<8x128xf32>
    %cst_109 = arith.constant 1.000000e+00 : f32
    %501 = vector.broadcast %cst_109 : f32 to vector<8x128xf32>
    %502 = arith.subf %501, %493 : vector<8x128xf32>
    %503 = arith.mulf %502, %500 : vector<8x128xf32>
    %504 = arith.mulf %493, %474 : vector<8x128xf32>
    %505 = arith.addf %503, %504 : vector<8x128xf32>
    %506 = arith.truncf %505 : vector<8x128xf32> to vector<8x128xbf16>
    %507 = arith.index_cast %479 : i32 to index
    %c0_110 = arith.constant 0 : index
    %508 = vector.load %arg7[%507, %c0_110] : memref<128x128xbf16, #tpu.memory_space<vmem>>, vector<8x128xbf16>
    tpu.vector_store %arg7[%507, %c0_110], %506 {strides = array<i32>} : memref<128x128xbf16, #tpu.memory_space<vmem>>, vector<8x128xbf16>,
    %c16_i32 = arith.constant 16 : i32
    %c0_111 = arith.constant 0 : index
    %c0_112 = arith.constant 0 : index
    %509 = vector.load %arg8[%c0_111, %c0_112] : memref<8x128xf32, #tpu.memory_space<vmem>>, vector<8x128xf32>
    tpu.vector_store %arg8[%c0_111, %c0_112], %505 {strides = array<i32>} : memref<8x128xf32, #tpu.memory_space<vmem>>, vector<8x128xf32>,
    return
  }
  func.func @transform_0(%arg0: i32) -> (i32, i32) {
    %c0_i32 = arith.constant 0 : i32
    %c0_i32_0 = arith.constant 0 : i32
    return %arg0, %c0_i32 : i32, i32
  }
  func.func @transform_1(%arg0: i32) -> (i32, i32) {
    %c0_i32 = arith.constant 0 : i32
    %c0_i32_0 = arith.constant 0 : i32
    %c0_i32_1 = arith.constant 0 : i32
    return %c0_i32, %c0_i32_0 : i32, i32
  }
  func.func @transform_2(%arg0: i32) -> (i32, i32) {
    %c0_i32 = arith.constant 0 : i32
    %c0_i32_0 = arith.constant 0 : i32
    %c0_i32_1 = arith.constant 0 : i32
    return %c0_i32, %c0_i32_0 : i32, i32
  }
  func.func @transform_3(%arg0: i32) -> (i32, i32) {
    %c0_i32 = arith.constant 0 : i32
    %c0_i32_0 = arith.constant 0 : i32
    %c0_i32_1 = arith.constant 0 : i32
    return %c0_i32, %c0_i32_0 : i32, i32
  }
  func.func @transform_4(%arg0: i32) -> (i32, i32) {
    %c0_i32 = arith.constant 0 : i32
    %c0_i32_0 = arith.constant 0 : i32
    %c0_i32_1 = arith.constant 0 : i32
    return %c0_i32, %c0_i32_0 : i32, i32
  }
  func.func @transform_5(%arg0: i32) -> (i32, i32) {
    %c0_i32 = arith.constant 0 : i32
    %c0_i32_0 = arith.constant 0 : i32
    %c0_i32_1 = arith.constant 0 : i32
    return %c0_i32, %c0_i32_0 : i32, i32
  }
  func.func @transform_6(%arg0: i32) -> (i32, i32) {
    %c0_i32 = arith.constant 0 : i32
    %c0_i32_0 = arith.constant 0 : i32
    return %arg0, %c0_i32 : i32, i32
  }
}

</mosaic_0001>

<llo_original>
// kernel: tpu_custom_call.1
$region0: #{tpu_custom_call.1}
  #allocation0 [shape = 'u32[]', space=smem, size = 0x4, offset = 0x4, fixed_abs, tag = 'smem constant byte address 0x4 - core index']
  #allocation1 [shape = 'u32[144,128]{1,0:T(1,128)}', space=vmem, size = 0x12000, scoped, tag = 'internal scratch']
  #allocation2 [shape = 'f32[8,128]{1,0:T(8,128)}', space=vmem, size = 0x1000, scoped, tag = 'scratch operand']
  #allocation3 [shape = 'f32[128,384]{1,0:T(8,128)}', space=vmem, size = 0x30000, scoped, tag = 'scratch operand']
  %s0 = inlined_call_operand.hbm [shape: bf16[256,32], index: 0, kind: input, shape index: {}]
  %s1 = inlined_call_operand.hbm [shape: bf16[32,384], index: 1, kind: input, shape index: {}]
  %s2 = inlined_call_operand.hbm [shape: bf16[128,384], index: 2, kind: input, shape index: {}]
  %s3 = inlined_call_operand.hbm [shape: f32[1,384], index: 3, kind: input, shape index: {}]
  %s4 = inlined_call_operand.hbm [shape: f32[1,128], index: 4, kind: input, shape index: {}]
  %s5 = inlined_call_operand.hbm [shape: f32[1,128], index: 5, kind: input, shape index: {}]
  %s6 = inlined_call_operand.hbm [shape: bf16[256,128], index: 6, kind: output, shape index: {}]
  %s7 = sld [smem:[#allocation0]]
  $region85: #{tpu_custom_call.1} parent=0
    _
  %s9 = ssub.s32 1, %s7
  %s10 = scalar_select 0, %s9, %s7
  $region1: #{tpu_custom_call.1} parent=0
    #allocation4 [shape = 'u8[65536]{0}', space=vmem, size = 0x10000, scoped, tag = 'input window, operand 0']
    #allocation5 [shape = 's32[2]{0}', space=sflag, size = 0x8, scoped, tag = 'scoped memory for tpu_custom_call.1']
    #allocation6 [shape = 's32[2]{0}', space=sflag, size = 0x8, scoped, tag = 'scoped memory for tpu_custom_call.1']
    #allocation7 [shape = 'u8[24576]{0}', space=vmem, size = 0x6000, scoped, tag = 'input window, operand 1, single buffered']
    #allocation8 [shape = 's32[1]{0}', space=sflag, size = 0x4, scoped, tag = 'scoped memory for tpu_custom_call.1']
    #allocation9 [shape = 'u8[98304]{0}', space=vmem, size = 0x18000, scoped, tag = 'input window, operand 2, single buffered']
    #allocation10 [shape = 'u8[1536]{0}', space=vmem, size = 0x800, scoped, tag = 'input window, operand 3, single buffered']
    #allocation11 [shape = 's32[1]{0}', space=sflag, size = 0x4, scoped, tag = 'scoped memory for tpu_custom_call.1']
    #allocation12 [shape = 'u8[512]{0}', space=vmem, size = 0x400, scoped, tag = 'input window, operand 4, single buffered']
    #allocation13 [shape = 'u8[512]{0}', space=vmem, size = 0x400, scoped, tag = 'input window, operand 5, single buffered']
    #allocation14 [shape = 's32[1]{0}', space=sflag, size = 0x4, scoped, tag = 'scoped memory for tpu_custom_call.1']
    #allocation15 [shape = 'u8[65536]{0}', space=vmem, size = 0x10000, scoped, tag = 'output window, operand 0']
    %11 = vsyncpa [#allocation5], 0
    %s12 = scalar_lea.sflag [#allocation5], 1
    %13 = vsyncpa %s12, 0
    %14 = vsyncpa [#allocation8], 0
    %15 = vsyncpa [#allocation11], 0
    %16 = vsyncpa [#allocation14], 0
    %17 = vsyncpa [#allocation6], 0
    %s18 = scalar_lea.sflag [#allocation6], 1
    %19 = vsyncpa %s18, 0
    loop: start=0, step=1, limit=4
    $region2: #{tpu_custom_call.1} parent=1 // loop_pre_header
      _
    $region3: #{tpu_custom_call.1} parent=1 // loop_header
      %s21 = sphi 0, %s25
      %p22 = scmp.ge.s32.totalorder %s21, 4
      %s31 = sphi 0, %s33
      %s34 = sphi 0, %s31
      %s35 = sphi 0, %s34
      %s51 = sphi 0, %s35
      %s55 = sphi 0, %s55
      %s57 = sphi 0, %s55
      %s58 = sphi 0, %s57
      %s72 = sphi 0, %s58
      %s76 = sphi 0, %s76
      %s78 = sphi 0, %s76
      %s79 = sphi 0, %s78
      %s93 = sphi 0, %s79
      %s97 = sphi 0, %s97
      %s99 = sphi 0, %s97
      %s100 = sphi 0, %s99
      %s114 = sphi 0, %s100
      %s118 = sphi 0, %s118
      %s120 = sphi 0, %s118
      %s121 = sphi 0, %s120
      %s135 = sphi 0, %s121
      %s139 = sphi 0, %s139
      %s141 = sphi 0, %s139
      %s142 = sphi 0, %s141
      %s156 = sphi 0, %s142
      %s162 = sphi 0, %s164
      %s165 = sphi 0, %s162
      %s166 = sphi 0, %s165
      %s182 = sphi 0, %s166
    $region4: #{tpu_custom_call.1} parent=1 // loop_header_branch
      %24 = sbr.rel (%p22) target = $region8
    $region5: #{tpu_custom_call.1} parent=1 // loop_body
      %s26 = ssub.s32 %s21, 1
      %s27 = ssub.s32 %s21, 2
      %s28 = sadd.s32 %s21, 1
      %s29 = ssub.s32 %s21, %s28
      %p30 = scmp.eq.s32.totalorder %s29, 0
      %s32 = sadd.s32 %s31, 1
      %s33 = scalar_select %p30, %s31, %s32
      %p36 = pneg %p30
      %p37 = scmp.eq.s32.totalorder %s21, 1
      %p38 = por %p36, %p37
      %p39 = scmp.ne.s32.totalorder %s31, %s34
      %p40 = scmp.eq.s32.totalorder %s21, 0
      %p41 = por %p39, %p40
      %p42 = scmp.ne.s32.totalorder %s31, %s34
      %p43 = scmp.eq.s32.totalorder %s26, 1
      %p44 = por %p42, %p43
      %p45 = scmp.ne.s32.totalorder %s34, %s35
      %p46 = scmp.eq.s32.totalorder %s26, 0
      %p47 = por %p45, %p46
      %p48 = scmp.ne.s32.totalorder %s34, %s35
      %p49 = scmp.eq.s32.totalorder %s27, 1
      %p50 = por %p48, %p49
      %p52 = scmp.ne.s32.totalorder %s35, %s51
      %p53 = scmp.eq.s32.totalorder %s27, 0
      %p54 = por %p52, %p53
      %s56 = sadd.s32 %s55, 1
      %p59 = scmp.eq.s32.totalorder %s21, 1
      %p60 = scmp.ne.s32.totalorder %s55, %s57
      %p61 = scmp.eq.s32.totalorder %s21, 0
      %p62 = por %p60, %p61
      %p63 = scmp.ne.s32.totalorder %s55, %s57
      %p64 = scmp.eq.s32.totalorder %s26, 1
      %p65 = por %p63, %p64
      %p66 = scmp.ne.s32.totalorder %s57, %s58
      %p67 = scmp.eq.s32.totalorder %s26, 0
      %p68 = por %p66, %p67
      %p69 = scmp.ne.s32.totalorder %s57, %s58
      %p70 = scmp.eq.s32.totalorder %s27, 1
      %p71 = por %p69, %p70
      %p73 = scmp.ne.s32.totalorder %s58, %s72
      %p74 = scmp.eq.s32.totalorder %s27, 0
      %p75 = por %p73, %p74
      %s77 = sadd.s32 %s76, 1
      %p80 = scmp.eq.s32.totalorder %s21, 1
      %p81 = scmp.ne.s32.totalorder %s76, %s78
      %p82 = scmp.eq.s32.totalorder %s21, 0
      %p83 = por %p81, %p82
      %p84 = scmp.ne.s32.totalorder %s76, %s78
      %p85 = scmp.eq.s32.totalorder %s26, 1
      %p86 = por %p84, %p85
      %p87 = scmp.ne.s32.totalorder %s78, %s79
      %p88 = scmp.eq.s32.totalorder %s26, 0
      %p89 = por %p87, %p88
      %p90 = scmp.ne.s32.totalorder %s78, %s79
      %p91 = scmp.eq.s32.totalorder %s27, 1
      %p92 = por %p90, %p91
      %p94 = scmp.ne.s32.totalorder %s79, %s93
      %p95 = scmp.eq.s32.totalorder %s27, 0
      %p96 = por %p94, %p95
      %s98 = sadd.s32 %s97, 1
      %p101 = scmp.eq.s32.totalorder %s21, 1
      %p102 = scmp.ne.s32.totalorder %s97, %s99
      %p103 = scmp.eq.s32.totalorder %s21, 0
      %p104 = por %p102, %p103
      %p105 = scmp.ne.s32.totalorder %s97, %s99
      %p106 = scmp.eq.s32.totalorder %s26, 1
      %p107 = por %p105, %p106
      %p108 = scmp.ne.s32.totalorder %s99, %s100
      %p109 = scmp.eq.s32.totalorder %s26, 0
      %p110 = por %p108, %p109
      %p111 = scmp.ne.s32.totalorder %s99, %s100
      %p112 = scmp.eq.s32.totalorder %s27, 1
      %p113 = por %p111, %p112
      %p115 = scmp.ne.s32.totalorder %s100, %s114
      %p116 = scmp.eq.s32.totalorder %s27, 0
      %p117 = por %p115, %p116
      %s119 = sadd.s32 %s118, 1
      %p122 = scmp.eq.s32.totalorder %s21, 1
      %p123 = scmp.ne.s32.totalorder %s118, %s120
      %p124 = scmp.eq.s32.totalorder %s21, 0
      %p125 = por %p123, %p124
      %p126 = scmp.ne.s32.totalorder %s118, %s120
      %p127 = scmp.eq.s32.totalorder %s26, 1
      %p128 = por %p126, %p127
      %p129 = scmp.ne.s32.totalorder %s120, %s121
      %p130 = scmp.eq.s32.totalorder %s26, 0
      %p131 = por %p129, %p130
      %p132 = scmp.ne.s32.totalorder %s120, %s121
      %p133 = scmp.eq.s32.totalorder %s27, 1
      %p134 = por %p132, %p133
      %p136 = scmp.ne.s32.totalorder %s121, %s135
      %p137 = scmp.eq.s32.totalorder %s27, 0
      %p138 = por %p136, %p137
      %s140 = sadd.s32 %s139, 1
      %p143 = scmp.eq.s32.totalorder %s21, 1
      %p144 = scmp.ne.s32.totalorder %s139, %s141
      %p145 = scmp.eq.s32.totalorder %s21, 0
      %p146 = por %p144, %p145
      %p147 = scmp.ne.s32.totalorder %s139, %s141
      %p148 = scmp.eq.s32.totalorder %s26, 1
      %p149 = por %p147, %p148
      %p150 = scmp.ne.s32.totalorder %s141, %s142
      %p151 = scmp.eq.s32.totalorder %s26, 0
      %p152 = por %p150, %p151
      %p153 = scmp.ne.s32.totalorder %s141, %s142
      %p154 = scmp.eq.s32.totalorder %s27, 1
      %p155 = por %p153, %p154
      %p157 = scmp.ne.s32.totalorder %s142, %s156
      %p158 = scmp.eq.s32.totalorder %s27, 0
      %p159 = por %p157, %p158
      %s160 = ssub.s32 %s21, %s28
      %p161 = scmp.eq.s32.totalorder %s160, 0
      %s163 = sadd.s32 %s162, 1
      %s164 = scalar_select %p161, %s162, %s163
      %p167 = pneg %p161
      %p168 = scmp.eq.s32.totalorder %s21, 1
      %p169 = por %p167, %p168
      %p170 = scmp.ne.s32.totalorder %s162, %s165
      %p171 = scmp.eq.s32.totalorder %s21, 0
      %p172 = por %p170, %p171
      %p173 = scmp.ne.s32.totalorder %s162, %s165
      %p174 = scmp.eq.s32.totalorder %s26, 1
      %p175 = por %p173, %p174
      %p176 = scmp.ne.s32.totalorder %s165, %s166
      %p177 = scmp.eq.s32.totalorder %s26, 0
      %p178 = por %p176, %p177
      %p179 = scmp.ne.s32.totalorder %s165, %s166
      %p180 = scmp.eq.s32.totalorder %s27, 1
      %p181 = por %p179, %p180
      %p183 = scmp.ne.s32.totalorder %s166, %s182
      %p184 = scmp.eq.s32.totalorder %s27, 0
      %p185 = por %p183, %p184
      %p186 = scmp.le.s32.totalorder 1, %s21
      %p187 = scmp.lt.s32.totalorder %s21, 3
      %p188 = pnand %p186, %p187
      %p189 = pneg %p188
      // Predicated region
      $region9: #{tpu_custom_call.1} parent=5 // pred_check
        _
      $region10: #{tpu_custom_call.1} parent=5 // pred_check_branch
        %191 = sbr.rel (%p188) target = $region12
      $region11: #{tpu_custom_call.1} parent=5 // pred_region
        %s192 = ssub.s32 %s21, 1
        // Predicated region
        $region13: #{tpu_custom_call.1} parent=11 // pred_check
          %p193 = pneg %p68
        $region14: #{tpu_custom_call.1} parent=11 // pred_check_branch
          %195 = sbr.rel (%p193) target = $region16
        $region15: #{tpu_custom_call.1} parent=11 // pred_region
          %s197 = ssub.s32 768, 768
          %198 = vsyncadd [#allocation8], %s197
          %s199 = sshll.u32 [#allocation7], 4
          %s200 = int_to_ptr.vmem [resolvable:$true] %s199
          %205 = dma.hbm_to_vmem [thread:$0]  %s1, 768, %s200, [#allocation8], 192, 192, 12
        $region16: #{tpu_custom_call.1} parent=11 // pred_fallthru
          _
        // Predicated region
        $region17: #{tpu_custom_call.1} parent=11 // pred_check
          %p206 = pneg %p89
        $region18: #{tpu_custom_call.1} parent=11 // pred_check_branch
          %208 = sbr.rel (%p206) target = $region20
        $region19: #{tpu_custom_call.1} parent=11 // pred_region
          %s210 = ssub.s32 3072, 3072
          %211 = vsyncadd [#allocation8], %s210
          %s212 = sshll.u32 [#allocation9], 4
          %s213 = int_to_ptr.vmem [resolvable:$true] %s212
          %218 = dma.hbm_to_vmem [thread:$0]  %s2, 3072, %s213, [#allocation8], 192, 192, 12
        $region20: #{tpu_custom_call.1} parent=11 // pred_fallthru
          _
        // Predicated region
        $region21: #{tpu_custom_call.1} parent=11 // pred_check
          %p219 = pneg %p110
        $region22: #{tpu_custom_call.1} parent=11 // pred_check_branch
          %221 = sbr.rel (%p219) target = $region24
        $region23: #{tpu_custom_call.1} parent=11 // pred_region
          %s223 = ssub.s32 48, 48
          %224 = vsyncadd [#allocation11], %s223
          %s226 = sshll.u32 [#allocation10], 4
          %s227 = int_to_ptr.vmem [resolvable:$true] %s226
          %229 = dma.hbm_to_vmem [thread:$0]  %s3, 48, %s227, [#allocation11]
        $region24: #{tpu_custom_call.1} parent=11 // pred_fallthru
          _
        // Predicated region
        $region25: #{tpu_custom_call.1} parent=11 // pred_check
          %p230 = pneg %p131
        $region26: #{tpu_custom_call.1} parent=11 // pred_check_branch
          %232 = sbr.rel (%p230) target = $region28
        $region27: #{tpu_custom_call.1} parent=11 // pred_region
          %s234 = ssub.s32 16, 16
          %235 = vsyncadd [#allocation11], %s234
          %s237 = sshll.u32 [#allocation12], 4
          %s238 = int_to_ptr.vmem [resolvable:$true] %s237
          %240 = dma.hbm_to_vmem [thread:$0]  %s4, 16, %s238, [#allocation11]
        $region28: #{tpu_custom_call.1} parent=11 // pred_fallthru
          _
        // Predicated region
        $region29: #{tpu_custom_call.1} parent=11 // pred_check
          %p241 = pneg %p152
        $region30: #{tpu_custom_call.1} parent=11 // pred_check_branch
          %243 = sbr.rel (%p241) target = $region32
        $region31: #{tpu_custom_call.1} parent=11 // pred_region
          %s245 = ssub.s32 16, 16
          %246 = vsyncadd [#allocation14], %s245
          %s248 = sshll.u32 [#allocation13], 4
          %s249 = int_to_ptr.vmem [resolvable:$true] %s248
          %251 = dma.hbm_to_vmem [thread:$0]  %s5, 16, %s249, [#allocation14]
        $region32: #{tpu_custom_call.1} parent=11 // pred_fallthru
          _
      $region12: #{tpu_custom_call.1} parent=5 // pred_fallthru
        _
      %p252 = scmp.lt.s32.totalorder %s21, 2
      // Predicated region
      $region33: #{tpu_custom_call.1} parent=5 // pred_check
        %p253 = pneg %p252
      $region34: #{tpu_custom_call.1} parent=5 // pred_check_branch
        %255 = sbr.rel (%p253) target = $region36
      $region35: #{tpu_custom_call.1} parent=5 // pred_region
        // Predicated region
        $region37: #{tpu_custom_call.1} parent=35 // pred_check
          %p256 = pneg %p41
        $region38: #{tpu_custom_call.1} parent=35 // pred_check_branch
          %258 = sbr.rel (%p256) target = $region40
        $region39: #{tpu_custom_call.1} parent=35 // pred_region
          %s259 = sand.u32 %s31, 1
          %s260 = scalar_lea.sflag [#allocation5], %s259
          %s261 = sand.u32 %s31, 1
          %s262 = smul.addr %s261, 64
          %s263 = scalar_lea.vmem [#allocation4], %s262
          %s264 = smul.u32 16, %s21
          %s266 = ssub.s32 1024, 1024
          %267 = vsyncadd %s260, %s266
          %s268 = smul.addr %s264, 64
          %s269 = scalar_lea.hbm %s0, %s268
          %s270 = sshll.u32 %s263, 4
          %s271 = int_to_ptr.vmem [resolvable:$true] %s270
          %276 = dma.hbm_to_vmem [thread:$0]  %s269, 1024, %s271, %s260, 64, 64, 4
        $region40: #{tpu_custom_call.1} parent=35 // pred_fallthru
          _
      $region36: #{tpu_custom_call.1} parent=5 // pred_fallthru
        _
      %p277 = scmp.le.s32.totalorder 1, %s21
      %p278 = scmp.lt.s32.totalorder %s21, 3
      %p279 = pnand %p277, %p278
      %p280 = pneg %p279
      // Predicated region
      $region41: #{tpu_custom_call.1} parent=5 // pred_check
        _
      $region42: #{tpu_custom_call.1} parent=5 // pred_check_branch
        %282 = sbr.rel (%p279) target = $region44
      $region43: #{tpu_custom_call.1} parent=5 // pred_region
        %s283 = ssub.s32 %s21, 1
        %s284 = sand.u32 %s34, 1
        %s285 = scalar_lea.sflag [#allocation5], %s284
        %s286 = sand.u32 %s34, 1
        %s287 = smul.addr %s286, 64
        %s288 = scalar_lea.vmem [#allocation4], %s287
        // Predicated region
        $region45: #{tpu_custom_call.1} parent=43 // pred_check
          %p289 = pneg %p47
        $region46: #{tpu_custom_call.1} parent=43 // pred_check_branch
          %291 = sbr.rel (%p289) target = $region48
        $region47: #{tpu_custom_call.1} parent=43 // pred_region
          %292 = dma.done %s285, 1024
        $region48: #{tpu_custom_call.1} parent=43 // pred_fallthru
          _
        // Predicated region
        $region49: #{tpu_custom_call.1} parent=43 // pred_check
          %p293 = pneg %p68
        $region50: #{tpu_custom_call.1} parent=43 // pred_check_branch
          %295 = sbr.rel (%p293) target = $region52
        $region51: #{tpu_custom_call.1} parent=43 // pred_region
          %296 = dma.done [#allocation8], 768
        $region52: #{tpu_custom_call.1} parent=43 // pred_fallthru
          _
        // Predicated region
        $region53: #{tpu_custom_call.1} parent=43 // pred_check
          %p297 = pneg %p89
        $region54: #{tpu_custom_call.1} parent=43 // pred_check_branch
          %299 = sbr.rel (%p297) target = $region56
        $region55: #{tpu_custom_call.1} parent=43 // pred_region
          %300 = dma.done [#allocation8], 3072
        $region56: #{tpu_custom_call.1} parent=43 // pred_fallthru
          _
        // Predicated region
        $region57: #{tpu_custom_call.1} parent=43 // pred_check
          %p301 = pneg %p110
        $region58: #{tpu_custom_call.1} parent=43 // pred_check_branch
          %303 = sbr.rel (%p301) target = $region60
        $region59: #{tpu_custom_call.1} parent=43 // pred_region
          %304 = dma.done [#allocation11], 48
        $region60: #{tpu_custom_call.1} parent=43 // pred_fallthru
          _
        // Predicated region
        $region61: #{tpu_custom_call.1} parent=43 // pred_check
          %p305 = pneg %p131
        $region62: #{tpu_custom_call.1} parent=43 // pred_check_branch
          %307 = sbr.rel (%p305) target = $region64
        $region63: #{tpu_custom_call.1} parent=43 // pred_region
          %308 = dma.done [#allocation11], 16
        $region64: #{tpu_custom_call.1} parent=43 // pred_fallthru
          _
        // Predicated region
        $region65: #{tpu_custom_call.1} parent=43 // pred_check
          %p309 = pneg %p152
        $region66: #{tpu_custom_call.1} parent=43 // pred_check_branch
          %311 = sbr.rel (%p309) target = $region68
        $region67: #{tpu_custom_call.1} parent=43 // pred_region
          %312 = dma.done [#allocation14], 16
        $region68: #{tpu_custom_call.1} parent=43 // pred_fallthru
          _
        %s313 = sand.u32 %s34, 1
        %s314 = scalar_lea.sflag [#allocation5], %s313
        %s315 = sand.u32 %s34, 1
        %s316 = smul.addr %s315, 64
        %s317 = scalar_lea.vmem [#allocation4], %s316
        %p318 = pneg %p47
        %p319 = pneg %p44
        %p320 = pneg %p68
        %p321 = pneg %p65
        %p322 = pneg %p89
        %p323 = pneg %p86
        %p324 = pneg %p110
        %p325 = pneg %p107
        %p326 = pneg %p131
        %p327 = pneg %p128
        %p328 = pneg %p152
        %p329 = pneg %p149
        %p330 = pneg %p178
        %p331 = pneg %p175
        %s332 = sand.u32 %s165, 1
        %s333 = scalar_lea.sflag [#allocation6], %s332
        %s334 = sand.u32 %s165, 1
        %s335 = smul.addr %s334, 64
        %s336 = scalar_lea.vmem [#allocation15], %s335
        %s337 = smul.u32 16, %s26
        %s338 = smul.u32 16, %s26
        %p340 = scmp.eq.s32.totalorder %s26, 0
        // Predicated region
        $region69: #{tpu_custom_call.1} parent=43 // pred_check
          %p341 = pneg %p340
        $region70: #{tpu_custom_call.1} parent=43 // pred_check_branch
          %343 = sbr.rel (%p341) target = $region72
        $region71: #{tpu_custom_call.1} parent=43 // pred_region
          %v344 = vld [vmem:[#allocation13] sm:$0x1]
          %v346 = vlaneseq
          %v347 = vshrl.u32 %v346, 7
          %v348 = vsub.s32 0, %v347
          %v349 = vrot.slane %v344, %v348
          %351 = vst [vmem:[#allocation2] sm:$0xff] %v349
        $region72: #{tpu_custom_call.1} parent=43 // pred_fallthru
          _
        %v352 = vld [vmem:[%s288] sm:$0xf]
        %v353 = vld [vmem:[%s288 + $0x4] sm:$0xf]
        %v354 = vld [vmem:[%s288 + $0x8] sm:$0xf]
        %v355 = vld [vmem:[%s288 + $0xc] sm:$0xf]
        %v356 = vld [vmem:[%s288 + $0x10] sm:$0xf]
        %v357 = vld [vmem:[%s288 + $0x14] sm:$0xf]
        %v358 = vld [vmem:[%s288 + $0x18] sm:$0xf]
        %v359 = vld [vmem:[%s288 + $0x1c] sm:$0xf]
        %v360 = vld [vmem:[%s288 + $0x20] sm:$0xf]
        %v361 = vld [vmem:[%s288 + $0x24] sm:$0xf]
        %v362 = vld [vmem:[%s288 + $0x28] sm:$0xf]
        %v363 = vld [vmem:[%s288 + $0x2c] sm:$0xf]
        %v364 = vld [vmem:[%s288 + $0x30] sm:$0xf]
        %v365 = vld [vmem:[%s288 + $0x34] sm:$0xf]
        %v366 = vld [vmem:[%s288 + $0x38] sm:$0xf]
        %v367 = vld [vmem:[%s288 + $0x3c] sm:$0xf]
        %v368 = vld [vmem:[#allocation7] sm:$0xff]
        %v369 = vld [vmem:[#allocation7 + $0x8] sm:$0xf]
        %v370 = vld [vmem:[#allocation7 + $0xc] sm:$0xff]
        %v371 = vld [vmem:[#allocation7 + $0x14] sm:$0xf]
        %v372 = vld [vmem:[#allocation7 + $0x18] sm:$0xff]
        %v373 = vld [vmem:[#allocation7 + $0x20] sm:$0xf]
        %v374 = vld [vmem:[#allocation7 + $0x24] sm:$0xff]
        %v375 = vld [vmem:[#allocation7 + $0x2c] sm:$0xf]
        %v376 = vld [vmem:[#allocation10] sm:$0x7]
        %v378 = vlaneseq
        %v379 = vshrl.u32 %v378, 7
        %v380 = vsub.s32 0, %v379
        %v381 = vrot.slane %v376, %v380
        %v382 = vlaneseq
        %v383 = vshrl.u32 %v382, 7
        %v384 = vsub.s32 1, %v383
        %v385 = vrot.slane %v376, %v384
        %v386 = vlaneseq
        %v387 = vshrl.u32 %v386, 7
        %v388 = vsub.s32 2, %v387
        %v389 = vrot.slane %v376, %v388
        %v409 = vunpack.c.l.b16 %v352
        %v410 = vunpack.c.l.b16 %v353
        %v411 = vunpack.c.l.b16 %v354
        %v412 = vunpack.c.l.b16 %v355
        %v413 = vunpack.c.l.b16 %v356
        %v414 = vunpack.c.l.b16 %v357
        %v415 = vunpack.c.l.b16 %v358
        %v416 = vunpack.c.l.b16 %v359
        %v417 = vunpack.c.l.b16 %v360
        %v418 = vunpack.c.l.b16 %v361
        %v419 = vunpack.c.l.b16 %v362
        %v420 = vunpack.c.l.b16 %v363
        %v421 = vunpack.c.l.b16 %v364
        %v422 = vunpack.c.l.b16 %v365
        %v423 = vunpack.c.l.b16 %v366
        %v424 = vunpack.c.l.b16 %v367
        %v425 = vpack.c.b16 %v410, %v409
        %v426 = vpack.c.b16 %v412, %v411
        %v427 = vpack.c.b16 %v414, %v413
        %v428 = vpack.c.b16 %v416, %v415
        %v429 = vpack.c.b16 %v418, %v417
        %v430 = vpack.c.b16 %v420, %v419
        %v431 = vpack.c.b16 %v422, %v421
        %v432 = vpack.c.b16 %v424, %v423
        %v441 = vunpack.c.l.b16 %v368
        %v442 = vunpack.c.h.b16 %v368
        %v443 = vunpack.c.l.b16 %v369
        %v444 = vunpack.c.l.b16 %v370
        %v445 = vunpack.c.h.b16 %v370
        %v446 = vunpack.c.l.b16 %v371
        %v447 = vunpack.c.l.b16 %v372
        %v448 = vunpack.c.h.b16 %v372
        %v449 = vunpack.c.l.b16 %v373
        %v450 = vunpack.c.l.b16 %v374
        %v451 = vunpack.c.h.b16 %v374
        %v452 = vunpack.c.l.b16 %v375
        %v453 = vpack.c.b16 %v444, %v441
        %v454 = vpack.c.b16 %v445, %v442
        %v455 = vpack.c.b16 %v446, %v443
        %v456 = vpack.c.b16 %v450, %v447
        %v457 = vpack.c.b16 %v451, %v448
        %v458 = vpack.c.b16 %v452, %v449
        %vm465 = vcmask 261120
        %v467 = vsel %vm465, %v425, 0
        %v470 = vsel %vm465, %v426, 0
        %v473 = vsel %vm465, %v427, 0
        %v476 = vsel %vm465, %v428, 0
        %v479 = vsel %vm465, %v429, 0
        %v482 = vsel %vm465, %v430, 0
        %v485 = vsel %vm465, %v431, 0
        %v488 = vsel %vm465, %v432, 0
        %490 = vmatprep.subr.bf16.mxu0 %v454
        %491 = vmatpush1.bf16.msra.mxu0 %v453
        %492 = vmatprep.subr.bf16.mxu0 %v457
        %493 = vmatpush1.bf16.msra.mxu0 %v456
        %494 = vmatprep.subr.bf16.mxu0 0
        %495 = vmatpush1.bf16.msra.mxu0 0
        %496 = vmatprep.subr.bf16.mxu0 0
        %497 = vmatpush1.bf16.msra.mxu0 0
        %498 = vmatprep.subr.bf16.mxu0 0
        %499 = vmatpush1.bf16.msra.mxu0 0
        %500 = vmatprep.subr.bf16.mxu0 0
        %501 = vmatpush1.bf16.msra.mxu0 0
        %502 = vmatprep.subr.bf16.mxu0 0
        %503 = vmatpush1.bf16.msra.mxu0 0
        %504 = vmatprep.subr.bf16.mxu0 0
        %505 = vmatpush1.bf16.msra.mxu0 0
        %506 = vmatprep.subr.bf16.mxu0 0
        %507 = vmatpush1.bf16.msra.mxu0 0
        %508 = vmatprep.subr.bf16.mxu0 0
        %509 = vmatpush1.bf16.msra.mxu0 0
        %510 = vmatprep.subr.bf16.mxu0 0
        %511 = vmatpush1.bf16.msra.mxu0 0
        %512 = vmatprep.subr.bf16.mxu0 0
        %513 = vmatpush1.bf16.msra.mxu0 0
        %514 = vmatprep.subr.bf16.mxu0 0
        %515 = vmatpush1.bf16.msra.mxu0 0
        %516 = vmatprep.subr.bf16.mxu0 0
        %517 = vmatpush1.bf16.msra.mxu0 0
        %518 = vmatprep.subr.bf16.mxu0 0
        %519 = vmatpush1.bf16.msra.mxu0 0
        %520 = vmatprep.subr.bf16.mxu0 0
        %521 = vmatpush1.bf16.msra.mxu0 0
        %522 = vmatprep.mubr.bf16.mxu0 0
        %523 = vmatmul.mubr.bf16.gmra.mrb[0].mxu0 %v467
        %v524 = vpop.f32.mrb[0].mxu0
        %v525 = vadd.f32 %v381, %v524
        %v526 = vpop.f32.mrb[0].mxu0
        %v527 = vadd.f32 %v385, %v526
        %v528 = vpop.f32.mrb[0].mxu0
        %v529 = vadd.f32 %v381, %v528
        %v530 = vpop.f32.mrb[0].mxu0
        %v531 = vadd.f32 %v385, %v530
        %532 = vmatprep.mubr.bf16.mxu0 0
        %533 = vmatmul.mubr.bf16.gmra.mrb[0].mxu0 %v470
        %v534 = vpop.f32.mrb[0].mxu0
        %v535 = vadd.f32 %v381, %v534
        %v536 = vpop.f32.mrb[0].mxu0
        %v537 = vadd.f32 %v385, %v536
        %v538 = vpop.f32.mrb[0].mxu0
        %v539 = vadd.f32 %v381, %v538
        %v540 = vpop.f32.mrb[0].mxu0
        %v541 = vadd.f32 %v385, %v540
        %542 = vmatprep.mubr.bf16.mxu0 0
        %543 = vmatmul.mubr.bf16.gmra.mrb[0].mxu0 %v473
        %v544 = vpop.f32.mrb[0].mxu0
        %v545 = vadd.f32 %v381, %v544
        %v546 = vpop.f32.mrb[0].mxu0
        %v547 = vadd.f32 %v385, %v546
        %v548 = vpop.f32.mrb[0].mxu0
        %v549 = vadd.f32 %v381, %v548
        %v550 = vpop.f32.mrb[0].mxu0
        %v551 = vadd.f32 %v385, %v550
        %552 = vmatprep.mubr.bf16.mxu0 0
        %553 = vmatmul.mubr.bf16.gmra.mrb[0].mxu0 %v476
        %v554 = vpop.f32.mrb[0].mxu0
        %v555 = vadd.f32 %v381, %v554
        %v556 = vpop.f32.mrb[0].mxu0
        %v557 = vadd.f32 %v385, %v556
        %v558 = vpop.f32.mrb[0].mxu0
        %v559 = vadd.f32 %v381, %v558
        %v560 = vpop.f32.mrb[0].mxu0
        %v561 = vadd.f32 %v385, %v560
        %562 = vmatprep.mubr.bf16.mxu0 0
        %563 = vmatmul.mubr.bf16.gmra.mrb[0].mxu0 %v479
        %v564 = vpop.f32.mrb[0].mxu0
        %v565 = vadd.f32 %v381, %v564
        %v566 = vpop.f32.mrb[0].mxu0
        %v567 = vadd.f32 %v385, %v566
        %v568 = vpop.f32.mrb[0].mxu0
        %v569 = vadd.f32 %v381, %v568
        %v570 = vpop.f32.mrb[0].mxu0
        %v571 = vadd.f32 %v385, %v570
        %572 = vmatprep.mubr.bf16.mxu0 0
        %573 = vmatmul.mubr.bf16.gmra.mrb[0].mxu0 %v482
        %v574 = vpop.f32.mrb[0].mxu0
        %v575 = vadd.f32 %v381, %v574
        %v576 = vpop.f32.mrb[0].mxu0
        %v577 = vadd.f32 %v385, %v576
        %v578 = vpop.f32.mrb[0].mxu0
        %v579 = vadd.f32 %v381, %v578
        %v580 = vpop.f32.mrb[0].mxu0
        %v581 = vadd.f32 %v385, %v580
        %582 = vmatprep.mubr.bf16.mxu0 0
        %583 = vmatmul.mubr.bf16.gmra.mrb[0].mxu0 %v485
        %v584 = vpop.f32.mrb[0].mxu0
        %v585 = vadd.f32 %v381, %v584
        %v586 = vpop.f32.mrb[0].mxu0
        %v587 = vadd.f32 %v385, %v586
        %v588 = vpop.f32.mrb[0].mxu0
        %v589 = vadd.f32 %v381, %v588
        %v590 = vpop.f32.mrb[0].mxu0
        %v591 = vadd.f32 %v385, %v590
        %592 = vmatprep.mubr.bf16.mxu0 0
        %593 = vmatmul.mubr.bf16.gmra.mrb[0].mxu0 %v488
        %v594 = vpop.f32.mrb[0].mxu0
        %v595 = vadd.f32 %v381, %v594
        %v596 = vpop.f32.mrb[0].mxu0
        %v597 = vadd.f32 %v385, %v596
        %v598 = vpop.f32.mrb[0].mxu0
        %v599 = vadd.f32 %v381, %v598
        %v600 = vpop.f32.mrb[0].mxu0
        %v601 = vadd.f32 %v385, %v600
        %602 = vdwg.mxu0
        %603 = vmatprep.subr.bf16.mxu0 0
        %604 = vmatpush1.bf16.msra.mxu0 %v455
        %605 = vmatprep.subr.bf16.mxu0 0
        %606 = vmatpush1.bf16.msra.mxu0 %v458
        %607 = vmatprep.subr.bf16.mxu0 0
        %608 = vmatpush1.bf16.msra.mxu0 0
        %609 = vmatprep.subr.bf16.mxu0 0
        %610 = vmatpush1.bf16.msra.mxu0 0
        %611 = vmatprep.subr.bf16.mxu0 0
        %612 = vmatpush1.bf16.msra.mxu0 0
        %613 = vmatprep.subr.bf16.mxu0 0
        %614 = vmatpush1.bf16.msra.mxu0 0
        %615 = vmatprep.subr.bf16.mxu0 0
        %616 = vmatpush1.bf16.msra.mxu0 0
        %617 = vmatprep.subr.bf16.mxu0 0
        %618 = vmatpush1.bf16.msra.mxu0 0
        %619 = vmatprep.subr.bf16.mxu0 0
        %620 = vmatpush1.bf16.msra.mxu0 0
        %621 = vmatprep.subr.bf16.mxu0 0
        %622 = vmatpush1.bf16.msra.mxu0 0
        %623 = vmatprep.subr.bf16.mxu0 0
        %624 = vmatpush1.bf16.msra.mxu0 0
        %625 = vmatprep.subr.bf16.mxu0 0
        %626 = vmatpush1.bf16.msra.mxu0 0
        %627 = vmatprep.subr.bf16.mxu0 0
        %628 = vmatpush1.bf16.msra.mxu0 0
        %629 = vmatprep.subr.bf16.mxu0 0
        %630 = vmatpush1.bf16.msra.mxu0 0
        %631 = vmatprep.subr.bf16.mxu0 0
        %632 = vmatpush1.bf16.msra.mxu0 0
        %633 = vmatprep.subr.bf16.mxu0 0
        %634 = vmatpush1.bf16.msra.mxu0 0
        %635 = vmatprep.mubr.bf16.mxu0 0
        %636 = vmatmul.mubr.bf16.gmra.mrb[0].mxu0 %v467
        %v637 = vpop.f32.mrb[0].mxu0
        %v638 = vadd.f32 %v389, %v637
        %v639 = vpop.f32.mrb[0].mxu0
        %v640 = vpop.f32.mrb[0].mxu0
        %v641 = vadd.f32 %v389, %v640
        %v642 = vpop.f32.mrb[0].mxu0
        %643 = vmatprep.mubr.bf16.mxu0 0
        %644 = vmatmul.mubr.bf16.gmra.mrb[0].mxu0 %v470
        %v645 = vpop.f32.mrb[0].mxu0
        %v646 = vadd.f32 %v389, %v645
        %v647 = vpop.f32.mrb[0].mxu0
        %v648 = vpop.f32.mrb[0].mxu0
        %v649 = vadd.f32 %v389, %v648
        %v650 = vpop.f32.mrb[0].mxu0
        %651 = vmatprep.mubr.bf16.mxu0 0
        %652 = vmatmul.mubr.bf16.gmra.mrb[0].mxu0 %v473
        %v653 = vpop.f32.mrb[0].mxu0
        %v654 = vadd.f32 %v389, %v653
        %v655 = vpop.f32.mrb[0].mxu0
        %v656 = vpop.f32.mrb[0].mxu0
        %v657 = vadd.f32 %v389, %v656
        %v658 = vpop.f32.mrb[0].mxu0
        %659 = vmatprep.mubr.bf16.mxu0 0
        %660 = vmatmul.mubr.bf16.gmra.mrb[0].mxu0 %v476
        %v661 = vpop.f32.mrb[0].mxu0
        %v662 = vadd.f32 %v389, %v661
        %v663 = vpop.f32.mrb[0].mxu0
        %v664 = vpop.f32.mrb[0].mxu0
        %v665 = vadd.f32 %v389, %v664
        %v666 = vpop.f32.mrb[0].mxu0
        %667 = vmatprep.mubr.bf16.mxu0 0
        %668 = vmatmul.mubr.bf16.gmra.mrb[0].mxu0 %v479
        %v669 = vpop.f32.mrb[0].mxu0
        %v670 = vadd.f32 %v389, %v669
        %v671 = vpop.f32.mrb[0].mxu0
        %v672 = vpop.f32.mrb[0].mxu0
        %v673 = vadd.f32 %v389, %v672
        %v674 = vpop.f32.mrb[0].mxu0
        %675 = vmatprep.mubr.bf16.mxu0 0
        %676 = vmatmul.mubr.bf16.gmra.mrb[0].mxu0 %v482
        %v677 = vpop.f32.mrb[0].mxu0
        %v678 = vadd.f32 %v389, %v677
        %v679 = vpop.f32.mrb[0].mxu0
        %v680 = vpop.f32.mrb[0].mxu0
        %v681 = vadd.f32 %v389, %v680
        %v682 = vpop.f32.mrb[0].mxu0
        %683 = vmatprep.mubr.bf16.mxu0 0
        %684 = vmatmul.mubr.bf16.gmra.mrb[0].mxu0 %v485
        %v685 = vpop.f32.mrb[0].mxu0
        %v686 = vadd.f32 %v389, %v685
        %v687 = vpop.f32.mrb[0].mxu0
        %v688 = vpop.f32.mrb[0].mxu0
        %v689 = vadd.f32 %v389, %v688
        %v690 = vpop.f32.mrb[0].mxu0
        %691 = vmatprep.mubr.bf16.mxu0 0
        %692 = vmatmul.mubr.bf16.gmra.mrb[0].mxu0 %v488
        %v693 = vpop.f32.mrb[0].mxu0
        %v694 = vadd.f32 %v389, %v693
        %v695 = vpop.f32.mrb[0].mxu0
        %v696 = vpop.f32.mrb[0].mxu0
        %v697 = vadd.f32 %v389, %v696
        %v698 = vpop.f32.mrb[0].mxu0
        %699 = vdwg.mxu0
        %700 = vst [vmem:[#allocation3] sm:$0xff] %v525
        %701 = vst [vmem:[#allocation3 + $0x8] sm:$0xff] %v527
        %702 = vst [vmem:[#allocation3 + $0x10] sm:$0xff] %v638
        %703 = vst [vmem:[#allocation3 + $0x18] sm:$0xff] %v529
        %704 = vst [vmem:[#allocation3 + $0x20] sm:$0xff] %v531
        %705 = vst [vmem:[#allocation3 + $0x28] sm:$0xff] %v641
        %706 = vst [vmem:[#allocation3 + $0x30] sm:$0xff] %v535
        %707 = vst [vmem:[#allocation3 + $0x38] sm:$0xff] %v537
        %708 = vst [vmem:[#allocation3 + $0x40] sm:$0xff] %v646
        %709 = vst [vmem:[#allocation3 + $0x48] sm:$0xff] %v539
        %710 = vst [vmem:[#allocation3 + $0x50] sm:$0xff] %v541
        %711 = vst [vmem:[#allocation3 + $0x58] sm:$0xff] %v649
        %712 = vst [vmem:[#allocation3 + $0x60] sm:$0xff] %v545
        %713 = vst [vmem:[#allocation3 + $0x68] sm:$0xff] %v547
        %714 = vst [vmem:[#allocation3 + $0x70] sm:$0xff] %v654
        %715 = vst [vmem:[#allocation3 + $0x78] sm:$0xff] %v549
        %716 = vst [vmem:[#allocation3 + $0x80] sm:$0xff] %v551
        %717 = vst [vmem:[#allocation3 + $0x88] sm:$0xff] %v657
        %718 = vst [vmem:[#allocation3 + $0x90] sm:$0xff] %v555
        %719 = vst [vmem:[#allocation3 + $0x98] sm:$0xff] %v557
        %720 = vst [vmem:[#allocation3 + $0xa0] sm:$0xff] %v662
        %721 = vst [vmem:[#allocation3 + $0xa8] sm:$0xff] %v559
        %722 = vst [vmem:[#allocation3 + $0xb0] sm:$0xff] %v561
        %723 = vst [vmem:[#allocation3 + $0xb8] sm:$0xff] %v665
        %724 = vst [vmem:[#allocation3 + $0xc0] sm:$0xff] %v565
        %725 = vst [vmem:[#allocation3 + $0xc8] sm:$0xff] %v567
        %726 = vst [vmem:[#allocation3 + $0xd0] sm:$0xff] %v670
        %727 = vst [vmem:[#allocation3 + $0xd8] sm:$0xff] %v569
        %728 = vst [vmem:[#allocation3 + $0xe0] sm:$0xff] %v571
        %729 = vst [vmem:[#allocation3 + $0xe8] sm:$0xff] %v673
        %730 = vst [vmem:[#allocation3 + $0xf0] sm:$0xff] %v575
        %731 = vst [vmem:[#allocation3 + $0xf8] sm:$0xff] %v577
        %732 = vst [vmem:[#allocation3 + $0x100] sm:$0xff] %v678
        %733 = vst [vmem:[#allocation3 + $0x108] sm:$0xff] %v579
        %734 = vst [vmem:[#allocation3 + $0x110] sm:$0xff] %v581
        %735 = vst [vmem:[#allocation3 + $0x118] sm:$0xff] %v681
        %736 = vst [vmem:[#allocation3 + $0x120] sm:$0xff] %v585
        %737 = vst [vmem:[#allocation3 + $0x128] sm:$0xff] %v587
        %738 = vst [vmem:[#allocation3 + $0x130] sm:$0xff] %v686
        %739 = vst [vmem:[#allocation3 + $0x138] sm:$0xff] %v589
        %740 = vst [vmem:[#allocation3 + $0x140] sm:$0xff] %v591
        %741 = vst [vmem:[#allocation3 + $0x148] sm:$0xff] %v689
        %742 = vst [vmem:[#allocation3 + $0x150] sm:$0xff] %v595
        %743 = vst [vmem:[#allocation3 + $0x158] sm:$0xff] %v597
        %744 = vst [vmem:[#allocation3 + $0x160] sm:$0xff] %v694
        %745 = vst [vmem:[#allocation3 + $0x168] sm:$0xff] %v599
        %746 = vst [vmem:[#allocation3 + $0x170] sm:$0xff] %v601
        %747 = vst [vmem:[#allocation3 + $0x178] sm:$0xff] %v697
        %v748 = vld [vmem:[#allocation9] sm:$0xff]
        %v749 = vld [vmem:[#allocation9 + $0x8] sm:$0xf]
        %v750 = vld [vmem:[#allocation9 + $0xc] sm:$0xff]
        %v751 = vld [vmem:[#allocation9 + $0x14] sm:$0xf]
        %v752 = vld [vmem:[#allocation9 + $0x18] sm:$0xff]
        %v753 = vld [vmem:[#allocation9 + $0x20] sm:$0xf]
        %v754 = vld [vmem:[#allocation9 + $0x24] sm:$0xff]
        %v755 = vld [vmem:[#allocation9 + $0x2c] sm:$0xf]
        %v756 = vld [vmem:[#allocation9 + $0x30] sm:$0xff]
        %v757 = vld [vmem:[#allocation9 + $0x38] sm:$0xf]
        %v758 = vld [vmem:[#allocation9 + $0x3c] sm:$0xff]
        %v759 = vld [vmem:[#allocation9 + $0x44] sm:$0xf]
        %v760 = vld [vmem:[#allocation9 + $0x48] sm:$0xff]
        %v761 = vld [vmem:[#allocation9 + $0x50] sm:$0xf]
        %v762 = vld [vmem:[#allocation9 + $0x54] sm:$0xff]
        %v763 = vld [vmem:[#allocation9 + $0x5c] sm:$0xf]
        %v764 = vld [vmem:[#allocation9 + $0x60] sm:$0xff]
        %v765 = vld [vmem:[#allocation9 + $0x68] sm:$0xf]
        %v766 = vld [vmem:[#allocation9 + $0x6c] sm:$0xff]
        %v767 = vld [vmem:[#allocation9 + $0x74] sm:$0xf]
        %v768 = vld [vmem:[#allocation9 + $0x78] sm:$0xff]
        %v769 = vld [vmem:[#allocation9 + $0x80] sm:$0xf]
        %v770 = vld [vmem:[#allocation9 + $0x84] sm:$0xff]
        %v771 = vld [vmem:[#allocation9 + $0x8c] sm:$0xf]
        %v772 = vld [vmem:[#allocation9 + $0x90] sm:$0xff]
        %v773 = vld [vmem:[#allocation9 + $0x98] sm:$0xf]
        %v774 = vld [vmem:[#allocation9 + $0x9c] sm:$0xff]
        %v775 = vld [vmem:[#allocation9 + $0xa4] sm:$0xf]
        %v776 = vld [vmem:[#allocation9 + $0xa8] sm:$0xff]
        %v777 = vld [vmem:[#allocation9 + $0xb0] sm:$0xf]
        %v778 = vld [vmem:[#allocation9 + $0xb4] sm:$0xff]
        %v779 = vld [vmem:[#allocation9 + $0xbc] sm:$0xf]
        %v780 = vld [vmem:[#allocation12] sm:$0x1]
        %v781 = vld [vmem:[#allocation2] sm:$0xff]
        %s782 = smul.u32 0, 3
        %s783 = smul.addr %s782, 8
        %s784 = scalar_lea.vmem [#allocation3], %s783
        %v785 = vld [vmem:[%s784] sm:$0xff]
        %v786 = vld [vmem:[%s784 + $0x8] sm:$0xff]
        %v787 = vld [vmem:[%s784 + $0x10] sm:$0xff]
        %v788 = vpack.c.bf16 %v781, %v781
        %v821 = vunpack.c.l.b16 %v748
        %v822 = vunpack.c.h.b16 %v748
        %v823 = vunpack.c.l.b16 %v749
        %v824 = vunpack.c.l.b16 %v750
        %v825 = vunpack.c.h.b16 %v750
        %v826 = vunpack.c.l.b16 %v751
        %v827 = vunpack.c.l.b16 %v752
        %v828 = vunpack.c.h.b16 %v752
        %v829 = vunpack.c.l.b16 %v753
        %v830 = vunpack.c.l.b16 %v754
        %v831 = vunpack.c.h.b16 %v754
        %v832 = vunpack.c.l.b16 %v755
        %v833 = vunpack.c.l.b16 %v756
        %v834 = vunpack.c.h.b16 %v756
        %v835 = vunpack.c.l.b16 %v757
        %v836 = vunpack.c.l.b16 %v758
        %v837 = vunpack.c.h.b16 %v758
        %v838 = vunpack.c.l.b16 %v759
        %v839 = vunpack.c.l.b16 %v760
        %v840 = vunpack.c.h.b16 %v760
        %v841 = vunpack.c.l.b16 %v761
        %v842 = vunpack.c.l.b16 %v762
        %v843 = vunpack.c.h.b16 %v762
        %v844 = vunpack.c.l.b16 %v763
        %v845 = vunpack.c.l.b16 %v764
        %v846 = vunpack.c.h.b16 %v764
        %v847 = vunpack.c.l.b16 %v765
        %v848 = vunpack.c.l.b16 %v766
        %v849 = vunpack.c.h.b16 %v766
        %v850 = vunpack.c.l.b16 %v767
        %v851 = vunpack.c.l.b16 %v768
        %v852 = vunpack.c.h.b16 %v768
        %v853 = vunpack.c.l.b16 %v769
        %v854 = vunpack.c.l.b16 %v770
        %v855 = vunpack.c.h.b16 %v770
        %v856 = vunpack.c.l.b16 %v771
        %v857 = vunpack.c.l.b16 %v772
        %v858 = vunpack.c.h.b16 %v772
        %v859 = vunpack.c.l.b16 %v773
        %v860 = vunpack.c.l.b16 %v774
        %v861 = vunpack.c.h.b16 %v774
        %v862 = vunpack.c.l.b16 %v775
        %v863 = vunpack.c.l.b16 %v776
        %v864 = vunpack.c.h.b16 %v776
        %v865 = vunpack.c.l.b16 %v777
        %v866 = vunpack.c.l.b16 %v778
        %v867 = vunpack.c.h.b16 %v778
        %v868 = vunpack.c.l.b16 %v779
        %v869 = vpack.c.b16 %v824, %v821
        %v870 = vpack.c.b16 %v825, %v822
        %v871 = vpack.c.b16 %v826, %v823
        %v872 = vpack.c.b16 %v830, %v827
        %v873 = vpack.c.b16 %v831, %v828
        %v874 = vpack.c.b16 %v832, %v829
        %v875 = vpack.c.b16 %v836, %v833
        %v876 = vpack.c.b16 %v837, %v834
        %v877 = vpack.c.b16 %v838, %v835
        %v878 = vpack.c.b16 %v842, %v839
        %v879 = vpack.c.b16 %v843, %v840
        %v880 = vpack.c.b16 %v844, %v841
        %v881 = vpack.c.b16 %v848, %v845
        %v882 = vpack.c.b16 %v849, %v846
        %v883 = vpack.c.b16 %v850, %v847
        %v884 = vpack.c.b16 %v854, %v851
        %v885 = vpack.c.b16 %v855, %v852
        %v886 = vpack.c.b16 %v856, %v853
        %v887 = vpack.c.b16 %v860, %v857
        %v888 = vpack.c.b16 %v861, %v858
        %v889 = vpack.c.b16 %v862, %v859
        %v890 = vpack.c.b16 %v866, %v863
        %v891 = vpack.c.b16 %v867, %v864
        %v892 = vpack.c.b16 %v868, %v865
        %917 = vmatprep.subr.bf16.mxu0 %v870
        %918 = vmatpush1.bf16.msra.mxu0 %v869
        %919 = vmatprep.subr.bf16.mxu0 %v873
        %920 = vmatpush1.bf16.msra.mxu0 %v872
        %921 = vmatprep.subr.bf16.mxu0 %v876
        %922 = vmatpush1.bf16.msra.mxu0 %v875
        %923 = vmatprep.subr.bf16.mxu0 %v879
        %924 = vmatpush1.bf16.msra.mxu0 %v878
        %925 = vmatprep.subr.bf16.mxu0 %v882
        %926 = vmatpush1.bf16.msra.mxu0 %v881
        %927 = vmatprep.subr.bf16.mxu0 %v885
        %928 = vmatpush1.bf16.msra.mxu0 %v884
        %929 = vmatprep.subr.bf16.mxu0 %v888
        %930 = vmatpush1.bf16.msra.mxu0 %v887
        %931 = vmatprep.subr.bf16.mxu0 %v891
        %932 = vmatpush1.bf16.msra.mxu0 %v890
        %933 = vmatprep.subr.bf16.mxu0 0
        %934 = vmatpush1.bf16.msra.mxu0 0
        %935 = vmatprep.subr.bf16.mxu0 0
        %936 = vmatpush1.bf16.msra.mxu0 0
        %937 = vmatprep.subr.bf16.mxu0 0
        %938 = vmatpush1.bf16.msra.mxu0 0
        %939 = vmatprep.subr.bf16.mxu0 0
        %940 = vmatpush1.bf16.msra.mxu0 0
        %941 = vmatprep.subr.bf16.mxu0 0
        %942 = vmatpush1.bf16.msra.mxu0 0
        %943 = vmatprep.subr.bf16.mxu0 0
        %944 = vmatpush1.bf16.msra.mxu0 0
        %945 = vmatprep.subr.bf16.mxu0 0
        %946 = vmatpush1.bf16.msra.mxu0 0
        %947 = vmatprep.subr.bf16.mxu0 0
        %948 = vmatpush1.bf16.msra.mxu0 0
        %949 = vmatprep.mubr.bf16.mxu0 0
        %950 = vmatmul.mubr.bf16.gmra.mrb[0].mxu0 %v788
        %v951 = vpop.f32.mrb[0].mxu0
        %v952 = vadd.f32 0.0, %v951
        %v953 = vpop.f32.mrb[0].mxu0
        %v954 = vadd.f32 0.0, %v953
        %v955 = vpop.f32.mrb[0].mxu0
        %v956 = vpop.f32.mrb[0].mxu0
        %957 = vdwg.mxu0
        %958 = vmatprep.subr.bf16.mxu0 0
        %959 = vmatpush1.bf16.msra.mxu0 %v871
        %960 = vmatprep.subr.bf16.mxu0 0
        %961 = vmatpush1.bf16.msra.mxu0 %v874
        %962 = vmatprep.subr.bf16.mxu0 0
        %963 = vmatpush1.bf16.msra.mxu0 %v877
        %964 = vmatprep.subr.bf16.mxu0 0
        %965 = vmatpush1.bf16.msra.mxu0 %v880
        %966 = vmatprep.subr.bf16.mxu0 0
        %967 = vmatpush1.bf16.msra.mxu0 %v883
        %968 = vmatprep.subr.bf16.mxu0 0
        %969 = vmatpush1.bf16.msra.mxu0 %v886
        %970 = vmatprep.subr.bf16.mxu0 0
        %971 = vmatpush1.bf16.msra.mxu0 %v889
        %972 = vmatprep.subr.bf16.mxu0 0
        %973 = vmatpush1.bf16.msra.mxu0 %v892
        %974 = vmatprep.subr.bf16.mxu0 0
        %975 = vmatpush1.bf16.msra.mxu0 0
        %976 = vmatprep.subr.bf16.mxu0 0
        %977 = vmatpush1.bf16.msra.mxu0 0
        %978 = vmatprep.subr.bf16.mxu0 0
        %979 = vmatpush1.bf16.msra.mxu0 0
        %980 = vmatprep.subr.bf16.mxu0 0
        %981 = vmatpush1.bf16.msra.mxu0 0
        %982 = vmatprep.subr.bf16.mxu0 0
        %983 = vmatpush1.bf16.msra.mxu0 0
        %984 = vmatprep.subr.bf16.mxu0 0
        %985 = vmatpush1.bf16.msra.mxu0 0
        %986 = vmatprep.subr.bf16.mxu0 0
        %987 = vmatpush1.bf16.msra.mxu0 0
        %988 = vmatprep.subr.bf16.mxu0 0
        %989 = vmatpush1.bf16.msra.mxu0 0
        %990 = vmatprep.mubr.bf16.mxu0 0
        %991 = vmatmul.mubr.bf16.gmra.mrb[0].mxu0 %v788
        %v992 = vpop.f32.mrb[0].mxu0
        %v993 = vadd.f32 0.0, %v992
        %v994 = vpop.f32.mrb[0].mxu0
        %v995 = vpop.f32.mrb[0].mxu0
        %v996 = vpop.f32.mrb[0].mxu0
        %997 = vdwg.mxu0
        %v998 = vadd.f32 %v785, %v952
        %v999 = vadd.f32 %v786, %v954
        %v1000 = vxor.u32 %v998, 2147483648
        %v1001 = vxor.u32 %v999, 2147483648
        %v1002 = vmul.f32 %v1000, 1.442695
        %v1003 = vpow.pop %v1002
        %v1004 = vmul.f32 %v1001, 1.442695
        %v1005 = vpow.pop %v1004
        %v1006 = vadd.f32 %v1003, 1.0
        %v1007 = vadd.f32 %v1005, 1.0
        %v1008 = vrcp.pop %v1006
        %v1009 = vmul.f32 1.0, %v1008
        %v1010 = vrcp.pop %v1007
        %v1011 = vmul.f32 1.0, %v1010
        %v1013 = vlaneseq
        %v1014 = vshrl.u32 %v1013, 7
        %v1015 = vsub.s32 0, %v1014
        %v1016 = vrot.slane %v780, %v1015
        %v1018 = vadd.f32 %v993, %v1016
        %v1019 = vmul.f32 %v1009, %v1018
        %v1020 = vadd.f32 %v787, %v1019
        %v1021 = vtanh.pop %v1020
        %v1022 = vsub.f32 1.0, %v1011
        %v1023 = vmul.f32 %v1022, %v1021
        %v1024 = vmul.f32 %v1011, %v781
        %v1025 = vadd.f32 %v1023, %v1024
        %v1026 = vpack.c.bf16 %v1025, %v1025
        %1027 = vst [vmem:[%s336] sm:$0xf] %v1026
        %s1028 = smul.u32 1, 3
        %s1029 = smul.addr %s1028, 8
        %s1030 = scalar_lea.vmem [#allocation3], %s1029
        %v1031 = vld [vmem:[%s1030] sm:$0xff]
        %v1032 = vld [vmem:[%s1030 + $0x8] sm:$0xff]
        %v1033 = vld [vmem:[%s1030 + $0x10] sm:$0xff]
        %1034 = vmatprep.subr.bf16.mxu0 %v870
        %1035 = vmatpush1.bf16.msra.mxu0 %v869
        %1036 = vmatprep.subr.bf16.mxu0 %v873
        %1037 = vmatpush1.bf16.msra.mxu0 %v872
        %1038 = vmatprep.subr.bf16.mxu0 %v876
        %1039 = vmatpush1.bf16.msra.mxu0 %v875
        %1040 = vmatprep.subr.bf16.mxu0 %v879
        %1041 = vmatpush1.bf16.msra.mxu0 %v878
        %1042 = vmatprep.subr.bf16.mxu0 %v882
        %1043 = vmatpush1.bf16.msra.mxu0 %v881
        %1044 = vmatprep.subr.bf16.mxu0 %v885
        %1045 = vmatpush1.bf16.msra.mxu0 %v884
        %1046 = vmatprep.subr.bf16.mxu0 %v888
        %1047 = vmatpush1.bf16.msra.mxu0 %v887
        %1048 = vmatprep.subr.bf16.mxu0 %v891
        %1049 = vmatpush1.bf16.msra.mxu0 %v890
        %1050 = vmatprep.subr.bf16.mxu0 0
        %1051 = vmatpush1.bf16.msra.mxu0 0
        %1052 = vmatprep.subr.bf16.mxu0 0
        %1053 = vmatpush1.bf16.msra.mxu0 0
        %1054 = vmatprep.subr.bf16.mxu0 0
        %1055 = vmatpush1.bf16.msra.mxu0 0
        %1056 = vmatprep.subr.bf16.mxu0 0
        %1057 = vmatpush1.bf16.msra.mxu0 0
        %1058 = vmatprep.subr.bf16.mxu0 0
        %1059 = vmatpush1.bf16.msra.mxu0 0
        %1060 = vmatprep.subr.bf16.mxu0 0
        %1061 = vmatpush1.bf16.msra.mxu0 0
        %1062 = vmatprep.subr.bf16.mxu0 0
        %1063 = vmatpush1.bf16.msra.mxu0 0
        %1064 = vmatprep.subr.bf16.mxu0 0
        %1065 = vmatpush1.bf16.msra.mxu0 0
        %1066 = vmatprep.mubr.bf16.mxu0 0
        %1067 = vmatmul.mubr.bf16.gmra.mrb[0].mxu0 %v1026
        %v1068 = vpop.f32.mrb[0].mxu0
        %v1069 = vadd.f32 0.0, %v1068
        %v1070 = vpop.f32.mrb[0].mxu0
        %v1071 = vadd.f32 0.0, %v1070
        %v1072 = vpop.f32.mrb[0].mxu0
        %v1073 = vpop.f32.mrb[0].mxu0
        %1074 = vdwg.mxu0
        %1075 = vmatprep.subr.bf16.mxu0 0
        %1076 = vmatpush1.bf16.msra.mxu0 %v871
        %1077 = vmatprep.subr.bf16.mxu0 0
        %1078 = vmatpush1.bf16.msra.mxu0 %v874
        %1079 = vmatprep.subr.bf16.mxu0 0
        %1080 = vmatpush1.bf16.msra.mxu0 %v877
        %1081 = vmatprep.subr.bf16.mxu0 0
        %1082 = vmatpush1.bf16.msra.mxu0 %v880
        %1083 = vmatprep.subr.bf16.mxu0 0
        %1084 = vmatpush1.bf16.msra.mxu0 %v883
        %1085 = vmatprep.subr.bf16.mxu0 0
        %1086 = vmatpush1.bf16.msra.mxu0 %v886
        %1087 = vmatprep.subr.bf16.mxu0 0
        %1088 = vmatpush1.bf16.msra.mxu0 %v889
        %1089 = vmatprep.subr.bf16.mxu0 0
        %1090 = vmatpush1.bf16.msra.mxu0 %v892
        %1091 = vmatprep.subr.bf16.mxu0 0
        %1092 = vmatpush1.bf16.msra.mxu0 0
        %1093 = vmatprep.subr.bf16.mxu0 0
        %1094 = vmatpush1.bf16.msra.mxu0 0
        %1095 = vmatprep.subr.bf16.mxu0 0
        %1096 = vmatpush1.bf16.msra.mxu0 0
        %1097 = vmatprep.subr.bf16.mxu0 0
        %1098 = vmatpush1.bf16.msra.mxu0 0
        %1099 = vmatprep.subr.bf16.mxu0 0
        %1100 = vmatpush1.bf16.msra.mxu0 0
        %1101 = vmatprep.subr.bf16.mxu0 0
        %1102 = vmatpush1.bf16.msra.mxu0 0
        %1103 = vmatprep.subr.bf16.mxu0 0
        %1104 = vmatpush1.bf16.msra.mxu0 0
        %1105 = vmatprep.subr.bf16.mxu0 0
        %1106 = vmatpush1.bf16.msra.mxu0 0
        %1107 = vmatprep.mubr.bf16.mxu0 0
        %1108 = vmatmul.mubr.bf16.gmra.mrb[0].mxu0 %v1026
        %v1109 = vpop.f32.mrb[0].mxu0
        %v1110 = vadd.f32 0.0, %v1109
        %v1111 = vpop.f32.mrb[0].mxu0
        %v1112 = vpop.f32.mrb[0].mxu0
        %v1113 = vpop.f32.mrb[0].mxu0
        %1114 = vdwg.mxu0
        %v1115 = vadd.f32 %v1031, %v1069
        %v1116 = vadd.f32 %v1032, %v1071
        %v1117 = vxor.u32 %v1115, 2147483648
        %v1118 = vxor.u32 %v1116, 2147483648
        %v1119 = vmul.f32 %v1117, 1.442695
        %v1120 = vpow.pop %v1119
        %v1121 = vmul.f32 %v1118, 1.442695
        %v1122 = vpow.pop %v1121
        %v1123 = vadd.f32 %v1120, 1.0
        %v1124 = vadd.f32 %v1122, 1.0
        %v1125 = vrcp.pop %v1123
        %v1126 = vmul.f32 1.0, %v1125
        %v1127 = vrcp.pop %v1124
        %v1128 = vmul.f32 1.0, %v1127
        %v1129 = vadd.f32 %v1110, %v1016
        %v1130 = vmul.f32 %v1126, %v1129
        %v1131 = vadd.f32 %v1033, %v1130
        %v1132 = vtanh.pop %v1131
        %v1133 = vsub.f32 1.0, %v1128
        %v1134 = vmul.f32 %v1133, %v1132
        %v1135 = vmul.f32 %v1128, %v1025
        %v1136 = vadd.f32 %v1134, %v1135
        %v1137 = vpack.c.bf16 %v1136, %v1136
        %s1138 = scalar_lea.vmem %s336, 4 [#allocation15]
        %1139 = vst [vmem:[%s1138] sm:$0xf] %v1137
        %s1140 = smul.u32 2, 3
        %s1141 = smul.addr %s1140, 8
        %s1142 = scalar_lea.vmem [#allocation3], %s1141
        %v1143 = vld [vmem:[%s1142] sm:$0xff]
        %v1144 = vld [vmem:[%s1142 + $0x8] sm:$0xff]
        %v1145 = vld [vmem:[%s1142 + $0x10] sm:$0xff]
        %1146 = vmatprep.subr.bf16.mxu0 %v870
        %1147 = vmatpush1.bf16.msra.mxu0 %v869
        %1148 = vmatprep.subr.bf16.mxu0 %v873
        %1149 = vmatpush1.bf16.msra.mxu0 %v872
        %1150 = vmatprep.subr.bf16.mxu0 %v876
        %1151 = vmatpush1.bf16.msra.mxu0 %v875
        %1152 = vmatprep.subr.bf16.mxu0 %v879
        %1153 = vmatpush1.bf16.msra.mxu0 %v878
        %1154 = vmatprep.subr.bf16.mxu0 %v882
        %1155 = vmatpush1.bf16.msra.mxu0 %v881
        %1156 = vmatprep.subr.bf16.mxu0 %v885
        %1157 = vmatpush1.bf16.msra.mxu0 %v884
        %1158 = vmatprep.subr.bf16.mxu0 %v888
        %1159 = vmatpush1.bf16.msra.mxu0 %v887
        %1160 = vmatprep.subr.bf16.mxu0 %v891
        %1161 = vmatpush1.bf16.msra.mxu0 %v890
        %1162 = vmatprep.subr.bf16.mxu0 0
        %1163 = vmatpush1.bf16.msra.mxu0 0
        %1164 = vmatprep.subr.bf16.mxu0 0
        %1165 = vmatpush1.bf16.msra.mxu0 0
        %1166 = vmatprep.subr.bf16.mxu0 0
        %1167 = vmatpush1.bf16.msra.mxu0 0
        %1168 = vmatprep.subr.bf16.mxu0 0
        %1169 = vmatpush1.bf16.msra.mxu0 0
        %1170 = vmatprep.subr.bf16.mxu0 0
        %1171 = vmatpush1.bf16.msra.mxu0 0
        %1172 = vmatprep.subr.bf16.mxu0 0
        %1173 = vmatpush1.bf16.msra.mxu0 0
        %1174 = vmatprep.subr.bf16.mxu0 0
        %1175 = vmatpush1.bf16.msra.mxu0 0
        %1176 = vmatprep.subr.bf16.mxu0 0
        %1177 = vmatpush1.bf16.msra.mxu0 0
        %1178 = vmatprep.mubr.bf16.mxu0 0
        %1179 = vmatmul.mubr.bf16.gmra.mrb[0].mxu0 %v1137
        %v1180 = vpop.f32.mrb[0].mxu0
        %v1181 = vadd.f32 0.0, %v1180
        %v1182 = vpop.f32.mrb[0].mxu0
        %v1183 = vadd.f32 0.0, %v1182
        %v1184 = vpop.f32.mrb[0].mxu0
        %v1185 = vpop.f32.mrb[0].mxu0
        %1186 = vdwg.mxu0
        %1187 = vmatprep.subr.bf16.mxu0 0
        %1188 = vmatpush1.bf16.msra.mxu0 %v871
        %1189 = vmatprep.subr.bf16.mxu0 0
        %1190 = vmatpush1.bf16.msra.mxu0 %v874
        %1191 = vmatprep.subr.bf16.mxu0 0
        %1192 = vmatpush1.bf16.msra.mxu0 %v877
        %1193 = vmatprep.subr.bf16.mxu0 0
        %1194 = vmatpush1.bf16.msra.mxu0 %v880
        %1195 = vmatprep.subr.bf16.mxu0 0
        %1196 = vmatpush1.bf16.msra.mxu0 %v883
        %1197 = vmatprep.subr.bf16.mxu0 0
        %1198 = vmatpush1.bf16.msra.mxu0 %v886
        %1199 = vmatprep.subr.bf16.mxu0 0
        %1200 = vmatpush1.bf16.msra.mxu0 %v889
        %1201 = vmatprep.subr.bf16.mxu0 0
        %1202 = vmatpush1.bf16.msra.mxu0 %v892
        %1203 = vmatprep.subr.bf16.mxu0 0
        %1204 = vmatpush1.bf16.msra.mxu0 0
        %1205 = vmatprep.subr.bf16.mxu0 0
        %1206 = vmatpush1.bf16.msra.mxu0 0
        %1207 = vmatprep.subr.bf16.mxu0 0
        %1208 = vmatpush1.bf16.msra.mxu0 0
        %1209 = vmatprep.subr.bf16.mxu0 0
        %1210 = vmatpush1.bf16.msra.mxu0 0
        %1211 = vmatprep.subr.bf16.mxu0 0
        %1212 = vmatpush1.bf16.msra.mxu0 0
        %1213 = vmatprep.subr.bf16.mxu0 0
        %1214 = vmatpush1.bf16.msra.mxu0 0
        %1215 = vmatprep.subr.bf16.mxu0 0
        %1216 = vmatpush1.bf16.msra.mxu0 0
        %1217 = vmatprep.subr.bf16.mxu0 0
        %1218 = vmatpush1.bf16.msra.mxu0 0
        %1219 = vmatprep.mubr.bf16.mxu0 0
        %1220 = vmatmul.mubr.bf16.gmra.mrb[0].mxu0 %v1137
        %v1221 = vpop.f32.mrb[0].mxu0
        %v1222 = vadd.f32 0.0, %v1221
        %v1223 = vpop.f32.mrb[0].mxu0
        %v1224 = vpop.f32.mrb[0].mxu0
        %v1225 = vpop.f32.mrb[0].mxu0
        %1226 = vdwg.mxu0
        %v1227 = vadd.f32 %v1143, %v1181
        %v1228 = vadd.f32 %v1144, %v1183
        %v1229 = vxor.u32 %v1227, 2147483648
        %v1230 = vxor.u32 %v1228, 2147483648
        %v1231 = vmul.f32 %v1229, 1.442695
        %v1232 = vpow.pop %v1231
        %v1233 = vmul.f32 %v1230, 1.442695
        %v1234 = vpow.pop %v1233
        %v1235 = vadd.f32 %v1232, 1.0
        %v1236 = vadd.f32 %v1234, 1.0
        %v1237 = vrcp.pop %v1235
        %v1238 = vmul.f32 1.0, %v1237
        %v1239 = vrcp.pop %v1236
        %v1240 = vmul.f32 1.0, %v1239
        %v1241 = vadd.f32 %v1222, %v1016
        %v1242 = vmul.f32 %v1238, %v1241
        %v1243 = vadd.f32 %v1145, %v1242
        %v1244 = vtanh.pop %v1243
        %v1245 = vsub.f32 1.0, %v1240
        %v1246 = vmul.f32 %v1245, %v1244
        %v1247 = vmul.f32 %v1240, %v1136
        %v1248 = vadd.f32 %v1246, %v1247
        %v1249 = vpack.c.bf16 %v1248, %v1248
        %s1250 = scalar_lea.vmem %s336, 8 [#allocation15]
        %1251 = vst [vmem:[%s1250] sm:$0xf] %v1249
        %s1252 = smul.u32 3, 3
        %s1253 = smul.addr %s1252, 8
        %s1254 = scalar_lea.vmem [#allocation3], %s1253
        %v1255 = vld [vmem:[%s1254] sm:$0xff]
        %v1256 = vld [vmem:[%s1254 + $0x8] sm:$0xff]
        %v1257 = vld [vmem:[%s1254 + $0x10] sm:$0xff]
        %1258 = vmatprep.subr.bf16.mxu0 %v870
        %1259 = vmatpush1.bf16.msra.mxu0 %v869
        %1260 = vmatprep.subr.bf16.mxu0 %v873
        %1261 = vmatpush1.bf16.msra.mxu0 %v872
        %1262 = vmatprep.subr.bf16.mxu0 %v876
        %1263 = vmatpush1.bf16.msra.mxu0 %v875
        %1264 = vmatprep.subr.bf16.mxu0 %v879
        %1265 = vmatpush1.bf16.msra.mxu0 %v878
        %1266 = vmatprep.subr.bf16.mxu0 %v882
        %1267 = vmatpush1.bf16.msra.mxu0 %v881
        %1268 = vmatprep.subr.bf16.mxu0 %v885
        %1269 = vmatpush1.bf16.msra.mxu0 %v884
        %1270 = vmatprep.subr.bf16.mxu0 %v888
        %1271 = vmatpush1.bf16.msra.mxu0 %v887
        %1272 = vmatprep.subr.bf16.mxu0 %v891
        %1273 = vmatpush1.bf16.msra.mxu0 %v890
        %1274 = vmatprep.subr.bf16.mxu0 0
        %1275 = vmatpush1.bf16.msra.mxu0 0
        %1276 = vmatprep.subr.bf16.mxu0 0
        %1277 = vmatpush1.bf16.msra.mxu0 0
        %1278 = vmatprep.subr.bf16.mxu0 0
        %1279 = vmatpush1.bf16.msra.mxu0 0
        %1280 = vmatprep.subr.bf16.mxu0 0
        %1281 = vmatpush1.bf16.msra.mxu0 0
        %1282 = vmatprep.subr.bf16.mxu0 0
        %1283 = vmatpush1.bf16.msra.mxu0 0
        %1284 = vmatprep.subr.bf16.mxu0 0
        %1285 = vmatpush1.bf16.msra.mxu0 0
        %1286 = vmatprep.subr.bf16.mxu0 0
        %1287 = vmatpush1.bf16.msra.mxu0 0
        %1288 = vmatprep.subr.bf16.mxu0 0
        %1289 = vmatpush1.bf16.msra.mxu0 0
        %1290 = vmatprep.mubr.bf16.mxu0 0
        %1291 = vmatmul.mubr.bf16.gmra.mrb[0].mxu0 %v1249
        %v1292 = vpop.f32.mrb[0].mxu0
        %v1293 = vadd.f32 0.0, %v1292
        %v1294 = vpop.f32.mrb[0].mxu0
        %v1295 = vadd.f32 0.0, %v1294
        %v1296 = vpop.f32.mrb[0].mxu0
        %v1297 = vpop.f32.mrb[0].mxu0
        %1298 = vdwg.mxu0
        %1299 = vmatprep.subr.bf16.mxu0 0
        %1300 = vmatpush1.bf16.msra.mxu0 %v871
        %1301 = vmatprep.subr.bf16.mxu0 0
        %1302 = vmatpush1.bf16.msra.mxu0 %v874
        %1303 = vmatprep.subr.bf16.mxu0 0
        %1304 = vmatpush1.bf16.msra.mxu0 %v877
        %1305 = vmatprep.subr.bf16.mxu0 0
        %1306 = vmatpush1.bf16.msra.mxu0 %v880
        %1307 = vmatprep.subr.bf16.mxu0 0
        %1308 = vmatpush1.bf16.msra.mxu0 %v883
        %1309 = vmatprep.subr.bf16.mxu0 0
        %1310 = vmatpush1.bf16.msra.mxu0 %v886
        %1311 = vmatprep.subr.bf16.mxu0 0
        %1312 = vmatpush1.bf16.msra.mxu0 %v889
        %1313 = vmatprep.subr.bf16.mxu0 0
        %1314 = vmatpush1.bf16.msra.mxu0 %v892
        %1315 = vmatprep.subr.bf16.mxu0 0
        %1316 = vmatpush1.bf16.msra.mxu0 0
        %1317 = vmatprep.subr.bf16.mxu0 0
        %1318 = vmatpush1.bf16.msra.mxu0 0
        %1319 = vmatprep.subr.bf16.mxu0 0
        %1320 = vmatpush1.bf16.msra.mxu0 0
        %1321 = vmatprep.subr.bf16.mxu0 0
        %1322 = vmatpush1.bf16.msra.mxu0 0
        %1323 = vmatprep.subr.bf16.mxu0 0
        %1324 = vmatpush1.bf16.msra.mxu0 0
        %1325 = vmatprep.subr.bf16.mxu0 0
        %1326 = vmatpush1.bf16.msra.mxu0 0
        %1327 = vmatprep.subr.bf16.mxu0 0
        %1328 = vmatpush1.bf16.msra.mxu0 0
        %1329 = vmatprep.subr.bf16.mxu0 0
        %1330 = vmatpush1.bf16.msra.mxu0 0
        %1331 = vmatprep.mubr.bf16.mxu0 0
        %1332 = vmatmul.mubr.bf16.gmra.mrb[0].mxu0 %v1249
        %v1333 = vpop.f32.mrb[0].mxu0
        %v1334 = vadd.f32 0.0, %v1333
        %v1335 = vpop.f32.mrb[0].mxu0
        %v1336 = vpop.f32.mrb[0].mxu0
        %v1337 = vpop.f32.mrb[0].mxu0
        %1338 = vdwg.mxu0
        %v1339 = vadd.f32 %v1255, %v1293
        %v1340 = vadd.f32 %v1256, %v1295
        %v1341 = vxor.u32 %v1339, 2147483648
        %v1342 = vxor.u32 %v1340, 2147483648
        %v1343 = vmul.f32 %v1341, 1.442695
        %v1344 = vpow.pop %v1343
        %v1345 = vmul.f32 %v1342, 1.442695
        %v1346 = vpow.pop %v1345
        %v1347 = vadd.f32 %v1344, 1.0
        %v1348 = vadd.f32 %v1346, 1.0
        %v1349 = vrcp.pop %v1347
        %v1350 = vmul.f32 1.0, %v1349
        %v1351 = vrcp.pop %v1348
        %v1352 = vmul.f32 1.0, %v1351
        %v1353 = vadd.f32 %v1334, %v1016
        %v1354 = vmul.f32 %v1350, %v1353
        %v1355 = vadd.f32 %v1257, %v1354
        %v1356 = vtanh.pop %v1355
        %v1357 = vsub.f32 1.0, %v1352
        %v1358 = vmul.f32 %v1357, %v1356
        %v1359 = vmul.f32 %v1352, %v1248
        %v1360 = vadd.f32 %v1358, %v1359
        %v1361 = vpack.c.bf16 %v1360, %v1360
        %s1362 = scalar_lea.vmem %s336, 12 [#allocation15]
        %1363 = vst [vmem:[%s1362] sm:$0xf] %v1361
        %s1364 = smul.u32 4, 3
        %s1365 = smul.addr %s1364, 8
        %s1366 = scalar_lea.vmem [#allocation3], %s1365
        %v1367 = vld [vmem:[%s1366] sm:$0xff]
        %v1368 = vld [vmem:[%s1366 + $0x8] sm:$0xff]
        %v1369 = vld [vmem:[%s1366 + $0x10] sm:$0xff]
        %1370 = vmatprep.subr.bf16.mxu0 %v870
        %1371 = vmatpush1.bf16.msra.mxu0 %v869
        %1372 = vmatprep.subr.bf16.mxu0 %v873
        %1373 = vmatpush1.bf16.msra.mxu0 %v872
        %1374 = vmatprep.subr.bf16.mxu0 %v876
        %1375 = vmatpush1.bf16.msra.mxu0 %v875
        %1376 = vmatprep.subr.bf16.mxu0 %v879
        %1377 = vmatpush1.bf16.msra.mxu0 %v878
        %1378 = vmatprep.subr.bf16.mxu0 %v882
        %1379 = vmatpush1.bf16.msra.mxu0 %v881
        %1380 = vmatprep.subr.bf16.mxu0 %v885
        %1381 = vmatpush1.bf16.msra.mxu0 %v884
        %1382 = vmatprep.subr.bf16.mxu0 %v888
        %1383 = vmatpush1.bf16.msra.mxu0 %v887
        %1384 = vmatprep.subr.bf16.mxu0 %v891
        %1385 = vmatpush1.bf16.msra.mxu0 %v890
        %1386 = vmatprep.subr.bf16.mxu0 0
        %1387 = vmatpush1.bf16.msra.mxu0 0
        %1388 = vmatprep.subr.bf16.mxu0 0
        %1389 = vmatpush1.bf16.msra.mxu0 0
        %1390 = vmatprep.subr.bf16.mxu0 0
        %1391 = vmatpush1.bf16.msra.mxu0 0
        %1392 = vmatprep.subr.bf16.mxu0 0
        %1393 = vmatpush1.bf16.msra.mxu0 0
        %1394 = vmatprep.subr.bf16.mxu0 0
        %1395 = vmatpush1.bf16.msra.mxu0 0
        %1396 = vmatprep.subr.bf16.mxu0 0
        %1397 = vmatpush1.bf16.msra.mxu0 0
        %1398 = vmatprep.subr.bf16.mxu0 0
        %1399 = vmatpush1.bf16.msra.mxu0 0
        %1400 = vmatprep.subr.bf16.mxu0 0
        %1401 = vmatpush1.bf16.msra.mxu0 0
        %1402 = vmatprep.mubr.bf16.mxu0 0
        %1403 = vmatmul.mubr.bf16.gmra.mrb[0].mxu0 %v1361
        %v1404 = vpop.f32.mrb[0].mxu0
        %v1405 = vadd.f32 0.0, %v1404
        %v1406 = vpop.f32.mrb[0].mxu0
        %v1407 = vadd.f32 0.0, %v1406
        %v1408 = vpop.f32.mrb[0].mxu0
        %v1409 = vpop.f32.mrb[0].mxu0
        %1410 = vdwg.mxu0
        %1411 = vmatprep.subr.bf16.mxu0 0
        %1412 = vmatpush1.bf16.msra.mxu0 %v871
        %1413 = vmatprep.subr.bf16.mxu0 0
        %1414 = vmatpush1.bf16.msra.mxu0 %v874
        %1415 = vmatprep.subr.bf16.mxu0 0
        %1416 = vmatpush1.bf16.msra.mxu0 %v877
        %1417 = vmatprep.subr.bf16.mxu0 0
        %1418 = vmatpush1.bf16.msra.mxu0 %v880
        %1419 = vmatprep.subr.bf16.mxu0 0
        %1420 = vmatpush1.bf16.msra.mxu0 %v883
        %1421 = vmatprep.subr.bf16.mxu0 0
        %1422 = vmatpush1.bf16.msra.mxu0 %v886
        %1423 = vmatprep.subr.bf16.mxu0 0
        %1424 = vmatpush1.bf16.msra.mxu0 %v889
        %1425 = vmatprep.subr.bf16.mxu0 0
        %1426 = vmatpush1.bf16.msra.mxu0 %v892
        %1427 = vmatprep.subr.bf16.mxu0 0
        %1428 = vmatpush1.bf16.msra.mxu0 0
        %1429 = vmatprep.subr.bf16.mxu0 0
        %1430 = vmatpush1.bf16.msra.mxu0 0
        %1431 = vmatprep.subr.bf16.mxu0 0
        %1432 = vmatpush1.bf16.msra.mxu0 0
        %1433 = vmatprep.subr.bf16.mxu0 0
        %1434 = vmatpush1.bf16.msra.mxu0 0
        %1435 = vmatprep.subr.bf16.mxu0 0
        %1436 = vmatpush1.bf16.msra.mxu0 0
        %1437 = vmatprep.subr.bf16.mxu0 0
        %1438 = vmatpush1.bf16.msra.mxu0 0
        %1439 = vmatprep.subr.bf16.mxu0 0
        %1440 = vmatpush1.bf16.msra.mxu0 0
        %1441 = vmatprep.subr.bf16.mxu0 0
        %1442 = vmatpush1.bf16.msra.mxu0 0
        %1443 = vmatprep.mubr.bf16.mxu0 0
        %1444 = vmatmul.mubr.bf16.gmra.mrb[0].mxu0 %v1361
        %v1445 = vpop.f32.mrb[0].mxu0
        %v1446 = vadd.f32 0.0, %v1445
        %v1447 = vpop.f32.mrb[0].mxu0
        %v1448 = vpop.f32.mrb[0].mxu0
        %v1449 = vpop.f32.mrb[0].mxu0
        %1450 = vdwg.mxu0
        %v1451 = vadd.f32 %v1367, %v1405
        %v1452 = vadd.f32 %v1368, %v1407
        %v1453 = vxor.u32 %v1451, 2147483648
        %v1454 = vxor.u32 %v1452, 2147483648
        %v1455 = vmul.f32 %v1453, 1.442695
        %v1456 = vpow.pop %v1455
        %v1457 = vmul.f32 %v1454, 1.442695
        %v1458 = vpow.pop %v1457
        %v1459 = vadd.f32 %v1456, 1.0
        %v1460 = vadd.f32 %v1458, 1.0
        %v1461 = vrcp.pop %v1459
        %v1462 = vmul.f32 1.0, %v1461
        %v1463 = vrcp.pop %v1460
        %v1464 = vmul.f32 1.0, %v1463
        %v1465 = vadd.f32 %v1446, %v1016
        %v1466 = vmul.f32 %v1462, %v1465
        %v1467 = vadd.f32 %v1369, %v1466
        %v1468 = vtanh.pop %v1467
        %v1469 = vsub.f32 1.0, %v1464
        %v1470 = vmul.f32 %v1469, %v1468
        %v1471 = vmul.f32 %v1464, %v1360
        %v1472 = vadd.f32 %v1470, %v1471
        %v1473 = vpack.c.bf16 %v1472, %v1472
        %s1474 = scalar_lea.vmem %s336, 16 [#allocation15]
        %1475 = vst [vmem:[%s1474] sm:$0xf] %v1473
        %s1476 = smul.u32 5, 3
        %s1477 = smul.addr %s1476, 8
        %s1478 = scalar_lea.vmem [#allocation3], %s1477
        %v1479 = vld [vmem:[%s1478] sm:$0xff]
        %v1480 = vld [vmem:[%s1478 + $0x8] sm:$0xff]
        %v1481 = vld [vmem:[%s1478 + $0x10] sm:$0xff]
        %1482 = vmatprep.subr.bf16.mxu0 %v870
        %1483 = vmatpush1.bf16.msra.mxu0 %v869
        %1484 = vmatprep.subr.bf16.mxu0 %v873
        %1485 = vmatpush1.bf16.msra.mxu0 %v872
        %1486 = vmatprep.subr.bf16.mxu0 %v876
        %1487 = vmatpush1.bf16.msra.mxu0 %v875
        %1488 = vmatprep.subr.bf16.mxu0 %v879
        %1489 = vmatpush1.bf16.msra.mxu0 %v878
        %1490 = vmatprep.subr.bf16.mxu0 %v882
        %1491 = vmatpush1.bf16.msra.mxu0 %v881
        %1492 = vmatprep.subr.bf16.mxu0 %v885
        %1493 = vmatpush1.bf16.msra.mxu0 %v884
        %1494 = vmatprep.subr.bf16.mxu0 %v888
        %1495 = vmatpush1.bf16.msra.mxu0 %v887
        %1496 = vmatprep.subr.bf16.mxu0 %v891
        %1497 = vmatpush1.bf16.msra.mxu0 %v890
        %1498 = vmatprep.subr.bf16.mxu0 0
        %1499 = vmatpush1.bf16.msra.mxu0 0
        %1500 = vmatprep.subr.bf16.mxu0 0
        %1501 = vmatpush1.bf16.msra.mxu0 0
        %1502 = vmatprep.subr.bf16.mxu0 0
        %1503 = vmatpush1.bf16.msra.mxu0 0
        %1504 = vmatprep.subr.bf16.mxu0 0
        %1505 = vmatpush1.bf16.msra.mxu0 0
        %1506 = vmatprep.subr.bf16.mxu0 0
        %1507 = vmatpush1.bf16.msra.mxu0 0
        %1508 = vmatprep.subr.bf16.mxu0 0
        %1509 = vmatpush1.bf16.msra.mxu0 0
        %1510 = vmatprep.subr.bf16.mxu0 0
        %1511 = vmatpush1.bf16.msra.mxu0 0
        %1512 = vmatprep.subr.bf16.mxu0 0
        %1513 = vmatpush1.bf16.msra.mxu0 0
        %1514 = vmatprep.mubr.bf16.mxu0 0
        %1515 = vmatmul.mubr.bf16.gmra.mrb[0].mxu0 %v1473
        %v1516 = vpop.f32.mrb[0].mxu0
        %v1517 = vadd.f32 0.0, %v1516
        %v1518 = vpop.f32.mrb[0].mxu0
        %v1519 = vadd.f32 0.0, %v1518
        %v1520 = vpop.f32.mrb[0].mxu0
        %v1521 = vpop.f32.mrb[0].mxu0
        %1522 = vdwg.mxu0
        %1523 = vmatprep.subr.bf16.mxu0 0
        %1524 = vmatpush1.bf16.msra.mxu0 %v871
        %1525 = vmatprep.subr.bf16.mxu0 0
        %1526 = vmatpush1.bf16.msra.mxu0 %v874
        %1527 = vmatprep.subr.bf16.mxu0 0
        %1528 = vmatpush1.bf16.msra.mxu0 %v877
        %1529 = vmatprep.subr.bf16.mxu0 0
        %1530 = vmatpush1.bf16.msra.mxu0 %v880
        %1531 = vmatprep.subr.bf16.mxu0 0
        %1532 = vmatpush1.bf16.msra.mxu0 %v883
        %1533 = vmatprep.subr.bf16.mxu0 0
        %1534 = vmatpush1.bf16.msra.mxu0 %v886
        %1535 = vmatprep.subr.bf16.mxu0 0
        %1536 = vmatpush1.bf16.msra.mxu0 %v889
        %1537 = vmatprep.subr.bf16.mxu0 0
        %1538 = vmatpush1.bf16.msra.mxu0 %v892
        %1539 = vmatprep.subr.bf16.mxu0 0
        %1540 = vmatpush1.bf16.msra.mxu0 0
        %1541 = vmatprep.subr.bf16.mxu0 0
        %1542 = vmatpush1.bf16.msra.mxu0 0
        %1543 = vmatprep.subr.bf16.mxu0 0
        %1544 = vmatpush1.bf16.msra.mxu0 0
        %1545 = vmatprep.subr.bf16.mxu0 0
        %1546 = vmatpush1.bf16.msra.mxu0 0
        %1547 = vmatprep.subr.bf16.mxu0 0
        %1548 = vmatpush1.bf16.msra.mxu0 0
        %1549 = vmatprep.subr.bf16.mxu0 0
        %1550 = vmatpush1.bf16.msra.mxu0 0
        %1551 = vmatprep.subr.bf16.mxu0 0
        %1552 = vmatpush1.bf16.msra.mxu0 0
        %1553 = vmatprep.subr.bf16.mxu0 0
        %1554 = vmatpush1.bf16.msra.mxu0 0
        %1555 = vmatprep.mubr.bf16.mxu0 0
        %1556 = vmatmul.mubr.bf16.gmra.mrb[0].mxu0 %v1473
        %v1557 = vpop.f32.mrb[0].mxu0
        %v1558 = vadd.f32 0.0, %v1557
        %v1559 = vpop.f32.mrb[0].mxu0
        %v1560 = vpop.f32.mrb[0].mxu0
        %v1561 = vpop.f32.mrb[0].mxu0
        %1562 = vdwg.mxu0
        %v1563 = vadd.f32 %v1479, %v1517
        %v1564 = vadd.f32 %v1480, %v1519
        %v1565 = vxor.u32 %v1563, 2147483648
        %v1566 = vxor.u32 %v1564, 2147483648
        %v1567 = vmul.f32 %v1565, 1.442695
        %v1568 = vpow.pop %v1567
        %v1569 = vmul.f32 %v1566, 1.442695
        %v1570 = vpow.pop %v1569
        %v1571 = vadd.f32 %v1568, 1.0
        %v1572 = vadd.f32 %v1570, 1.0
        %v1573 = vrcp.pop %v1571
        %v1574 = vmul.f32 1.0, %v1573
        %v1575 = vrcp.pop %v1572
        %v1576 = vmul.f32 1.0, %v1575
        %v1577 = vadd.f32 %v1558, %v1016
        %v1578 = vmul.f32 %v1574, %v1577
        %v1579 = vadd.f32 %v1481, %v1578
        %v1580 = vtanh.pop %v1579
        %v1581 = vsub.f32 1.0, %v1576
        %v1582 = vmul.f32 %v1581, %v1580
        %v1583 = vmul.f32 %v1576, %v1472
        %v1584 = vadd.f32 %v1582, %v1583
        %v1585 = vpack.c.bf16 %v1584, %v1584
        %s1586 = scalar_lea.vmem %s336, 20 [#allocation15]
        %1587 = vst [vmem:[%s1586] sm:$0xf] %v1585
        %s1588 = smul.u32 6, 3
        %s1589 = smul.addr %s1588, 8
        %s1590 = scalar_lea.vmem [#allocation3], %s1589
        %v1591 = vld [vmem:[%s1590] sm:$0xff]
        %v1592 = vld [vmem:[%s1590 + $0x8] sm:$0xff]
        %v1593 = vld [vmem:[%s1590 + $0x10] sm:$0xff]
        %1594 = vmatprep.subr.bf16.mxu0 %v870
        %1595 = vmatpush1.bf16.msra.mxu0 %v869
        %1596 = vmatprep.subr.bf16.mxu0 %v873
        %1597 = vmatpush1.bf16.msra.mxu0 %v872
        %1598 = vmatprep.subr.bf16.mxu0 %v876
        %1599 = vmatpush1.bf16.msra.mxu0 %v875
        %1600 = vmatprep.subr.bf16.mxu0 %v879
        %1601 = vmatpush1.bf16.msra.mxu0 %v878
        %1602 = vmatprep.subr.bf16.mxu0 %v882
        %1603 = vmatpush1.bf16.msra.mxu0 %v881
        %1604 = vmatprep.subr.bf16.mxu0 %v885
        %1605 = vmatpush1.bf16.msra.mxu0 %v884
        %1606 = vmatprep.subr.bf16.mxu0 %v888
        %1607 = vmatpush1.bf16.msra.mxu0 %v887
        %1608 = vmatprep.subr.bf16.mxu0 %v891
        %1609 = vmatpush1.bf16.msra.mxu0 %v890
        %1610 = vmatprep.subr.bf16.mxu0 0
        %1611 = vmatpush1.bf16.msra.mxu0 0
        %1612 = vmatprep.subr.bf16.mxu0 0
        %1613 = vmatpush1.bf16.msra.mxu0 0
        %1614 = vmatprep.subr.bf16.mxu0 0
        %1615 = vmatpush1.bf16.msra.mxu0 0
        %1616 = vmatprep.subr.bf16.mxu0 0
        %1617 = vmatpush1.bf16.msra.mxu0 0
        %1618 = vmatprep.subr.bf16.mxu0 0
        %1619 = vmatpush1.bf16.msra.mxu0 0
        %1620 = vmatprep.subr.bf16.mxu0 0
        %1621 = vmatpush1.bf16.msra.mxu0 0
        %1622 = vmatprep.subr.bf16.mxu0 0
        %1623 = vmatpush1.bf16.msra.mxu0 0
        %1624 = vmatprep.subr.bf16.mxu0 0
        %1625 = vmatpush1.bf16.msra.mxu0 0
        %1626 = vmatprep.mubr.bf16.mxu0 0
        %1627 = vmatmul.mubr.bf16.gmra.mrb[0].mxu0 %v1585
        %v1628 = vpop.f32.mrb[0].mxu0
        %v1629 = vadd.f32 0.0, %v1628
        %v1630 = vpop.f32.mrb[0].mxu0
        %v1631 = vadd.f32 0.0, %v1630
        %v1632 = vpop.f32.mrb[0].mxu0
        %v1633 = vpop.f32.mrb[0].mxu0
        %1634 = vdwg.mxu0
        %1635 = vmatprep.subr.bf16.mxu0 0
        %1636 = vmatpush1.bf16.msra.mxu0 %v871
        %1637 = vmatprep.subr.bf16.mxu0 0
        %1638 = vmatpush1.bf16.msra.mxu0 %v874
        %1639 = vmatprep.subr.bf16.mxu0 0
        %1640 = vmatpush1.bf16.msra.mxu0 %v877
        %1641 = vmatprep.subr.bf16.mxu0 0
        %1642 = vmatpush1.bf16.msra.mxu0 %v880
        %1643 = vmatprep.subr.bf16.mxu0 0
        %1644 = vmatpush1.bf16.msra.mxu0 %v883
        %1645 = vmatprep.subr.bf16.mxu0 0
        %1646 = vmatpush1.bf16.msra.mxu0 %v886
        %1647 = vmatprep.subr.bf16.mxu0 0
        %1648 = vmatpush1.bf16.msra.mxu0 %v889
        %1649 = vmatprep.subr.bf16.mxu0 0
        %1650 = vmatpush1.bf16.msra.mxu0 %v892
        %1651 = vmatprep.subr.bf16.mxu0 0
        %1652 = vmatpush1.bf16.msra.mxu0 0
        %1653 = vmatprep.subr.bf16.mxu0 0
        %1654 = vmatpush1.bf16.msra.mxu0 0
        %1655 = vmatprep.subr.bf16.mxu0 0
        %1656 = vmatpush1.bf16.msra.mxu0 0
        %1657 = vmatprep.subr.bf16.mxu0 0
        %1658 = vmatpush1.bf16.msra.mxu0 0
        %1659 = vmatprep.subr.bf16.mxu0 0
        %1660 = vmatpush1.bf16.msra.mxu0 0
        %1661 = vmatprep.subr.bf16.mxu0 0
        %1662 = vmatpush1.bf16.msra.mxu0 0
        %1663 = vmatprep.subr.bf16.mxu0 0
        %1664 = vmatpush1.bf16.msra.mxu0 0
        %1665 = vmatprep.subr.bf16.mxu0 0
        %1666 = vmatpush1.bf16.msra.mxu0 0
        %1667 = vmatprep.mubr.bf16.mxu0 0
        %1668 = vmatmul.mubr.bf16.gmra.mrb[0].mxu0 %v1585
        %v1669 = vpop.f32.mrb[0].mxu0
        %v1670 = vadd.f32 0.0, %v1669
        %v1671 = vpop.f32.mrb[0].mxu0
        %v1672 = vpop.f32.mrb[0].mxu0
        %v1673 = vpop.f32.mrb[0].mxu0
        %1674 = vdwg.mxu0
        %v1675 = vadd.f32 %v1591, %v1629
        %v1676 = vadd.f32 %v1592, %v1631
        %v1677 = vxor.u32 %v1675, 2147483648
        %v1678 = vxor.u32 %v1676, 2147483648
        %v1679 = vmul.f32 %v1677, 1.442695
        %v1680 = vpow.pop %v1679
        %v1681 = vmul.f32 %v1678, 1.442695
        %v1682 = vpow.pop %v1681
        %v1683 = vadd.f32 %v1680, 1.0
        %v1684 = vadd.f32 %v1682, 1.0
        %v1685 = vrcp.pop %v1683
        %v1686 = vmul.f32 1.0, %v1685
        %v1687 = vrcp.pop %v1684
        %v1688 = vmul.f32 1.0, %v1687
        %v1689 = vadd.f32 %v1670, %v1016
        %v1690 = vmul.f32 %v1686, %v1689
        %v1691 = vadd.f32 %v1593, %v1690
        %v1692 = vtanh.pop %v1691
        %v1693 = vsub.f32 1.0, %v1688
        %v1694 = vmul.f32 %v1693, %v1692
        %v1695 = vmul.f32 %v1688, %v1584
        %v1696 = vadd.f32 %v1694, %v1695
        %v1697 = vpack.c.bf16 %v1696, %v1696
        %s1698 = scalar_lea.vmem %s336, 24 [#allocation15]
        %1699 = vst [vmem:[%s1698] sm:$0xf] %v1697
        %s1700 = smul.u32 7, 3
        %s1701 = smul.addr %s1700, 8
        %s1702 = scalar_lea.vmem [#allocation3], %s1701
        %v1703 = vld [vmem:[%s1702] sm:$0xff]
        %v1704 = vld [vmem:[%s1702 + $0x8] sm:$0xff]
        %v1705 = vld [vmem:[%s1702 + $0x10] sm:$0xff]
        %1706 = vmatprep.subr.bf16.mxu0 %v870
        %1707 = vmatpush1.bf16.msra.mxu0 %v869
        %1708 = vmatprep.subr.bf16.mxu0 %v873
        %1709 = vmatpush1.bf16.msra.mxu0 %v872
        %1710 = vmatprep.subr.bf16.mxu0 %v876
        %1711 = vmatpush1.bf16.msra.mxu0 %v875
        %1712 = vmatprep.subr.bf16.mxu0 %v879
        %1713 = vmatpush1.bf16.msra.mxu0 %v878
        %1714 = vmatprep.subr.bf16.mxu0 %v882
        %1715 = vmatpush1.bf16.msra.mxu0 %v881
        %1716 = vmatprep.subr.bf16.mxu0 %v885
        %1717 = vmatpush1.bf16.msra.mxu0 %v884
        %1718 = vmatprep.subr.bf16.mxu0 %v888
        %1719 = vmatpush1.bf16.msra.mxu0 %v887
        %1720 = vmatprep.subr.bf16.mxu0 %v891
        %1721 = vmatpush1.bf16.msra.mxu0 %v890
        %1722 = vmatprep.subr.bf16.mxu0 0
        %1723 = vmatpush1.bf16.msra.mxu0 0
        %1724 = vmatprep.subr.bf16.mxu0 0
        %1725 = vmatpush1.bf16.msra.mxu0 0
        %1726 = vmatprep.subr.bf16.mxu0 0
        %1727 = vmatpush1.bf16.msra.mxu0 0
        %1728 = vmatprep.subr.bf16.mxu0 0
        %1729 = vmatpush1.bf16.msra.mxu0 0
        %1730 = vmatprep.subr.bf16.mxu0 0
        %1731 = vmatpush1.bf16.msra.mxu0 0
        %1732 = vmatprep.subr.bf16.mxu0 0
        %1733 = vmatpush1.bf16.msra.mxu0 0
        %1734 = vmatprep.subr.bf16.mxu0 0
        %1735 = vmatpush1.bf16.msra.mxu0 0
        %1736 = vmatprep.subr.bf16.mxu0 0
        %1737 = vmatpush1.bf16.msra.mxu0 0
        %1738 = vmatprep.mubr.bf16.mxu0 0
        %1739 = vmatmul.mubr.bf16.gmra.mrb[0].mxu0 %v1697
        %v1740 = vpop.f32.mrb[0].mxu0
        %v1741 = vadd.f32 0.0, %v1740
        %v1742 = vpop.f32.mrb[0].mxu0
        %v1743 = vadd.f32 0.0, %v1742
        %v1744 = vpop.f32.mrb[0].mxu0
        %v1745 = vpop.f32.mrb[0].mxu0
        %1746 = vdwg.mxu0
        %1747 = vmatprep.subr.bf16.mxu0 0
        %1748 = vmatpush1.bf16.msra.mxu0 %v871
        %1749 = vmatprep.subr.bf16.mxu0 0
        %1750 = vmatpush1.bf16.msra.mxu0 %v874
        %1751 = vmatprep.subr.bf16.mxu0 0
        %1752 = vmatpush1.bf16.msra.mxu0 %v877
        %1753 = vmatprep.subr.bf16.mxu0 0
        %1754 = vmatpush1.bf16.msra.mxu0 %v880
        %1755 = vmatprep.subr.bf16.mxu0 0
        %1756 = vmatpush1.bf16.msra.mxu0 %v883
        %1757 = vmatprep.subr.bf16.mxu0 0
        %1758 = vmatpush1.bf16.msra.mxu0 %v886
        %1759 = vmatprep.subr.bf16.mxu0 0
        %1760 = vmatpush1.bf16.msra.mxu0 %v889
        %1761 = vmatprep.subr.bf16.mxu0 0
        %1762 = vmatpush1.bf16.msra.mxu0 %v892
        %1763 = vmatprep.subr.bf16.mxu0 0
        %1764 = vmatpush1.bf16.msra.mxu0 0
        %1765 = vmatprep.subr.bf16.mxu0 0
        %1766 = vmatpush1.bf16.msra.mxu0 0
        %1767 = vmatprep.subr.bf16.mxu0 0
        %1768 = vmatpush1.bf16.msra.mxu0 0
        %1769 = vmatprep.subr.bf16.mxu0 0
        %1770 = vmatpush1.bf16.msra.mxu0 0
        %1771 = vmatprep.subr.bf16.mxu0 0
        %1772 = vmatpush1.bf16.msra.mxu0 0
        %1773 = vmatprep.subr.bf16.mxu0 0
        %1774 = vmatpush1.bf16.msra.mxu0 0
        %1775 = vmatprep.subr.bf16.mxu0 0
        %1776 = vmatpush1.bf16.msra.mxu0 0
        %1777 = vmatprep.subr.bf16.mxu0 0
        %1778 = vmatpush1.bf16.msra.mxu0 0
        %1779 = vmatprep.mubr.bf16.mxu0 0
        %1780 = vmatmul.mubr.bf16.gmra.mrb[0].mxu0 %v1697
        %v1781 = vpop.f32.mrb[0].mxu0
        %v1782 = vadd.f32 0.0, %v1781
        %v1783 = vpop.f32.mrb[0].mxu0
        %v1784 = vpop.f32.mrb[0].mxu0
        %v1785 = vpop.f32.mrb[0].mxu0
        %1786 = vdwg.mxu0
        %v1787 = vadd.f32 %v1703, %v1741
        %v1788 = vadd.f32 %v1704, %v1743
        %v1789 = vxor.u32 %v1787, 2147483648
        %v1790 = vxor.u32 %v1788, 2147483648
        %v1791 = vmul.f32 %v1789, 1.442695
        %v1792 = vpow.pop %v1791
        %v1793 = vmul.f32 %v1790, 1.442695
        %v1794 = vpow.pop %v1793
        %v1795 = vadd.f32 %v1792, 1.0
        %v1796 = vadd.f32 %v1794, 1.0
        %v1797 = vrcp.pop %v1795
        %v1798 = vmul.f32 1.0, %v1797
        %v1799 = vrcp.pop %v1796
        %v1800 = vmul.f32 1.0, %v1799
        %v1801 = vadd.f32 %v1782, %v1016
        %v1802 = vmul.f32 %v1798, %v1801
        %v1803 = vadd.f32 %v1705, %v1802
        %v1804 = vtanh.pop %v1803
        %v1805 = vsub.f32 1.0, %v1800
        %v1806 = vmul.f32 %v1805, %v1804
        %v1807 = vmul.f32 %v1800, %v1696
        %v1808 = vadd.f32 %v1806, %v1807
        %v1809 = vpack.c.bf16 %v1808, %v1808
        %s1810 = scalar_lea.vmem %s336, 28 [#allocation15]
        %1811 = vst [vmem:[%s1810] sm:$0xf] %v1809
        %s1812 = smul.u32 8, 3
        %s1813 = smul.addr %s1812, 8
        %s1814 = scalar_lea.vmem [#allocation3], %s1813
        %v1815 = vld [vmem:[%s1814] sm:$0xff]
        %v1816 = vld [vmem:[%s1814 + $0x8] sm:$0xff]
        %v1817 = vld [vmem:[%s1814 + $0x10] sm:$0xff]
        %1818 = vmatprep.subr.bf16.mxu0 %v870
        %1819 = vmatpush1.bf16.msra.mxu0 %v869
        %1820 = vmatprep.subr.bf16.mxu0 %v873
        %1821 = vmatpush1.bf16.msra.mxu0 %v872
        %1822 = vmatprep.subr.bf16.mxu0 %v876
        %1823 = vmatpush1.bf16.msra.mxu0 %v875
        %1824 = vmatprep.subr.bf16.mxu0 %v879
        %1825 = vmatpush1.bf16.msra.mxu0 %v878
        %1826 = vmatprep.subr.bf16.mxu0 %v882
        %1827 = vmatpush1.bf16.msra.mxu0 %v881
        %1828 = vmatprep.subr.bf16.mxu0 %v885
        %1829 = vmatpush1.bf16.msra.mxu0 %v884
        %1830 = vmatprep.subr.bf16.mxu0 %v888
        %1831 = vmatpush1.bf16.msra.mxu0 %v887
        %1832 = vmatprep.subr.bf16.mxu0 %v891
        %1833 = vmatpush1.bf16.msra.mxu0 %v890
        %1834 = vmatprep.subr.bf16.mxu0 0
        %1835 = vmatpush1.bf16.msra.mxu0 0
        %1836 = vmatprep.subr.bf16.mxu0 0
        %1837 = vmatpush1.bf16.msra.mxu0 0
        %1838 = vmatprep.subr.bf16.mxu0 0
        %1839 = vmatpush1.bf16.msra.mxu0 0
        %1840 = vmatprep.subr.bf16.mxu0 0
        %1841 = vmatpush1.bf16.msra.mxu0 0
        %1842 = vmatprep.subr.bf16.mxu0 0
        %1843 = vmatpush1.bf16.msra.mxu0 0
        %1844 = vmatprep.subr.bf16.mxu0 0
        %1845 = vmatpush1.bf16.msra.mxu0 0
        %1846 = vmatprep.subr.bf16.mxu0 0
        %1847 = vmatpush1.bf16.msra.mxu0 0
        %1848 = vmatprep.subr.bf16.mxu0 0
        %1849 = vmatpush1.bf16.msra.mxu0 0
        %1850 = vmatprep.mubr.bf16.mxu0 0
        %1851 = vmatmul.mubr.bf16.gmra.mrb[0].mxu0 %v1809
        %v1852 = vpop.f32.mrb[0].mxu0
        %v1853 = vadd.f32 0.0, %v1852
        %v1854 = vpop.f32.mrb[0].mxu0
        %v1855 = vadd.f32 0.0, %v1854
        %v1856 = vpop.f32.mrb[0].mxu0
        %v1857 = vpop.f32.mrb[0].mxu0
        %1858 = vdwg.mxu0
        %1859 = vmatprep.subr.bf16.mxu0 0
        %1860 = vmatpush1.bf16.msra.mxu0 %v871
        %1861 = vmatprep.subr.bf16.mxu0 0
        %1862 = vmatpush1.bf16.msra.mxu0 %v874
        %1863 = vmatprep.subr.bf16.mxu0 0
        %1864 = vmatpush1.bf16.msra.mxu0 %v877
        %1865 = vmatprep.subr.bf16.mxu0 0
        %1866 = vmatpush1.bf16.msra.mxu0 %v880
        %1867 = vmatprep.subr.bf16.mxu0 0
        %1868 = vmatpush1.bf16.msra.mxu0 %v883
        %1869 = vmatprep.subr.bf16.mxu0 0
        %1870 = vmatpush1.bf16.msra.mxu0 %v886
        %1871 = vmatprep.subr.bf16.mxu0 0
        %1872 = vmatpush1.bf16.msra.mxu0 %v889
        %1873 = vmatprep.subr.bf16.mxu0 0
        %1874 = vmatpush1.bf16.msra.mxu0 %v892
        %1875 = vmatprep.subr.bf16.mxu0 0
        %1876 = vmatpush1.bf16.msra.mxu0 0
        %1877 = vmatprep.subr.bf16.mxu0 0
        %1878 = vmatpush1.bf16.msra.mxu0 0
        %1879 = vmatprep.subr.bf16.mxu0 0
        %1880 = vmatpush1.bf16.msra.mxu0 0
        %1881 = vmatprep.subr.bf16.mxu0 0
        %1882 = vmatpush1.bf16.msra.mxu0 0
        %1883 = vmatprep.subr.bf16.mxu0 0
        %1884 = vmatpush1.bf16.msra.mxu0 0
        %1885 = vmatprep.subr.bf16.mxu0 0
        %1886 = vmatpush1.bf16.msra.mxu0 0
        %1887 = vmatprep.subr.bf16.mxu0 0
        %1888 = vmatpush1.bf16.msra.mxu0 0
        %1889 = vmatprep.subr.bf16.mxu0 0
        %1890 = vmatpush1.bf16.msra.mxu0 0
        %1891 = vmatprep.mubr.bf16.mxu0 0
        %1892 = vmatmul.mubr.bf16.gmra.mrb[0].mxu0 %v1809
        %v1893 = vpop.f32.mrb[0].mxu0
        %v1894 = vadd.f32 0.0, %v1893
        %v1895 = vpop.f32.mrb[0].mxu0
        %v1896 = vpop.f32.mrb[0].mxu0
        %v1897 = vpop.f32.mrb[0].mxu0
        %1898 = vdwg.mxu0
        %v1899 = vadd.f32 %v1815, %v1853
        %v1900 = vadd.f32 %v1816, %v1855
        %v1901 = vxor.u32 %v1899, 2147483648
        %v1902 = vxor.u32 %v1900, 2147483648
        %v1903 = vmul.f32 %v1901, 1.442695
        %v1904 = vpow.pop %v1903
        %v1905 = vmul.f32 %v1902, 1.442695
        %v1906 = vpow.pop %v1905
        %v1907 = vadd.f32 %v1904, 1.0
        %v1908 = vadd.f32 %v1906, 1.0
        %v1909 = vrcp.pop %v1907
        %v1910 = vmul.f32 1.0, %v1909
        %v1911 = vrcp.pop %v1908
        %v1912 = vmul.f32 1.0, %v1911
        %v1913 = vadd.f32 %v1894, %v1016
        %v1914 = vmul.f32 %v1910, %v1913
        %v1915 = vadd.f32 %v1817, %v1914
        %v1916 = vtanh.pop %v1915
        %v1917 = vsub.f32 1.0, %v1912
        %v1918 = vmul.f32 %v1917, %v1916
        %v1919 = vmul.f32 %v1912, %v1808
        %v1920 = vadd.f32 %v1918, %v1919
        %v1921 = vpack.c.bf16 %v1920, %v1920
        %s1922 = scalar_lea.vmem %s336, 32 [#allocation15]
        %1923 = vst [vmem:[%s1922] sm:$0xf] %v1921
        %s1924 = smul.u32 9, 3
        %s1925 = smul.addr %s1924, 8
        %s1926 = scalar_lea.vmem [#allocation3], %s1925
        %v1927 = vld [vmem:[%s1926] sm:$0xff]
        %v1928 = vld [vmem:[%s1926 + $0x8] sm:$0xff]
        %v1929 = vld [vmem:[%s1926 + $0x10] sm:$0xff]
        %1930 = vmatprep.subr.bf16.mxu0 %v870
        %1931 = vmatpush1.bf16.msra.mxu0 %v869
        %1932 = vmatprep.subr.bf16.mxu0 %v873
        %1933 = vmatpush1.bf16.msra.mxu0 %v872
        %1934 = vmatprep.subr.bf16.mxu0 %v876
        %1935 = vmatpush1.bf16.msra.mxu0 %v875
        %1936 = vmatprep.subr.bf16.mxu0 %v879
        %1937 = vmatpush1.bf16.msra.mxu0 %v878
        %1938 = vmatprep.subr.bf16.mxu0 %v882
        %1939 = vmatpush1.bf16.msra.mxu0 %v881
        %1940 = vmatprep.subr.bf16.mxu0 %v885
        %1941 = vmatpush1.bf16.msra.mxu0 %v884
        %1942 = vmatprep.subr.bf16.mxu0 %v888
        %1943 = vmatpush1.bf16.msra.mxu0 %v887
        %1944 = vmatprep.subr.bf16.mxu0 %v891
        %1945 = vmatpush1.bf16.msra.mxu0 %v890
        %1946 = vmatprep.subr.bf16.mxu0 0
        %1947 = vmatpush1.bf16.msra.mxu0 0
        %1948 = vmatprep.subr.bf16.mxu0 0
        %1949 = vmatpush1.bf16.msra.mxu0 0
        %1950 = vmatprep.subr.bf16.mxu0 0
        %1951 = vmatpush1.bf16.msra.mxu0 0
        %1952 = vmatprep.subr.bf16.mxu0 0
        %1953 = vmatpush1.bf16.msra.mxu0 0
        %1954 = vmatprep.subr.bf16.mxu0 0
        %1955 = vmatpush1.bf16.msra.mxu0 0
        %1956 = vmatprep.subr.bf16.mxu0 0
        %1957 = vmatpush1.bf16.msra.mxu0 0
        %1958 = vmatprep.subr.bf16.mxu0 0
        %1959 = vmatpush1.bf16.msra.mxu0 0
        %1960 = vmatprep.subr.bf16.mxu0 0
        %1961 = vmatpush1.bf16.msra.mxu0 0
        %1962 = vmatprep.mubr.bf16.mxu0 0
        %1963 = vmatmul.mubr.bf16.gmra.mrb[0].mxu0 %v1921
        %v1964 = vpop.f32.mrb[0].mxu0
        %v1965 = vadd.f32 0.0, %v1964
        %v1966 = vpop.f32.mrb[0].mxu0
        %v1967 = vadd.f32 0.0, %v1966
        %v1968 = vpop.f32.mrb[0].mxu0
        %v1969 = vpop.f32.mrb[0].mxu0
        %1970 = vdwg.mxu0
        %1971 = vmatprep.subr.bf16.mxu0 0
        %1972 = vmatpush1.bf16.msra.mxu0 %v871
        %1973 = vmatprep.subr.bf16.mxu0 0
        %1974 = vmatpush1.bf16.msra.mxu0 %v874
        %1975 = vmatprep.subr.bf16.mxu0 0
        %1976 = vmatpush1.bf16.msra.mxu0 %v877
        %1977 = vmatprep.subr.bf16.mxu0 0
        %1978 = vmatpush1.bf16.msra.mxu0 %v880
        %1979 = vmatprep.subr.bf16.mxu0 0
        %1980 = vmatpush1.bf16.msra.mxu0 %v883
        %1981 = vmatprep.subr.bf16.mxu0 0
        %1982 = vmatpush1.bf16.msra.mxu0 %v886
        %1983 = vmatprep.subr.bf16.mxu0 0
        %1984 = vmatpush1.bf16.msra.mxu0 %v889
        %1985 = vmatprep.subr.bf16.mxu0 0
        %1986 = vmatpush1.bf16.msra.mxu0 %v892
        %1987 = vmatprep.subr.bf16.mxu0 0
        %1988 = vmatpush1.bf16.msra.mxu0 0
        %1989 = vmatprep.subr.bf16.mxu0 0
        %1990 = vmatpush1.bf16.msra.mxu0 0
        %1991 = vmatprep.subr.bf16.mxu0 0
        %1992 = vmatpush1.bf16.msra.mxu0 0
        %1993 = vmatprep.subr.bf16.mxu0 0
        %1994 = vmatpush1.bf16.msra.mxu0 0
        %1995 = vmatprep.subr.bf16.mxu0 0
        %1996 = vmatpush1.bf16.msra.mxu0 0
        %1997 = vmatprep.subr.bf16.mxu0 0
        %1998 = vmatpush1.bf16.msra.mxu0 0
        %1999 = vmatprep.subr.bf16.mxu0 0
        %2000 = vmatpush1.bf16.msra.mxu0 0
        %2001 = vmatprep.subr.bf16.mxu0 0
        %2002 = vmatpush1.bf16.msra.mxu0 0
        %2003 = vmatprep.mubr.bf16.mxu0 0
        %2004 = vmatmul.mubr.bf16.gmra.mrb[0].mxu0 %v1921
        %v2005 = vpop.f32.mrb[0].mxu0
        %v2006 = vadd.f32 0.0, %v2005
        %v2007 = vpop.f32.mrb[0].mxu0
        %v2008 = vpop.f32.mrb[0].mxu0
        %v2009 = vpop.f32.mrb[0].mxu0
        %2010 = vdwg.mxu0
        %v2011 = vadd.f32 %v1927, %v1965
        %v2012 = vadd.f32 %v1928, %v1967
        %v2013 = vxor.u32 %v2011, 2147483648
        %v2014 = vxor.u32 %v2012, 2147483648
        %v2015 = vmul.f32 %v2013, 1.442695
        %v2016 = vpow.pop %v2015
        %v2017 = vmul.f32 %v2014, 1.442695
        %v2018 = vpow.pop %v2017
        %v2019 = vadd.f32 %v2016, 1.0
        %v2020 = vadd.f32 %v2018, 1.0
        %v2021 = vrcp.pop %v2019
        %v2022 = vmul.f32 1.0, %v2021
        %v2023 = vrcp.pop %v2020
        %v2024 = vmul.f32 1.0, %v2023
        %v2025 = vadd.f32 %v2006, %v1016
        %v2026 = vmul.f32 %v2022, %v2025
        %v2027 = vadd.f32 %v1929, %v2026
        %v2028 = vtanh.pop %v2027
        %v2029 = vsub.f32 1.0, %v2024
        %v2030 = vmul.f32 %v2029, %v2028
        %v2031 = vmul.f32 %v2024, %v1920
        %v2032 = vadd.f32 %v2030, %v2031
        %v2033 = vpack.c.bf16 %v2032, %v2032
        %s2034 = scalar_lea.vmem %s336, 36 [#allocation15]
        %2035 = vst [vmem:[%s2034] sm:$0xf] %v2033
        %s2036 = smul.u32 10, 3
        %s2037 = smul.addr %s2036, 8
        %s2038 = scalar_lea.vmem [#allocation3], %s2037
        %v2039 = vld [vmem:[%s2038] sm:$0xff]
        %v2040 = vld [vmem:[%s2038 + $0x8] sm:$0xff]
        %v2041 = vld [vmem:[%s2038 + $0x10] sm:$0xff]
        %2042 = vmatprep.subr.bf16.mxu0 %v870
        %2043 = vmatpush1.bf16.msra.mxu0 %v869
        %2044 = vmatprep.subr.bf16.mxu0 %v873
        %2045 = vmatpush1.bf16.msra.mxu0 %v872
        %2046 = vmatprep.subr.bf16.mxu0 %v876
        %2047 = vmatpush1.bf16.msra.mxu0 %v875
        %2048 = vmatprep.subr.bf16.mxu0 %v879
        %2049 = vmatpush1.bf16.msra.mxu0 %v878
        %2050 = vmatprep.subr.bf16.mxu0 %v882
        %2051 = vmatpush1.bf16.msra.mxu0 %v881
        %2052 = vmatprep.subr.bf16.mxu0 %v885
        %2053 = vmatpush1.bf16.msra.mxu0 %v884
        %2054 = vmatprep.subr.bf16.mxu0 %v888
        %2055 = vmatpush1.bf16.msra.mxu0 %v887
        %2056 = vmatprep.subr.bf16.mxu0 %v891
        %2057 = vmatpush1.bf16.msra.mxu0 %v890
        %2058 = vmatprep.subr.bf16.mxu0 0
        %2059 = vmatpush1.bf16.msra.mxu0 0
        %2060 = vmatprep.subr.bf16.mxu0 0
        %2061 = vmatpush1.bf16.msra.mxu0 0
        %2062 = vmatprep.subr.bf16.mxu0 0
        %2063 = vmatpush1.bf16.msra.mxu0 0
        %2064 = vmatprep.subr.bf16.mxu0 0
        %2065 = vmatpush1.bf16.msra.mxu0 0
        %2066 = vmatprep.subr.bf16.mxu0 0
        %2067 = vmatpush1.bf16.msra.mxu0 0
        %2068 = vmatprep.subr.bf16.mxu0 0
        %2069 = vmatpush1.bf16.msra.mxu0 0
        %2070 = vmatprep.subr.bf16.mxu0 0
        %2071 = vmatpush1.bf16.msra.mxu0 0
        %2072 = vmatprep.subr.bf16.mxu0 0
        %2073 = vmatpush1.bf16.msra.mxu0 0
        %2074 = vmatprep.mubr.bf16.mxu0 0
        %2075 = vmatmul.mubr.bf16.gmra.mrb[0].mxu0 %v2033
        %v2076 = vpop.f32.mrb[0].mxu0
        %v2077 = vadd.f32 0.0, %v2076
        %v2078 = vpop.f32.mrb[0].mxu0
        %v2079 = vadd.f32 0.0, %v2078
        %v2080 = vpop.f32.mrb[0].mxu0
        %v2081 = vpop.f32.mrb[0].mxu0
        %2082 = vdwg.mxu0
        %2083 = vmatprep.subr.bf16.mxu0 0
        %2084 = vmatpush1.bf16.msra.mxu0 %v871
        %2085 = vmatprep.subr.bf16.mxu0 0
        %2086 = vmatpush1.bf16.msra.mxu0 %v874
        %2087 = vmatprep.subr.bf16.mxu0 0
        %2088 = vmatpush1.bf16.msra.mxu0 %v877
        %2089 = vmatprep.subr.bf16.mxu0 0
        %2090 = vmatpush1.bf16.msra.mxu0 %v880
        %2091 = vmatprep.subr.bf16.mxu0 0
        %2092 = vmatpush1.bf16.msra.mxu0 %v883
        %2093 = vmatprep.subr.bf16.mxu0 0
        %2094 = vmatpush1.bf16.msra.mxu0 %v886
        %2095 = vmatprep.subr.bf16.mxu0 0
        %2096 = vmatpush1.bf16.msra.mxu0 %v889
        %2097 = vmatprep.subr.bf16.mxu0 0
        %2098 = vmatpush1.bf16.msra.mxu0 %v892
        %2099 = vmatprep.subr.bf16.mxu0 0
        %2100 = vmatpush1.bf16.msra.mxu0 0
        %2101 = vmatprep.subr.bf16.mxu0 0
        %2102 = vmatpush1.bf16.msra.mxu0 0
        %2103 = vmatprep.subr.bf16.mxu0 0
        %2104 = vmatpush1.bf16.msra.mxu0 0
        %2105 = vmatprep.subr.bf16.mxu0 0
        %2106 = vmatpush1.bf16.msra.mxu0 0
        %2107 = vmatprep.subr.bf16.mxu0 0
        %2108 = vmatpush1.bf16.msra.mxu0 0
        %2109 = vmatprep.subr.bf16.mxu0 0
        %2110 = vmatpush1.bf16.msra.mxu0 0
        %2111 = vmatprep.subr.bf16.mxu0 0
        %2112 = vmatpush1.bf16.msra.mxu0 0
        %2113 = vmatprep.subr.bf16.mxu0 0
        %2114 = vmatpush1.bf16.msra.mxu0 0
        %2115 = vmatprep.mubr.bf16.mxu0 0
        %2116 = vmatmul.mubr.bf16.gmra.mrb[0].mxu0 %v2033
        %v2117 = vpop.f32.mrb[0].mxu0
        %v2118 = vadd.f32 0.0, %v2117
        %v2119 = vpop.f32.mrb[0].mxu0
        %v2120 = vpop.f32.mrb[0].mxu0
        %v2121 = vpop.f32.mrb[0].mxu0
        %2122 = vdwg.mxu0
        %v2123 = vadd.f32 %v2039, %v2077
        %v2124 = vadd.f32 %v2040, %v2079
        %v2125 = vxor.u32 %v2123, 2147483648
        %v2126 = vxor.u32 %v2124, 2147483648
        %v2127 = vmul.f32 %v2125, 1.442695
        %v2128 = vpow.pop %v2127
        %v2129 = vmul.f32 %v2126, 1.442695
        %v2130 = vpow.pop %v2129
        %v2131 = vadd.f32 %v2128, 1.0
        %v2132 = vadd.f32 %v2130, 1.0
        %v2133 = vrcp.pop %v2131
        %v2134 = vmul.f32 1.0, %v2133
        %v2135 = vrcp.pop %v2132
        %v2136 = vmul.f32 1.0, %v2135
        %v2137 = vadd.f32 %v2118, %v1016
        %v2138 = vmul.f32 %v2134, %v2137
        %v2139 = vadd.f32 %v2041, %v2138
        %v2140 = vtanh.pop %v2139
        %v2141 = vsub.f32 1.0, %v2136
        %v2142 = vmul.f32 %v2141, %v2140
        %v2143 = vmul.f32 %v2136, %v2032
        %v2144 = vadd.f32 %v2142, %v2143
        %v2145 = vpack.c.bf16 %v2144, %v2144
        %s2146 = scalar_lea.vmem %s336, 40 [#allocation15]
        %2147 = vst [vmem:[%s2146] sm:$0xf] %v2145
        %s2148 = smul.u32 11, 3
        %s2149 = smul.addr %s2148, 8
        %s2150 = scalar_lea.vmem [#allocation3], %s2149
        %v2151 = vld [vmem:[%s2150] sm:$0xff]
        %v2152 = vld [vmem:[%s2150 + $0x8] sm:$0xff]
        %v2153 = vld [vmem:[%s2150 + $0x10] sm:$0xff]
        %2154 = vmatprep.subr.bf16.mxu0 %v870
        %2155 = vmatpush1.bf16.msra.mxu0 %v869
        %2156 = vmatprep.subr.bf16.mxu0 %v873
        %2157 = vmatpush1.bf16.msra.mxu0 %v872
        %2158 = vmatprep.subr.bf16.mxu0 %v876
        %2159 = vmatpush1.bf16.msra.mxu0 %v875
        %2160 = vmatprep.subr.bf16.mxu0 %v879
        %2161 = vmatpush1.bf16.msra.mxu0 %v878
        %2162 = vmatprep.subr.bf16.mxu0 %v882
        %2163 = vmatpush1.bf16.msra.mxu0 %v881
        %2164 = vmatprep.subr.bf16.mxu0 %v885
        %2165 = vmatpush1.bf16.msra.mxu0 %v884
        %2166 = vmatprep.subr.bf16.mxu0 %v888
        %2167 = vmatpush1.bf16.msra.mxu0 %v887
        %2168 = vmatprep.subr.bf16.mxu0 %v891
        %2169 = vmatpush1.bf16.msra.mxu0 %v890
        %2170 = vmatprep.subr.bf16.mxu0 0
        %2171 = vmatpush1.bf16.msra.mxu0 0
        %2172 = vmatprep.subr.bf16.mxu0 0
        %2173 = vmatpush1.bf16.msra.mxu0 0
        %2174 = vmatprep.subr.bf16.mxu0 0
        %2175 = vmatpush1.bf16.msra.mxu0 0
        %2176 = vmatprep.subr.bf16.mxu0 0
        %2177 = vmatpush1.bf16.msra.mxu0 0
        %2178 = vmatprep.subr.bf16.mxu0 0
        %2179 = vmatpush1.bf16.msra.mxu0 0
        %2180 = vmatprep.subr.bf16.mxu0 0
        %2181 = vmatpush1.bf16.msra.mxu0 0
        %2182 = vmatprep.subr.bf16.mxu0 0
        %2183 = vmatpush1.bf16.msra.mxu0 0
        %2184 = vmatprep.subr.bf16.mxu0 0
        %2185 = vmatpush1.bf16.msra.mxu0 0
        %2186 = vmatprep.mubr.bf16.mxu0 0
        %2187 = vmatmul.mubr.bf16.gmra.mrb[0].mxu0 %v2145
        %v2188 = vpop.f32.mrb[0].mxu0
        %v2189 = vadd.f32 0.0, %v2188
        %v2190 = vpop.f32.mrb[0].mxu0
        %v2191 = vadd.f32 0.0, %v2190
        %v2192 = vpop.f32.mrb[0].mxu0
        %v2193 = vpop.f32.mrb[0].mxu0
        %2194 = vdwg.mxu0
        %2195 = vmatprep.subr.bf16.mxu0 0
        %2196 = vmatpush1.bf16.msra.mxu0 %v871
        %2197 = vmatprep.subr.bf16.mxu0 0
        %2198 = vmatpush1.bf16.msra.mxu0 %v874
        %2199 = vmatprep.subr.bf16.mxu0 0
        %2200 = vmatpush1.bf16.msra.mxu0 %v877
        %2201 = vmatprep.subr.bf16.mxu0 0
        %2202 = vmatpush1.bf16.msra.mxu0 %v880
        %2203 = vmatprep.subr.bf16.mxu0 0
        %2204 = vmatpush1.bf16.msra.mxu0 %v883
        %2205 = vmatprep.subr.bf16.mxu0 0
        %2206 = vmatpush1.bf16.msra.mxu0 %v886
        %2207 = vmatprep.subr.bf16.mxu0 0
        %2208 = vmatpush1.bf16.msra.mxu0 %v889
        %2209 = vmatprep.subr.bf16.mxu0 0
        %2210 = vmatpush1.bf16.msra.mxu0 %v892
        %2211 = vmatprep.subr.bf16.mxu0 0
        %2212 = vmatpush1.bf16.msra.mxu0 0
        %2213 = vmatprep.subr.bf16.mxu0 0
        %2214 = vmatpush1.bf16.msra.mxu0 0
        %2215 = vmatprep.subr.bf16.mxu0 0
        %2216 = vmatpush1.bf16.msra.mxu0 0
        %2217 = vmatprep.subr.bf16.mxu0 0
        %2218 = vmatpush1.bf16.msra.mxu0 0
        %2219 = vmatprep.subr.bf16.mxu0 0
        %2220 = vmatpush1.bf16.msra.mxu0 0
        %2221 = vmatprep.subr.bf16.mxu0 0
        %2222 = vmatpush1.bf16.msra.mxu0 0
        %2223 = vmatprep.subr.bf16.mxu0 0
        %2224 = vmatpush1.bf16.msra.mxu0 0
        %2225 = vmatprep.subr.bf16.mxu0 0
        %2226 = vmatpush1.bf16.msra.mxu0 0
        %2227 = vmatprep.mubr.bf16.mxu0 0
        %2228 = vmatmul.mubr.bf16.gmra.mrb[0].mxu0 %v2145
        %v2229 = vpop.f32.mrb[0].mxu0
        %v2230 = vadd.f32 0.0, %v2229
        %v2231 = vpop.f32.mrb[0].mxu0
        %v2232 = vpop.f32.mrb[0].mxu0
        %v2233 = vpop.f32.mrb[0].mxu0
        %2234 = vdwg.mxu0
        %v2235 = vadd.f32 %v2151, %v2189
        %v2236 = vadd.f32 %v2152, %v2191
        %v2237 = vxor.u32 %v2235, 2147483648
        %v2238 = vxor.u32 %v2236, 2147483648
        %v2239 = vmul.f32 %v2237, 1.442695
        %v2240 = vpow.pop %v2239
        %v2241 = vmul.f32 %v2238, 1.442695
        %v2242 = vpow.pop %v2241
        %v2243 = vadd.f32 %v2240, 1.0
        %v2244 = vadd.f32 %v2242, 1.0
        %v2245 = vrcp.pop %v2243
        %v2246 = vmul.f32 1.0, %v2245
        %v2247 = vrcp.pop %v2244
        %v2248 = vmul.f32 1.0, %v2247
        %v2249 = vadd.f32 %v2230, %v1016
        %v2250 = vmul.f32 %v2246, %v2249
        %v2251 = vadd.f32 %v2153, %v2250
        %v2252 = vtanh.pop %v2251
        %v2253 = vsub.f32 1.0, %v2248
        %v2254 = vmul.f32 %v2253, %v2252
        %v2255 = vmul.f32 %v2248, %v2144
        %v2256 = vadd.f32 %v2254, %v2255
        %v2257 = vpack.c.bf16 %v2256, %v2256
        %s2258 = scalar_lea.vmem %s336, 44 [#allocation15]
        %2259 = vst [vmem:[%s2258] sm:$0xf] %v2257
        %s2260 = smul.u32 12, 3
        %s2261 = smul.addr %s2260, 8
        %s2262 = scalar_lea.vmem [#allocation3], %s2261
        %v2263 = vld [vmem:[%s2262] sm:$0xff]
        %v2264 = vld [vmem:[%s2262 + $0x8] sm:$0xff]
        %v2265 = vld [vmem:[%s2262 + $0x10] sm:$0xff]
        %2266 = vmatprep.subr.bf16.mxu0 %v870
        %2267 = vmatpush1.bf16.msra.mxu0 %v869
        %2268 = vmatprep.subr.bf16.mxu0 %v873
        %2269 = vmatpush1.bf16.msra.mxu0 %v872
        %2270 = vmatprep.subr.bf16.mxu0 %v876
        %2271 = vmatpush1.bf16.msra.mxu0 %v875
        %2272 = vmatprep.subr.bf16.mxu0 %v879
        %2273 = vmatpush1.bf16.msra.mxu0 %v878
        %2274 = vmatprep.subr.bf16.mxu0 %v882
        %2275 = vmatpush1.bf16.msra.mxu0 %v881
        %2276 = vmatprep.subr.bf16.mxu0 %v885
        %2277 = vmatpush1.bf16.msra.mxu0 %v884
        %2278 = vmatprep.subr.bf16.mxu0 %v888
        %2279 = vmatpush1.bf16.msra.mxu0 %v887
        %2280 = vmatprep.subr.bf16.mxu0 %v891
        %2281 = vmatpush1.bf16.msra.mxu0 %v890
        %2282 = vmatprep.subr.bf16.mxu0 0
        %2283 = vmatpush1.bf16.msra.mxu0 0
        %2284 = vmatprep.subr.bf16.mxu0 0
        %2285 = vmatpush1.bf16.msra.mxu0 0
        %2286 = vmatprep.subr.bf16.mxu0 0
        %2287 = vmatpush1.bf16.msra.mxu0 0
        %2288 = vmatprep.subr.bf16.mxu0 0
        %2289 = vmatpush1.bf16.msra.mxu0 0
        %2290 = vmatprep.subr.bf16.mxu0 0
        %2291 = vmatpush1.bf16.msra.mxu0 0
        %2292 = vmatprep.subr.bf16.mxu0 0
        %2293 = vmatpush1.bf16.msra.mxu0 0
        %2294 = vmatprep.subr.bf16.mxu0 0
        %2295 = vmatpush1.bf16.msra.mxu0 0
        %2296 = vmatprep.subr.bf16.mxu0 0
        %2297 = vmatpush1.bf16.msra.mxu0 0
        %2298 = vmatprep.mubr.bf16.mxu0 0
        %2299 = vmatmul.mubr.bf16.gmra.mrb[0].mxu0 %v2257
        %v2300 = vpop.f32.mrb[0].mxu0
        %v2301 = vadd.f32 0.0, %v2300
        %v2302 = vpop.f32.mrb[0].mxu0
        %v2303 = vadd.f32 0.0, %v2302
        %v2304 = vpop.f32.mrb[0].mxu0
        %v2305 = vpop.f32.mrb[0].mxu0
        %2306 = vdwg.mxu0
        %2307 = vmatprep.subr.bf16.mxu0 0
        %2308 = vmatpush1.bf16.msra.mxu0 %v871
        %2309 = vmatprep.subr.bf16.mxu0 0
        %2310 = vmatpush1.bf16.msra.mxu0 %v874
        %2311 = vmatprep.subr.bf16.mxu0 0
        %2312 = vmatpush1.bf16.msra.mxu0 %v877
        %2313 = vmatprep.subr.bf16.mxu0 0
        %2314 = vmatpush1.bf16.msra.mxu0 %v880
        %2315 = vmatprep.subr.bf16.mxu0 0
        %2316 = vmatpush1.bf16.msra.mxu0 %v883
        %2317 = vmatprep.subr.bf16.mxu0 0
        %2318 = vmatpush1.bf16.msra.mxu0 %v886
        %2319 = vmatprep.subr.bf16.mxu0 0
        %2320 = vmatpush1.bf16.msra.mxu0 %v889
        %2321 = vmatprep.subr.bf16.mxu0 0
        %2322 = vmatpush1.bf16.msra.mxu0 %v892
        %2323 = vmatprep.subr.bf16.mxu0 0
        %2324 = vmatpush1.bf16.msra.mxu0 0
        %2325 = vmatprep.subr.bf16.mxu0 0
        %2326 = vmatpush1.bf16.msra.mxu0 0
        %2327 = vmatprep.subr.bf16.mxu0 0
        %2328 = vmatpush1.bf16.msra.mxu0 0
        %2329 = vmatprep.subr.bf16.mxu0 0
        %2330 = vmatpush1.bf16.msra.mxu0 0
        %2331 = vmatprep.subr.bf16.mxu0 0
        %2332 = vmatpush1.bf16.msra.mxu0 0
        %2333 = vmatprep.subr.bf16.mxu0 0
        %2334 = vmatpush1.bf16.msra.mxu0 0
        %2335 = vmatprep.subr.bf16.mxu0 0
        %2336 = vmatpush1.bf16.msra.mxu0 0
        %2337 = vmatprep.subr.bf16.mxu0 0
        %2338 = vmatpush1.bf16.msra.mxu0 0
        %2339 = vmatprep.mubr.bf16.mxu0 0
        %2340 = vmatmul.mubr.bf16.gmra.mrb[0].mxu0 %v2257
        %v2341 = vpop.f32.mrb[0].mxu0
        %v2342 = vadd.f32 0.0, %v2341
        %v2343 = vpop.f32.mrb[0].mxu0
        %v2344 = vpop.f32.mrb[0].mxu0
        %v2345 = vpop.f32.mrb[0].mxu0
        %2346 = vdwg.mxu0
        %v2347 = vadd.f32 %v2263, %v2301
        %v2348 = vadd.f32 %v2264, %v2303
        %v2349 = vxor.u32 %v2347, 2147483648
        %v2350 = vxor.u32 %v2348, 2147483648
        %v2351 = vmul.f32 %v2349, 1.442695
        %v2352 = vpow.pop %v2351
        %v2353 = vmul.f32 %v2350, 1.442695
        %v2354 = vpow.pop %v2353
        %v2355 = vadd.f32 %v2352, 1.0
        %v2356 = vadd.f32 %v2354, 1.0
        %v2357 = vrcp.pop %v2355
        %v2358 = vmul.f32 1.0, %v2357
        %v2359 = vrcp.pop %v2356
        %v2360 = vmul.f32 1.0, %v2359
        %v2361 = vadd.f32 %v2342, %v1016
        %v2362 = vmul.f32 %v2358, %v2361
        %v2363 = vadd.f32 %v2265, %v2362
        %v2364 = vtanh.pop %v2363
        %v2365 = vsub.f32 1.0, %v2360
        %v2366 = vmul.f32 %v2365, %v2364
        %v2367 = vmul.f32 %v2360, %v2256
        %v2368 = vadd.f32 %v2366, %v2367
        %v2369 = vpack.c.bf16 %v2368, %v2368
        %s2370 = scalar_lea.vmem %s336, 48 [#allocation15]
        %2371 = vst [vmem:[%s2370] sm:$0xf] %v2369
        %s2372 = smul.u32 13, 3
        %s2373 = smul.addr %s2372, 8
        %s2374 = scalar_lea.vmem [#allocation3], %s2373
        %v2375 = vld [vmem:[%s2374] sm:$0xff]
        %v2376 = vld [vmem:[%s2374 + $0x8] sm:$0xff]
        %v2377 = vld [vmem:[%s2374 + $0x10] sm:$0xff]
        %2378 = vmatprep.subr.bf16.mxu0 %v870
        %2379 = vmatpush1.bf16.msra.mxu0 %v869
        %2380 = vmatprep.subr.bf16.mxu0 %v873
        %2381 = vmatpush1.bf16.msra.mxu0 %v872
        %2382 = vmatprep.subr.bf16.mxu0 %v876
        %2383 = vmatpush1.bf16.msra.mxu0 %v875
        %2384 = vmatprep.subr.bf16.mxu0 %v879
        %2385 = vmatpush1.bf16.msra.mxu0 %v878
        %2386 = vmatprep.subr.bf16.mxu0 %v882
        %2387 = vmatpush1.bf16.msra.mxu0 %v881
        %2388 = vmatprep.subr.bf16.mxu0 %v885
        %2389 = vmatpush1.bf16.msra.mxu0 %v884
        %2390 = vmatprep.subr.bf16.mxu0 %v888
        %2391 = vmatpush1.bf16.msra.mxu0 %v887
        %2392 = vmatprep.subr.bf16.mxu0 %v891
        %2393 = vmatpush1.bf16.msra.mxu0 %v890
        %2394 = vmatprep.subr.bf16.mxu0 0
        %2395 = vmatpush1.bf16.msra.mxu0 0
        %2396 = vmatprep.subr.bf16.mxu0 0
        %2397 = vmatpush1.bf16.msra.mxu0 0
        %2398 = vmatprep.subr.bf16.mxu0 0
        %2399 = vmatpush1.bf16.msra.mxu0 0
        %2400 = vmatprep.subr.bf16.mxu0 0
        %2401 = vmatpush1.bf16.msra.mxu0 0
        %2402 = vmatprep.subr.bf16.mxu0 0
        %2403 = vmatpush1.bf16.msra.mxu0 0
        %2404 = vmatprep.subr.bf16.mxu0 0
        %2405 = vmatpush1.bf16.msra.mxu0 0
        %2406 = vmatprep.subr.bf16.mxu0 0
        %2407 = vmatpush1.bf16.msra.mxu0 0
        %2408 = vmatprep.subr.bf16.mxu0 0
        %2409 = vmatpush1.bf16.msra.mxu0 0
        %2410 = vmatprep.mubr.bf16.mxu0 0
        %2411 = vmatmul.mubr.bf16.gmra.mrb[0].mxu0 %v2369
        %v2412 = vpop.f32.mrb[0].mxu0
        %v2413 = vadd.f32 0.0, %v2412
        %v2414 = vpop.f32.mrb[0].mxu0
        %v2415 = vadd.f32 0.0, %v2414
        %v2416 = vpop.f32.mrb[0].mxu0
        %v2417 = vpop.f32.mrb[0].mxu0
        %2418 = vdwg.mxu0
        %2419 = vmatprep.subr.bf16.mxu0 0
        %2420 = vmatpush1.bf16.msra.mxu0 %v871
        %2421 = vmatprep.subr.bf16.mxu0 0
        %2422 = vmatpush1.bf16.msra.mxu0 %v874
        %2423 = vmatprep.subr.bf16.mxu0 0
        %2424 = vmatpush1.bf16.msra.mxu0 %v877
        %2425 = vmatprep.subr.bf16.mxu0 0
        %2426 = vmatpush1.bf16.msra.mxu0 %v880
        %2427 = vmatprep.subr.bf16.mxu0 0
        %2428 = vmatpush1.bf16.msra.mxu0 %v883
        %2429 = vmatprep.subr.bf16.mxu0 0
        %2430 = vmatpush1.bf16.msra.mxu0 %v886
        %2431 = vmatprep.subr.bf16.mxu0 0
        %2432 = vmatpush1.bf16.msra.mxu0 %v889
        %2433 = vmatprep.subr.bf16.mxu0 0
        %2434 = vmatpush1.bf16.msra.mxu0 %v892
        %2435 = vmatprep.subr.bf16.mxu0 0
        %2436 = vmatpush1.bf16.msra.mxu0 0
        %2437 = vmatprep.subr.bf16.mxu0 0
        %2438 = vmatpush1.bf16.msra.mxu0 0
        %2439 = vmatprep.subr.bf16.mxu0 0
        %2440 = vmatpush1.bf16.msra.mxu0 0
        %2441 = vmatprep.subr.bf16.mxu0 0
        %2442 = vmatpush1.bf16.msra.mxu0 0
        %2443 = vmatprep.subr.bf16.mxu0 0
        %2444 = vmatpush1.bf16.msra.mxu0 0
        %2445 = vmatprep.subr.bf16.mxu0 0
        %2446 = vmatpush1.bf16.msra.mxu0 0
        %2447 = vmatprep.subr.bf16.mxu0 0
        %2448 = vmatpush1.bf16.msra.mxu0 0
        %2449 = vmatprep.subr.bf16.mxu0 0
        %2450 = vmatpush1.bf16.msra.mxu0 0
        %2451 = vmatprep.mubr.bf16.mxu0 0
        %2452 = vmatmul.mubr.bf16.gmra.mrb[0].mxu0 %v2369
        %v2453 = vpop.f32.mrb[0].mxu0
        %v2454 = vadd.f32 0.0, %v2453
        %v2455 = vpop.f32.mrb[0].mxu0
        %v2456 = vpop.f32.mrb[0].mxu0
        %v2457 = vpop.f32.mrb[0].mxu0
        %2458 = vdwg.mxu0
        %v2459 = vadd.f32 %v2375, %v2413
        %v2460 = vadd.f32 %v2376, %v2415
        %v2461 = vxor.u32 %v2459, 2147483648
        %v2462 = vxor.u32 %v2460, 2147483648
        %v2463 = vmul.f32 %v2461, 1.442695
        %v2464 = vpow.pop %v2463
        %v2465 = vmul.f32 %v2462, 1.442695
        %v2466 = vpow.pop %v2465
        %v2467 = vadd.f32 %v2464, 1.0
        %v2468 = vadd.f32 %v2466, 1.0
        %v2469 = vrcp.pop %v2467
        %v2470 = vmul.f32 1.0, %v2469
        %v2471 = vrcp.pop %v2468
        %v2472 = vmul.f32 1.0, %v2471
        %v2473 = vadd.f32 %v2454, %v1016
        %v2474 = vmul.f32 %v2470, %v2473
        %v2475 = vadd.f32 %v2377, %v2474
        %v2476 = vtanh.pop %v2475
        %v2477 = vsub.f32 1.0, %v2472
        %v2478 = vmul.f32 %v2477, %v2476
        %v2479 = vmul.f32 %v2472, %v2368
        %v2480 = vadd.f32 %v2478, %v2479
        %v2481 = vpack.c.bf16 %v2480, %v2480
        %s2482 = scalar_lea.vmem %s336, 52 [#allocation15]
        %2483 = vst [vmem:[%s2482] sm:$0xf] %v2481
        %s2484 = smul.u32 14, 3
        %s2485 = smul.addr %s2484, 8
        %s2486 = scalar_lea.vmem [#allocation3], %s2485
        %v2487 = vld [vmem:[%s2486] sm:$0xff]
        %v2488 = vld [vmem:[%s2486 + $0x8] sm:$0xff]
        %v2489 = vld [vmem:[%s2486 + $0x10] sm:$0xff]
        %2490 = vmatprep.subr.bf16.mxu0 %v870
        %2491 = vmatpush1.bf16.msra.mxu0 %v869
        %2492 = vmatprep.subr.bf16.mxu0 %v873
        %2493 = vmatpush1.bf16.msra.mxu0 %v872
        %2494 = vmatprep.subr.bf16.mxu0 %v876
        %2495 = vmatpush1.bf16.msra.mxu0 %v875
        %2496 = vmatprep.subr.bf16.mxu0 %v879
        %2497 = vmatpush1.bf16.msra.mxu0 %v878
        %2498 = vmatprep.subr.bf16.mxu0 %v882
        %2499 = vmatpush1.bf16.msra.mxu0 %v881
        %2500 = vmatprep.subr.bf16.mxu0 %v885
        %2501 = vmatpush1.bf16.msra.mxu0 %v884
        %2502 = vmatprep.subr.bf16.mxu0 %v888
        %2503 = vmatpush1.bf16.msra.mxu0 %v887
        %2504 = vmatprep.subr.bf16.mxu0 %v891
        %2505 = vmatpush1.bf16.msra.mxu0 %v890
        %2506 = vmatprep.subr.bf16.mxu0 0
        %2507 = vmatpush1.bf16.msra.mxu0 0
        %2508 = vmatprep.subr.bf16.mxu0 0
        %2509 = vmatpush1.bf16.msra.mxu0 0
        %2510 = vmatprep.subr.bf16.mxu0 0
        %2511 = vmatpush1.bf16.msra.mxu0 0
        %2512 = vmatprep.subr.bf16.mxu0 0
        %2513 = vmatpush1.bf16.msra.mxu0 0
        %2514 = vmatprep.subr.bf16.mxu0 0
        %2515 = vmatpush1.bf16.msra.mxu0 0
        %2516 = vmatprep.subr.bf16.mxu0 0
        %2517 = vmatpush1.bf16.msra.mxu0 0
        %2518 = vmatprep.subr.bf16.mxu0 0
        %2519 = vmatpush1.bf16.msra.mxu0 0
        %2520 = vmatprep.subr.bf16.mxu0 0
        %2521 = vmatpush1.bf16.msra.mxu0 0
        %2522 = vmatprep.mubr.bf16.mxu0 0
        %2523 = vmatmul.mubr.bf16.gmra.mrb[0].mxu0 %v2481
        %v2524 = vpop.f32.mrb[0].mxu0
        %v2525 = vadd.f32 0.0, %v2524
        %v2526 = vpop.f32.mrb[0].mxu0
        %v2527 = vadd.f32 0.0, %v2526
        %v2528 = vpop.f32.mrb[0].mxu0
        %v2529 = vpop.f32.mrb[0].mxu0
        %2530 = vdwg.mxu0
        %2531 = vmatprep.subr.bf16.mxu0 0
        %2532 = vmatpush1.bf16.msra.mxu0 %v871
        %2533 = vmatprep.subr.bf16.mxu0 0
        %2534 = vmatpush1.bf16.msra.mxu0 %v874
        %2535 = vmatprep.subr.bf16.mxu0 0
        %2536 = vmatpush1.bf16.msra.mxu0 %v877
        %2537 = vmatprep.subr.bf16.mxu0 0
        %2538 = vmatpush1.bf16.msra.mxu0 %v880
        %2539 = vmatprep.subr.bf16.mxu0 0
        %2540 = vmatpush1.bf16.msra.mxu0 %v883
        %2541 = vmatprep.subr.bf16.mxu0 0
        %2542 = vmatpush1.bf16.msra.mxu0 %v886
        %2543 = vmatprep.subr.bf16.mxu0 0
        %2544 = vmatpush1.bf16.msra.mxu0 %v889
        %2545 = vmatprep.subr.bf16.mxu0 0
        %2546 = vmatpush1.bf16.msra.mxu0 %v892
        %2547 = vmatprep.subr.bf16.mxu0 0
        %2548 = vmatpush1.bf16.msra.mxu0 0
        %2549 = vmatprep.subr.bf16.mxu0 0
        %2550 = vmatpush1.bf16.msra.mxu0 0
        %2551 = vmatprep.subr.bf16.mxu0 0
        %2552 = vmatpush1.bf16.msra.mxu0 0
        %2553 = vmatprep.subr.bf16.mxu0 0
        %2554 = vmatpush1.bf16.msra.mxu0 0
        %2555 = vmatprep.subr.bf16.mxu0 0
        %2556 = vmatpush1.bf16.msra.mxu0 0
        %2557 = vmatprep.subr.bf16.mxu0 0
        %2558 = vmatpush1.bf16.msra.mxu0 0
        %2559 = vmatprep.subr.bf16.mxu0 0
        %2560 = vmatpush1.bf16.msra.mxu0 0
        %2561 = vmatprep.subr.bf16.mxu0 0
        %2562 = vmatpush1.bf16.msra.mxu0 0
        %2563 = vmatprep.mubr.bf16.mxu0 0
        %2564 = vmatmul.mubr.bf16.gmra.mrb[0].mxu0 %v2481
        %v2565 = vpop.f32.mrb[0].mxu0
        %v2566 = vadd.f32 0.0, %v2565
        %v2567 = vpop.f32.mrb[0].mxu0
        %v2568 = vpop.f32.mrb[0].mxu0
        %v2569 = vpop.f32.mrb[0].mxu0
        %2570 = vdwg.mxu0
        %v2571 = vadd.f32 %v2487, %v2525
        %v2572 = vadd.f32 %v2488, %v2527
        %v2573 = vxor.u32 %v2571, 2147483648
        %v2574 = vxor.u32 %v2572, 2147483648
        %v2575 = vmul.f32 %v2573, 1.442695
        %v2576 = vpow.pop %v2575
        %v2577 = vmul.f32 %v2574, 1.442695
        %v2578 = vpow.pop %v2577
        %v2579 = vadd.f32 %v2576, 1.0
        %v2580 = vadd.f32 %v2578, 1.0
        %v2581 = vrcp.pop %v2579
        %v2582 = vmul.f32 1.0, %v2581
        %v2583 = vrcp.pop %v2580
        %v2584 = vmul.f32 1.0, %v2583
        %v2585 = vadd.f32 %v2566, %v1016
        %v2586 = vmul.f32 %v2582, %v2585
        %v2587 = vadd.f32 %v2489, %v2586
        %v2588 = vtanh.pop %v2587
        %v2589 = vsub.f32 1.0, %v2584
        %v2590 = vmul.f32 %v2589, %v2588
        %v2591 = vmul.f32 %v2584, %v2480
        %v2592 = vadd.f32 %v2590, %v2591
        %v2593 = vpack.c.bf16 %v2592, %v2592
        %s2594 = scalar_lea.vmem %s336, 56 [#allocation15]
        %2595 = vst [vmem:[%s2594] sm:$0xf] %v2593
        %s2596 = smul.u32 15, 3
        %s2597 = smul.addr %s2596, 8
        %s2598 = scalar_lea.vmem [#allocation3], %s2597
        %v2599 = vld [vmem:[%s2598] sm:$0xff]
        %v2600 = vld [vmem:[%s2598 + $0x8] sm:$0xff]
        %v2601 = vld [vmem:[%s2598 + $0x10] sm:$0xff]
        %2602 = vmatprep.subr.bf16.mxu0 %v870
        %2603 = vmatpush1.bf16.msra.mxu0 %v869
        %2604 = vmatprep.subr.bf16.mxu0 %v873
        %2605 = vmatpush1.bf16.msra.mxu0 %v872
        %2606 = vmatprep.subr.bf16.mxu0 %v876
        %2607 = vmatpush1.bf16.msra.mxu0 %v875
        %2608 = vmatprep.subr.bf16.mxu0 %v879
        %2609 = vmatpush1.bf16.msra.mxu0 %v878
        %2610 = vmatprep.subr.bf16.mxu0 %v882
        %2611 = vmatpush1.bf16.msra.mxu0 %v881
        %2612 = vmatprep.subr.bf16.mxu0 %v885
        %2613 = vmatpush1.bf16.msra.mxu0 %v884
        %2614 = vmatprep.subr.bf16.mxu0 %v888
        %2615 = vmatpush1.bf16.msra.mxu0 %v887
        %2616 = vmatprep.subr.bf16.mxu0 %v891
        %2617 = vmatpush1.bf16.msra.mxu0 %v890
        %2618 = vmatprep.subr.bf16.mxu0 0
        %2619 = vmatpush1.bf16.msra.mxu0 0
        %2620 = vmatprep.subr.bf16.mxu0 0
        %2621 = vmatpush1.bf16.msra.mxu0 0
        %2622 = vmatprep.subr.bf16.mxu0 0
        %2623 = vmatpush1.bf16.msra.mxu0 0
        %2624 = vmatprep.subr.bf16.mxu0 0
        %2625 = vmatpush1.bf16.msra.mxu0 0
        %2626 = vmatprep.subr.bf16.mxu0 0
        %2627 = vmatpush1.bf16.msra.mxu0 0
        %2628 = vmatprep.subr.bf16.mxu0 0
        %2629 = vmatpush1.bf16.msra.mxu0 0
        %2630 = vmatprep.subr.bf16.mxu0 0
        %2631 = vmatpush1.bf16.msra.mxu0 0
        %2632 = vmatprep.subr.bf16.mxu0 0
        %2633 = vmatpush1.bf16.msra.mxu0 0
        %2634 = vmatprep.mubr.bf16.mxu0 0
        %2635 = vmatmul.mubr.bf16.gmra.mrb[0].mxu0 %v2593
        %v2636 = vpop.f32.mrb[0].mxu0
        %v2637 = vadd.f32 0.0, %v2636
        %v2638 = vpop.f32.mrb[0].mxu0
        %v2639 = vadd.f32 0.0, %v2638
        %v2640 = vpop.f32.mrb[0].mxu0
        %v2641 = vpop.f32.mrb[0].mxu0
        %2642 = vdwg.mxu0
        %2643 = vmatprep.subr.bf16.mxu0 0
        %2644 = vmatpush1.bf16.msra.mxu0 %v871
        %2645 = vmatprep.subr.bf16.mxu0 0
        %2646 = vmatpush1.bf16.msra.mxu0 %v874
        %2647 = vmatprep.subr.bf16.mxu0 0
        %2648 = vmatpush1.bf16.msra.mxu0 %v877
        %2649 = vmatprep.subr.bf16.mxu0 0
        %2650 = vmatpush1.bf16.msra.mxu0 %v880
        %2651 = vmatprep.subr.bf16.mxu0 0
        %2652 = vmatpush1.bf16.msra.mxu0 %v883
        %2653 = vmatprep.subr.bf16.mxu0 0
        %2654 = vmatpush1.bf16.msra.mxu0 %v886
        %2655 = vmatprep.subr.bf16.mxu0 0
        %2656 = vmatpush1.bf16.msra.mxu0 %v889
        %2657 = vmatprep.subr.bf16.mxu0 0
        %2658 = vmatpush1.bf16.msra.mxu0 %v892
        %2659 = vmatprep.subr.bf16.mxu0 0
        %2660 = vmatpush1.bf16.msra.mxu0 0
        %2661 = vmatprep.subr.bf16.mxu0 0
        %2662 = vmatpush1.bf16.msra.mxu0 0
        %2663 = vmatprep.subr.bf16.mxu0 0
        %2664 = vmatpush1.bf16.msra.mxu0 0
        %2665 = vmatprep.subr.bf16.mxu0 0
        %2666 = vmatpush1.bf16.msra.mxu0 0
        %2667 = vmatprep.subr.bf16.mxu0 0
        %2668 = vmatpush1.bf16.msra.mxu0 0
        %2669 = vmatprep.subr.bf16.mxu0 0
        %2670 = vmatpush1.bf16.msra.mxu0 0
        %2671 = vmatprep.subr.bf16.mxu0 0
        %2672 = vmatpush1.bf16.msra.mxu0 0
        %2673 = vmatprep.subr.bf16.mxu0 0
        %2674 = vmatpush1.bf16.msra.mxu0 0
        %2675 = vmatprep.mubr.bf16.mxu0 0
        %2676 = vmatmul.mubr.bf16.gmra.mrb[0].mxu0 %v2593
        %v2677 = vpop.f32.mrb[0].mxu0
        %v2678 = vadd.f32 0.0, %v2677
        %v2679 = vpop.f32.mrb[0].mxu0
        %v2680 = vpop.f32.mrb[0].mxu0
        %v2681 = vpop.f32.mrb[0].mxu0
        %2682 = vdwg.mxu0
        %v2683 = vadd.f32 %v2599, %v2637
        %v2684 = vadd.f32 %v2600, %v2639
        %v2685 = vxor.u32 %v2683, 2147483648
        %v2686 = vxor.u32 %v2684, 2147483648
        %v2687 = vmul.f32 %v2685, 1.442695
        %v2688 = vpow.pop %v2687
        %v2689 = vmul.f32 %v2686, 1.442695
        %v2690 = vpow.pop %v2689
        %v2691 = vadd.f32 %v2688, 1.0
        %v2692 = vadd.f32 %v2690, 1.0
        %v2693 = vrcp.pop %v2691
        %v2694 = vmul.f32 1.0, %v2693
        %v2695 = vrcp.pop %v2692
        %v2696 = vmul.f32 1.0, %v2695
        %v2697 = vadd.f32 %v2678, %v1016
        %v2698 = vmul.f32 %v2694, %v2697
        %v2699 = vadd.f32 %v2601, %v2698
        %v2700 = vtanh.pop %v2699
        %v2701 = vsub.f32 1.0, %v2696
        %v2702 = vmul.f32 %v2701, %v2700
        %v2703 = vmul.f32 %v2696, %v2592
        %v2704 = vadd.f32 %v2702, %v2703
        %v2705 = vpack.c.bf16 %v2704, %v2704
        %s2706 = scalar_lea.vmem %s336, 60 [#allocation15]
        %2707 = vst [vmem:[%s2706] sm:$0xf] %v2705
        %2708 = vst [vmem:[#allocation2] sm:$0xff] %v2704
        %s2709 = sand.u32 %s165, 1
        %s2710 = scalar_lea.sflag [#allocation6], %s2709
        %s2711 = sand.u32 %s165, 1
        %s2712 = smul.addr %s2711, 64
        %s2713 = scalar_lea.vmem [#allocation15], %s2712
        // Predicated region
        $region73: #{tpu_custom_call.1} parent=43 // pred_check
          %p2714 = pneg %p175
        $region74: #{tpu_custom_call.1} parent=43 // pred_check_branch
          %2716 = sbr.rel (%p2714) target = $region76
        $region75: #{tpu_custom_call.1} parent=43 // pred_region
          %s2717 = smul.u32 16, %s26
          %s2719 = ssub.s32 1024, 1024
          %2720 = vsyncadd %s2710, %s2719
          %s2721 = smul.addr %s2717, 64
          %s2722 = scalar_lea.hbm %s6, %s2721
          %s2723 = sshll.u32 %s2713, 4
          %s2724 = int_to_ptr.vmem [resolvable:$true] %s2723
          %2729 = dma.vmem_to_hbm [thread:$0]  %s2724, 1024, %s2722, %s2710, 64, 64, 4
        $region76: #{tpu_custom_call.1} parent=43 // pred_fallthru
          _
      $region44: #{tpu_custom_call.1} parent=5 // pred_fallthru
        _
      %p2730 = scmp.le.s32.totalorder 2, %s21
      // Predicated region
      $region77: #{tpu_custom_call.1} parent=5 // pred_check
        %p2731 = pneg %p2730
      $region78: #{tpu_custom_call.1} parent=5 // pred_check_branch
        %2733 = sbr.rel (%p2731) target = $region80
      $region79: #{tpu_custom_call.1} parent=5 // pred_region
        %s2734 = ssub.s32 %s21, 2
        // Predicated region
        $region81: #{tpu_custom_call.1} parent=79 // pred_check
          %p2735 = pneg %p181
        $region82: #{tpu_custom_call.1} parent=79 // pred_check_branch
          %2737 = sbr.rel (%p2735) target = $region84
        $region83: #{tpu_custom_call.1} parent=79 // pred_region
          %s2738 = sand.u32 %s166, 1
          %s2739 = scalar_lea.sflag [#allocation6], %s2738
          %s2740 = sand.u32 %s166, 1
          %s2741 = smul.addr %s2740, 64
          %s2742 = scalar_lea.vmem [#allocation15], %s2741
          %2743 = dma.done %s2739, 1024
        $region84: #{tpu_custom_call.1} parent=79 // pred_fallthru
          _
      $region80: #{tpu_custom_call.1} parent=5 // pred_fallthru
        _
    $region6: #{tpu_custom_call.1} parent=1 // loop_footer
      %s25 = sadd.s32 1, %s21
    $region7: #{tpu_custom_call.1} parent=1 // loop_footer_branch
      %20 = sbr.rel target = $region3
    $region8: #{tpu_custom_call.1} parent=1 // loop_exit
      _
    %2744 = vsyncpa [#allocation5], 1
    %s2745 = scalar_lea.sflag [#allocation5], 1
    %2746 = vsyncpa %s2745, 1
    %2747 = vsyncpa [#allocation8], 1
    %2748 = vsyncpa [#allocation11], 1
    %2749 = vsyncpa [#allocation14], 1
    %2750 = vsyncpa [#allocation6], 1
    %s2751 = scalar_lea.sflag [#allocation6], 1
    %2752 = vsyncpa %s2751, 1

</llo_original>
